<compile_context>
chip_gen: v5e
topology: v5e:2x2
jax: 0.10.0
libtpu: 0.0.40
codegen_flags: <defaults>
</compile_context>

<pallas_src>
import functools

import jax
import jax.numpy as jnp
from jax import lax
from jax.experimental import pallas as pl
from jax.experimental.pallas import tpu as pltpu

EPS = 1e-5
LANE = 128                     # lane-dense / MXU-native padded channel width
HEADS = 4                      # ClassAttentionBlock.h
VMEM_LIMIT = 32 * 1024 * 1024  # v7x-safe scoped VMEM limit; ample for these tiles


# ------------------------------ Pallas kernels ------------------------------ #

def _conv_stats_kernel(x_ref, w_ref, wd_ref, y1_ref, d_ref, st_ref, acc_ref,
                       *, H, W):
    """Pass A (grid (batch,), 'parallel').

    x_ref holds the dx-stacked, row-flattened bf16 haloed image
    ((H+2)*W, 3*LANE): the 3x3 grouped conv is three K=3*LANE matmuls on
    contiguous sublane-aligned row windows (no per-tap shuffle copies),
    accumulated through an f32 VMEM scratch.  Also emits the 1x1 grouped
    downsample conv and per-batch BN sums / sums-of-squares (f32)."""
    hw = H * W
    # dy = 0 / 1 / 2 taps: rows [dy*W, dy*W + hw) of the flattened halo.
    acc_ref[...] = jnp.dot(x_ref[0, 0:hw, :], w_ref[0],
                           preferred_element_type=jnp.float32)
    acc_ref[...] += jnp.dot(x_ref[0, W:W + hw, :], w_ref[1],
                            preferred_element_type=jnp.float32)
    acc_ref[...] += jnp.dot(x_ref[0, 2 * W:2 * W + hw, :], w_ref[2],
                            preferred_element_type=jnp.float32)
    acc = acc_ref[...]
    y1_ref[0] = acc.astype(jnp.bfloat16)

    # 1x1 downsample: centre tap = dy=1 rows, dx=1 (lane-aligned) column block.
    centre = x_ref[0, W:W + hw, LANE:2 * LANE]
    d = jnp.dot(centre, wd_ref[...], preferred_element_type=jnp.float32)
    d_ref[0] = d.astype(jnp.bfloat16)

    st_ref[0] = jnp.concatenate([
        jnp.sum(acc, axis=0, keepdims=True),
        jnp.sum(acc * acc, axis=0, keepdims=True),
        jnp.sum(d, axis=0, keepdims=True),
        jnp.sum(d * d, axis=0, keepdims=True),
    ], axis=0)


def _bn_gram_kernel(y1_ref, s1_ref, t1_ref, g_ref, cs_ref):
    """Pass B (grid (batch='parallel', row-tiles='arbitrary')):
    hoisted BN scale/shift + ReLU on the bf16 conv output, then accumulate the
    per-batch Gram matrix out1^T @ out1 (bf16 operands, f32 accumulation) and
    the per-channel column sums (gives attention logits and post-attention BN
    stats without materialising q/k/attn_out)."""
    j = pl.program_id(1)

    @pl.when(j == 0)
    def _():
        g_ref[...] = jnp.zeros_like(g_ref)
        cs_ref[...] = jnp.zeros_like(cs_ref)

    out1 = jnp.maximum(y1_ref[0] * s1_ref[...] + t1_ref[...], 0.0)
    out1_b = out1.astype(jnp.bfloat16)
    gram = lax.dot_general(out1_b, out1_b, (((0,), (0,)), ((), ())),
                           preferred_element_type=jnp.float32)
    g_ref[0] += gram
    cs_ref[0] += jnp.sum(out1, axis=0, keepdims=True)


def _attn_residual_kernel(y1_ref, d_ref, mv_ref, s1_ref, t1_ref, s2_ref,
                          t2_ref, sd_ref, td_ref, o_ref):
    """Pass C (grid (batch, row-tiles), both 'parallel'):
    out1 = relu(bn1a(conv1)); attention application folded into one per-batch
    bf16 matrix (Wv @ A_blockdiag^T); block-level BN + ReLU; fused BN'd
    downsample residual add + final ReLU. Lane-dense (TM, 128) output."""
    out1 = jnp.maximum(y1_ref[0] * s1_ref[...] + t1_ref[...], 0.0)
    attn_out = jnp.dot(out1.astype(jnp.bfloat16), mv_ref[0],
                       preferred_element_type=jnp.float32)
    main = jnp.maximum(attn_out * s2_ref[...] + t2_ref[...], 0.0)
    resid = d_ref[0] * sd_ref[...] + td_ref[...]
    o_ref[0] = jnp.maximum(main + resid, 0.0)


# ----------------------- one-time parameter preparation --------------------- #

def prepare_params(params, *, num_classes, out_planes):
    """Block-diagonal (grouped-conv) assembly, LANE padding and bf16 casts,
    hoisted out of the jitted forward (runs once)."""
    g = num_classes
    Cout = out_planes
    Cin = params["conv1_w"].shape[1] * g
    cig, cog = Cin // g, Cout // g
    f32 = jnp.float32

    w1_full = jnp.zeros((3, 3, Cin, Cout), f32)
    for gi in range(g):
        blk = jnp.transpose(params["conv1_w"][gi * cog:(gi + 1) * cog],
                            (2, 3, 1, 0))                    # (3,3,cig,cog)
        w1_full = w1_full.at[:, :, gi * cig:(gi + 1) * cig,
                             gi * cog:(gi + 1) * cog].set(blk)
    # NOTE: conv1 bias is intentionally dropped - training-mode BN cancels it.
    w1_pad = jnp.zeros((3, 3, LANE, LANE), f32).at[:, :, :Cin, :Cout].set(w1_full)
    # (dy, dx*LANE + cin, cout) : K dimension matches the dx-stacked input.
    w1s = w1_pad.reshape(3, 3 * LANE, LANE).astype(jnp.bfloat16)

    qkv_w = params["qkv_w"][:, :, 0, 0]                      # (3*Cout, Cout//g)
    qog = 3 * Cout // g
    qkv_full = jnp.zeros((Cout, 3 * Cout), f32)
    for gi in range(g):
        blk = jnp.transpose(qkv_w[gi * qog:(gi + 1) * qog], (1, 0))
        qkv_full = qkv_full.at[gi * cog:(gi + 1) * cog,
                               gi * qog:(gi + 1) * qog].set(blk)

    ds_w = params["ds_w"][:, :, 0, 0]                        # (Cout, Cin//g)
    wd_full = jnp.zeros((Cin, Cout), f32)
    for gi in range(g):
        blk = jnp.transpose(ds_w[gi * cog:(gi + 1) * cog], (1, 0))
        wd_full = wd_full.at[gi * cig:(gi + 1) * cig,
                             gi * cog:(gi + 1) * cog].set(blk)
    wd = jnp.zeros((LANE, LANE), f32).at[:Cin, :Cout].set(wd_full)

    def padc(v):                                            # (Cout,) -> (LANE,)
        return jnp.zeros((LANE,), f32).at[:Cout].set(v)

    return {
        "w1s": w1s,
        "wd": wd.astype(jnp.bfloat16),
        "wq": qkv_full[:, :Cout],
        "wk": qkv_full[:, Cout:2 * Cout],
        "wv": qkv_full[:, 2 * Cout:],
        "bn1a_g_p": padc(params["bn1a_g"]), "bn1a_b_p": padc(params["bn1a_b"]),
        "bn2_g_p": padc(params["bn2_g"]), "bn2_b_p": padc(params["bn2_b"]),
        "bnd_g_p": padc(params["bnd_g"]), "bnd_b_p": padc(params["bnd_b"]),
    }


# ------------------------------- forward pass ------------------------------- #

def forward(x_nchw, prep, *, out_planes):
    Cout = out_planes
    N, Cin, H, W = x_nchw.shape
    assert Cin <= LANE and Cout <= LANE and Cout % HEADS == 0
    assert W % 8 == 0 and (H * W) % 8 == 0
    dh = Cout // HEADS
    HW = H * W
    M = N * HW
    scale = float(Cout) ** (-0.5)
    if HW % 512 == 0:
        TM = 512
    elif HW % 256 == 0:
        TM = 256
    elif HW % 128 == 0:
        TM = 128
    else:
        TM = HW
    JT = HW // TM
    f32 = jnp.float32
    bf16 = jnp.bfloat16

    # ---- input: NCHW -> NHWC, channel-pad, bf16 once, 1-px halo, dx-stack ---
    x_nhwc = jnp.transpose(x_nchw, (0, 2, 3, 1)).astype(bf16)
    x_cpad = jnp.zeros((N, H, W, LANE), bf16).at[..., :Cin].set(x_nhwc)
    x_halo = jnp.pad(x_cpad, ((0, 0), (1, 1), (1, 1), (0, 0)))
    xs = jnp.concatenate(
        [x_halo[:, :, dx:dx + W, :].reshape(N, (H + 2) * W, LANE)
         for dx in range(3)], axis=-1)                 # (N, (H+2)*W, 3*LANE)

    # ------------------------------- pass A ---------------------------------
    y1, dsv, stats = pl.pallas_call(
        functools.partial(_conv_stats_kernel, H=H, W=W),
        grid=(N,),
        in_specs=[
            pl.BlockSpec((1, (H + 2) * W, 3 * LANE), lambda b: (b, 0, 0)),
            pl.BlockSpec((3, 3 * LANE, LANE), lambda b: (0, 0, 0)),
            pl.BlockSpec((LANE, LANE), lambda b: (0, 0)),
        ],
        out_specs=[
            pl.BlockSpec((1, HW, LANE), lambda b: (b, 0, 0)),
            pl.BlockSpec((1, HW, LANE), lambda b: (b, 0, 0)),
            pl.BlockSpec((1, 4, LANE), lambda b: (b, 0, 0)),
        ],
        out_shape=[
            jax.ShapeDtypeStruct((N, HW, LANE), bf16),
            jax.ShapeDtypeStruct((N, HW, LANE), bf16),
            jax.ShapeDtypeStruct((N, 4, LANE), f32),
        ],
        scratch_shapes=[pltpu.VMEM((HW, LANE), f32)],
        compiler_params=pltpu.CompilerParams(
            dimension_semantics=("parallel",),
            vmem_limit_bytes=VMEM_LIMIT),
        cost_estimate=pl.CostEstimate(
            flops=2 * N * HW * LANE * LANE * 10,
            transcendentals=0,
            bytes_accessed=(xs.size * 2 + (9 * LANE * LANE + LANE * LANE) * 2
                            + 2 * N * HW * LANE * 2 + N * 4 * LANE * 4)),
    )(xs, prep["w1s"], prep["wd"])

    # hoisted BN factors for attn_block.bn1 (conv1 output) and downsample BN
    tot = jnp.sum(stats, axis=0)                             # (4, LANE)
    mean1 = tot[0] / M
    var1 = jnp.maximum(tot[1] / M - mean1 * mean1, 0.0)
    s1 = prep["bn1a_g_p"] * lax.rsqrt(var1 + EPS)
    t1 = prep["bn1a_b_p"] - mean1 * s1
    meand = tot[2] / M
    vard = jnp.maximum(tot[3] / M - meand * meand, 0.0)
    sd = prep["bnd_g_p"] * lax.rsqrt(vard + EPS)
    td = prep["bnd_b_p"] - meand * sd
    s1r, t1r = s1.reshape(1, LANE), t1.reshape(1, LANE)
    sdr, tdr = sd.reshape(1, LANE), td.reshape(1, LANE)

    # ------------------------------- pass B ---------------------------------
    gram, colsum = pl.pallas_call(
        _bn_gram_kernel,
        grid=(N, JT),
        in_specs=[
            pl.BlockSpec((1, TM, LANE), lambda b, j: (b, j, 0)),
            pl.BlockSpec((1, LANE), lambda b, j: (0, 0)),
            pl.BlockSpec((1, LANE), lambda b, j: (0, 0)),
        ],
        out_specs=[
            pl.BlockSpec((1, LANE, LANE), lambda b, j: (b, 0, 0)),
            pl.BlockSpec((1, 1, LANE), lambda b, j: (b, 0, 0)),
        ],
        out_shape=[
            jax.ShapeDtypeStruct((N, LANE, LANE), f32),
            jax.ShapeDtypeStruct((N, 1, LANE), f32),
        ],
        compiler_params=pltpu.CompilerParams(
            dimension_semantics=("parallel", "arbitrary"),
            vmem_limit_bytes=VMEM_LIMIT),
        cost_estimate=pl.CostEstimate(
            flops=2 * N * HW * LANE * LANE,
            transcendentals=0,
            bytes_accessed=N * HW * LANE * 2 + N * (LANE + 1) * LANE * 4),
    )(y1, s1r, t1r)

    # tiny per-(batch,head) glue (sub-vreg sized): attention logits, softmax,
    # attention/value weight fold, derived BN stats of the attention output.
    wq, wk, wv = prep["wq"], prep["wk"], prep["wv"]
    gram_r = gram[:, :Cout, :Cout]
    csum_r = colsum[:, 0, :Cout]
    logits_full = jnp.einsum("ci,bcd,dj->bij", wq, gram_r, wk)
    l5 = logits_full.reshape(N, HEADS, dh, HEADS, dh)
    logits = jnp.stack([l5[:, i, :, i, :] for i in range(HEADS)], axis=1) * scale
    attention = jax.nn.softmax(logits, axis=-1)              # (N, HEADS, dh, dh)

    abd = jnp.zeros((N, Cout, Cout), f32)
    for i in range(HEADS):
        abd = abd.at[:, i * dh:(i + 1) * dh, i * dh:(i + 1) * dh].set(
            attention[:, i])
    mv_r = jnp.einsum("cd,bed->bce", wv, abd)                # Wv @ A_bd^T
    mv_pad = jnp.zeros((N, LANE, LANE), f32).at[:, :Cout, :Cout].set(mv_r)
    mv_pad = mv_pad.astype(bf16)

    sum2 = jnp.zeros((LANE,), f32).at[:Cout].set(
        jnp.einsum("bc,bce->e", csum_r, mv_r))
    sumsq2 = jnp.zeros((LANE,), f32).at[:Cout].set(
        jnp.einsum("bce,bcd,bde->e", mv_r, gram_r, mv_r))
    mean2 = sum2 / M
    var2 = jnp.maximum(sumsq2 / M - mean2 * mean2, 0.0)
    s2 = prep["bn2_g_p"] * lax.rsqrt(var2 + EPS)
    t2 = prep["bn2_b_p"] - mean2 * s2
    s2r, t2r = s2.reshape(1, LANE), t2.reshape(1, LANE)

    # ------------------------------- pass C ---------------------------------
    out_pad = pl.pallas_call(
        _attn_residual_kernel,
        grid=(N, JT),
        in_specs=[
            pl.BlockSpec((1, TM, LANE), lambda b, j: (b, j, 0)),    # conv1 out
            pl.BlockSpec((1, TM, LANE), lambda b, j: (b, j, 0)),    # downsample
            pl.BlockSpec((1, LANE, LANE), lambda b, j: (b, 0, 0)),  # Wv @ A^T
            pl.BlockSpec((1, LANE), lambda b, j: (0, 0)),           # s1
            pl.BlockSpec((1, LANE), lambda b, j: (0, 0)),           # t1
            pl.BlockSpec((1, LANE), lambda b, j: (0, 0)),           # s2
            pl.BlockSpec((1, LANE), lambda b, j: (0, 0)),           # t2
            pl.BlockSpec((1, LANE), lambda b, j: (0, 0)),           # sd
            pl.BlockSpec((1, LANE), lambda b, j: (0, 0)),           # td
        ],
        out_specs=pl.BlockSpec((1, TM, LANE), lambda b, j: (b, j, 0)),
        out_shape=jax.ShapeDtypeStruct((N, HW, LANE), f32),
        compiler_params=pltpu.CompilerParams(
            dimension_semantics=("parallel", "parallel"),
            vmem_limit_bytes=VMEM_LIMIT),
        cost_estimate=pl.CostEstimate(
            flops=2 * N * HW * LANE * LANE,
            transcendentals=0,
            bytes_accessed=(2 * N * HW * LANE * 2 + N * LANE * LANE * 2
                            + N * HW * LANE * 4)),
    )(y1, dsv, mv_pad, s1r, t1r, s2r, t2r, sdr, tdr)

    out = out_pad[:, :, :Cout].reshape(N, H, W, Cout)
    out = jnp.transpose(out, (0, 3, 1, 2))                   # NHWC -> NCHW
    return out, attention


# --------------------------- pure-JAX reference ----------------------------- #

def reference_forward(x_nchw, params, num_classes):
    g = num_classes
    N, Cin, H, W = x_nchw.shape
    Cout = params["bn1a_g"].shape[0]
    dh = Cout // HEADS
    x = x_nchw.astype(jnp.float32)

    def conv(z, w, groups, pad):
        return lax.conv_general_dilated(
            z, w, window_strides=(1, 1), padding=[(pad, pad), (pad, pad)],
            dimension_numbers=("NCHW", "OIHW", "NCHW"),
            feature_group_count=groups)

    def bn(z, gamma, beta):
        mean = jnp.mean(z, axis=(0, 2, 3), keepdims=True)
        var = jnp.mean((z - mean) ** 2, axis=(0, 2, 3), keepdims=True)
        return ((z - mean) * lax.rsqrt(var + EPS) * gamma.reshape(1, -1, 1, 1)
                + beta.reshape(1, -1, 1, 1))

    out = conv(x, params["conv1_w"], g, 1) + params["conv1_b"].reshape(1, -1, 1, 1)
    out = jnp.maximum(bn(out, params["bn1a_g"], params["bn1a_b"]), 0.0)
    qkv = conv(out, params["qkv_w"], g, 0)                   # (N, 3*Cout, H, W)
    qkv = qkv.reshape(N, 3, HEADS, dh, H * W)
    q, k, v = qkv[:, 0], qkv[:, 1], qkv[:, 2]                # (N, HEADS, dh, HW)
    logits = jnp.einsum("bhip,bhjp->bhij", q, k) * (float(Cout) ** -0.5)
    attn = jax.nn.softmax(logits, axis=-1)
    o = jnp.einsum("bhij,bhjp->bhip", attn, v)               # (N, HEADS, dh, HW)
    o = o.reshape(N, Cout, H, W)
    o = jnp.maximum(bn(o, params["bn2_g"], params["bn2_b"]), 0.0)
    ds = bn(conv(x, params["ds_w"], g, 0), params["bnd_g"], params["bnd_b"])
    return jnp.maximum(o + ds, 0.0), attn


# --------------------------------- params ----------------------------------- #

def init_params(key, in_planes, out_planes, num_classes):
    g = num_classes
    ks = jax.random.split(key, 10)

    def nrm(k, shape, s=0.1):
        return s * jax.random.normal(k, shape, jnp.float32)

    return {
        "conv1_w": nrm(ks[0], (out_planes, in_planes // g, 3, 3)),
        "conv1_b": nrm(ks[1], (out_planes,)),
        "bn1a_g": 1.0 + nrm(ks[2], (out_planes,)),   # attn_block.bn1
        "bn1a_b": nrm(ks[3], (out_planes,)),
        "qkv_w": nrm(ks[4], (3 * out_planes, out_planes // g, 1, 1)),
        "bn2_g": 1.0 + nrm(ks[5], (out_planes,)),    # ClassSpedificResNetBlock.bn1
        "bn2_b": nrm(ks[6], (out_planes,)),
        "ds_w": nrm(ks[7], (out_planes, in_planes // g, 1, 1)),
        "bnd_g": 1.0 + nrm(ks[8], (out_planes,)),
        "bnd_b": nrm(ks[9], (out_planes,)),
    }


# ---------------------------------- main ------------------------------------ #

if __name__ == "__main__":
    # ClassSpedificResNetBlock(in_planes=4, out_planes=8, num_classes=2, stride=1)
    # -> downsample branch active because in_planes != out_planes; y=None.
    N, Cin, H, W = 2, 4, 16, 16
    Cout, num_classes = 8, 2

    key = jax.random.PRNGKey(0)
    kx, kp = jax.random.split(key)
    x = jax.random.normal(kx, (N, Cin, H, W), jnp.float32)
    params = init_params(kp, Cin, Cout, num_classes)

    prep = prepare_params(params, num_classes=num_classes, out_planes=Cout)
    prep = jax.tree_util.tree_map(jax.block_until_ready, prep)

    fwd = jax.jit(forward, static_argnames=("out_planes",))
    out, attn = fwd(x, prep, out_planes=Cout)
    out = jax.block_until_ready(out)
    attn = jax.block_until_ready(attn)
    assert out.shape == (N, Cout, H, W), out.shape
    assert attn.shape == (N, HEADS, Cout // HEADS, Cout // HEADS), attn.shape

    ref_out, ref_attn = reference_forward(x, params, num_classes)
    ref_out = jax.block_until_ready(ref_out)
    err_o = float(jnp.max(jnp.abs(out - ref_out)))
    err_a = float(jnp.max(jnp.abs(attn - ref_attn)))
    # bf16 conv / Gram / attention-apply operands and bf16 y1/d intermediates
    # vs the pure-f32 reference -> ~1e-2 .. 3e-2 deviations (BN's 1/std
    # amplifies rounding); structural errors would be O(0.3 .. 1).
    assert err_o < 1e-1 and err_a < 5e-2, (err_o, err_a)
    print("KERNEL_OK")
</pallas_src>

<mosaic_0001>
module attributes {stable_mosaic.version = 11 : i64} {
  func.func @_conv_stats_kernel(%arg0: i32, %arg1: memref<1x288x384xbf16, #tpu.memory_space<vmem>>, %arg2: memref<3x384x128xbf16, #tpu.memory_space<vmem>>, %arg3: memref<128x128xbf16, #tpu.memory_space<vmem>>, %arg4: memref<1x256x128xbf16, #tpu.memory_space<vmem>>, %arg5: memref<1x256x128xbf16, #tpu.memory_space<vmem>>, %arg6: memref<1x4x128xf32, #tpu.memory_space<vmem>>, %arg7: memref<256x128xf32, #tpu.memory_space<vmem>>) attributes {dimension_semantics = [#tpu.dimension_semantics<parallel>], iteration_bounds = array<i64: 2>, scalar_prefetch = 0 : i64, scratch_operands = 1 : i64, tpu.core_type = #tpu.core_type<tc>, window_params = [{transform_indices = @transform_0, window_bounds = array<i64: 1, 288, 384>}, {pipeline_mode = #tpu.pipeline_mode<synchronous>, transform_indices = @transform_1, window_bounds = array<i64: 3, 384, 128>}, {pipeline_mode = #tpu.pipeline_mode<synchronous>, transform_indices = @transform_2, window_bounds = array<i64: 128, 128>}, {transform_indices = @transform_3, window_bounds = array<i64: 1, 256, 128>}, {transform_indices = @transform_4, window_bounds = array<i64: 1, 256, 128>}, {transform_indices = @transform_5, window_bounds = array<i64: 1, 4, 128>}]} {
    %c0 = arith.constant 0 : index
    %c0_0 = arith.constant 0 : index
    %c0_1 = arith.constant 0 : index
    %0 = vector.load %arg1[%c0, %c0_0, %c0_1] : memref<1x288x384xbf16, #tpu.memory_space<vmem>>, vector<1x256x384xbf16>
    %1 = vector.shape_cast %0 : vector<1x256x384xbf16> to vector<256x384xbf16>
    %c0_2 = arith.constant 0 : index
    %c0_3 = arith.constant 0 : index
    %c0_4 = arith.constant 0 : index
    %2 = vector.load %arg2[%c0_2, %c0_3, %c0_4] : memref<3x384x128xbf16, #tpu.memory_space<vmem>>, vector<1x384x128xbf16>
    %3 = vector.shape_cast %2 : vector<1x384x128xbf16> to vector<384x128xbf16>
    %cst = arith.constant dense<0.000000e+00> : vector<256x128xf32>
    %4 = tpu.matmul %1, %3, %cst {dimension_numbers = #tpu.dot_dimension_numbers<[1], [0], [0], [1], [0, 0, 1, 1], [], []>} : vector<256x384xbf16>, vector<384x128xbf16>, vector<256x128xf32> -> vector<256x128xf32>
    %c0_5 = arith.constant 0 : index
    %c0_6 = arith.constant 0 : index
    %5 = vector.load %arg7[%c0_5, %c0_6] : memref<256x128xf32, #tpu.memory_space<vmem>>, vector<256x128xf32>
    tpu.vector_store %arg7[%c0_5, %c0_6], %4 {strides = array<i32>} : memref<256x128xf32, #tpu.memory_space<vmem>>, vector<256x128xf32>,
    %c0_7 = arith.constant 0 : index
    %c0_8 = arith.constant 0 : index
    %6 = vector.load %arg7[%c0_7, %c0_8] : memref<256x128xf32, #tpu.memory_space<vmem>>, vector<256x128xf32>
    %c0_9 = arith.constant 0 : index
    %c16 = arith.constant 16 : index
    %c0_10 = arith.constant 0 : index
    %7 = vector.load %arg1[%c0_9, %c16, %c0_10] : memref<1x288x384xbf16, #tpu.memory_space<vmem>>, vector<1x256x384xbf16>
    %8 = vector.shape_cast %7 : vector<1x256x384xbf16> to vector<256x384xbf16>
    %c1 = arith.constant 1 : index
    %c0_11 = arith.constant 0 : index
    %c0_12 = arith.constant 0 : index
    %9 = vector.load %arg2[%c1, %c0_11, %c0_12] : memref<3x384x128xbf16, #tpu.memory_space<vmem>>, vector<1x384x128xbf16>
    %10 = vector.shape_cast %9 : vector<1x384x128xbf16> to vector<384x128xbf16>
    %cst_13 = arith.constant dense<0.000000e+00> : vector<256x128xf32>
    %11 = tpu.matmul %8, %10, %cst_13 {dimension_numbers = #tpu.dot_dimension_numbers<[1], [0], [0], [1], [0, 0, 1, 1], [], []>} : vector<256x384xbf16>, vector<384x128xbf16>, vector<256x128xf32> -> vector<256x128xf32>
    %12 = arith.addf %6, %11 : vector<256x128xf32>
    %c0_14 = arith.constant 0 : index
    %c0_15 = arith.constant 0 : index
    %13 = vector.load %arg7[%c0_14, %c0_15] : memref<256x128xf32, #tpu.memory_space<vmem>>, vector<256x128xf32>
    tpu.vector_store %arg7[%c0_14, %c0_15], %12 {strides = array<i32>} : memref<256x128xf32, #tpu.memory_space<vmem>>, vector<256x128xf32>,
    %c0_16 = arith.constant 0 : index
    %c0_17 = arith.constant 0 : index
    %14 = vector.load %arg7[%c0_16, %c0_17] : memref<256x128xf32, #tpu.memory_space<vmem>>, vector<256x128xf32>
    %c0_18 = arith.constant 0 : index
    %c32 = arith.constant 32 : index
    %c0_19 = arith.constant 0 : index
    %15 = vector.load %arg1[%c0_18, %c32, %c0_19] : memref<1x288x384xbf16, #tpu.memory_space<vmem>>, vector<1x256x384xbf16>
    %16 = vector.shape_cast %15 : vector<1x256x384xbf16> to vector<256x384xbf16>
    %c2 = arith.constant 2 : index
    %c0_20 = arith.constant 0 : index
    %c0_21 = arith.constant 0 : index
    %17 = vector.load %arg2[%c2, %c0_20, %c0_21] : memref<3x384x128xbf16, #tpu.memory_space<vmem>>, vector<1x384x128xbf16>
    %18 = vector.shape_cast %17 : vector<1x384x128xbf16> to vector<384x128xbf16>
    %cst_22 = arith.constant dense<0.000000e+00> : vector<256x128xf32>
    %19 = tpu.matmul %16, %18, %cst_22 {dimension_numbers = #tpu.dot_dimension_numbers<[1], [0], [0], [1], [0, 0, 1, 1], [], []>} : vector<256x384xbf16>, vector<384x128xbf16>, vector<256x128xf32> -> vector<256x128xf32>
    %20 = arith.addf %14, %19 : vector<256x128xf32>
    %c0_23 = arith.constant 0 : index
    %c0_24 = arith.constant 0 : index
    %21 = vector.load %arg7[%c0_23, %c0_24] : memref<256x128xf32, #tpu.memory_space<vmem>>, vector<256x128xf32>
    tpu.vector_store %arg7[%c0_23, %c0_24], %20 {strides = array<i32>} : memref<256x128xf32, #tpu.memory_space<vmem>>, vector<256x128xf32>,
    %c0_25 = arith.constant 0 : index
    %c0_26 = arith.constant 0 : index
    %22 = vector.load %arg7[%c0_25, %c0_26] : memref<256x128xf32, #tpu.memory_space<vmem>>, vector<256x128xf32>
    %23 = arith.truncf %22 : vector<256x128xf32> to vector<256x128xbf16>
    %c0_27 = arith.constant 0 : index
    %c0_28 = arith.constant 0 : index
    %c0_29 = arith.constant 0 : index
    %24 = vector.load %arg4[%c0_27, %c0_28, %c0_29] : memref<1x256x128xbf16, #tpu.memory_space<vmem>>, vector<1x256x128xbf16>
    %25 = vector.shape_cast %24 : vector<1x256x128xbf16> to vector<256x128xbf16>
    %26 = vector.shape_cast %23 : vector<256x128xbf16> to vector<1x256x128xbf16>
    tpu.vector_store %arg4[%c0_27, %c0_28, %c0_29], %26 {strides = array<i32>} : memref<1x256x128xbf16, #tpu.memory_space<vmem>>, vector<1x256x128xbf16>,
    %c0_30 = arith.constant 0 : index
    %c16_31 = arith.constant 16 : index
    %c128 = arith.constant 128 : index
    %27 = vector.load %arg1[%c0_30, %c16_31, %c128] : memref<1x288x384xbf16, #tpu.memory_space<vmem>>, vector<1x256x128xbf16>
    %28 = vector.shape_cast %27 : vector<1x256x128xbf16> to vector<256x128xbf16>
    %c0_32 = arith.constant 0 : index
    %c0_33 = arith.constant 0 : index
    %29 = vector.load %arg3[%c0_32, %c0_33] : memref<128x128xbf16, #tpu.memory_space<vmem>>, vector<128x128xbf16>
    %cst_34 = arith.constant dense<0.000000e+00> : vector<256x128xf32>
    %30 = tpu.matmul %28, %29, %cst_34 {dimension_numbers = #tpu.dot_dimension_numbers<[1], [0], [0], [1], [0, 0, 1, 1], [], []>} : vector<256x128xbf16>, vector<128x128xbf16>, vector<256x128xf32> -> vector<256x128xf32>
    %31 = arith.truncf %30 : vector<256x128xf32> to vector<256x128xbf16>
    %c0_35 = arith.constant 0 : index
    %c0_36 = arith.constant 0 : index
    %c0_37 = arith.constant 0 : index
    %32 = vector.load %arg5[%c0_35, %c0_36, %c0_37] : memref<1x256x128xbf16, #tpu.memory_space<vmem>>, vector<1x256x128xbf16>
    %33 = vector.shape_cast %32 : vector<1x256x128xbf16> to vector<256x128xbf16>
    %34 = vector.shape_cast %31 : vector<256x128xbf16> to vector<1x256x128xbf16>
    tpu.vector_store %arg5[%c0_35, %c0_36, %c0_37], %34 {strides = array<i32>} : memref<1x256x128xbf16, #tpu.memory_space<vmem>>, vector<1x256x128xbf16>,
    %cst_38 = arith.constant dense<0.000000e+00> : vector<128xf32>
    %35 = vector.multi_reduction <add>, %22, %cst_38 [0] : vector<256x128xf32> to vector<128xf32>
    %36 = vector.shape_cast %35 : vector<128xf32> to vector<1x128xf32>
    %37 = arith.mulf %22, %22 : vector<256x128xf32>
    %cst_39 = arith.constant dense<0.000000e+00> : vector<128xf32>
    %38 = vector.multi_reduction <add>, %37, %cst_39 [0] : vector<256x128xf32> to vector<128xf32>
    %39 = vector.shape_cast %38 : vector<128xf32> to vector<1x128xf32>
    %cst_40 = arith.constant dense<0.000000e+00> : vector<128xf32>
    %40 = vector.multi_reduction <add>, %30, %cst_40 [0] : vector<256x128xf32> to vector<128xf32>
    %41 = vector.shape_cast %40 : vector<128xf32> to vector<1x128xf32>
    %42 = arith.mulf %30, %30 : vector<256x128xf32>
    %cst_41 = arith.constant dense<0.000000e+00> : vector<128xf32>
    %43 = vector.multi_reduction <add>, %42, %cst_41 [0] : vector<256x128xf32> to vector<128xf32>
    %44 = vector.shape_cast %43 : vector<128xf32> to vector<1x128xf32>
    %45 = tpu.concatenate %36, %39, %41, %44 in 0 : vector<1x128xf32>, vector<1x128xf32>, vector<1x128xf32>, vector<1x128xf32> -> vector<4x128xf32>
    %c0_42 = arith.constant 0 : index
    %c0_43 = arith.constant 0 : index
    %c0_44 = arith.constant 0 : index
    %46 = vector.load %arg6[%c0_42, %c0_43, %c0_44] : memref<1x4x128xf32, #tpu.memory_space<vmem>>, vector<1x4x128xf32>
    %47 = vector.shape_cast %46 : vector<1x4x128xf32> to vector<4x128xf32>
    %48 = vector.shape_cast %45 : vector<4x128xf32> to vector<1x4x128xf32>
    tpu.vector_store %arg6[%c0_42, %c0_43, %c0_44], %48 {strides = array<i32>} : memref<1x4x128xf32, #tpu.memory_space<vmem>>, vector<1x4x128xf32>,
    return
  }
  func.func @transform_0(%arg0: i32) -> (i32, i32, i32) {
    %c0_i32 = arith.constant 0 : i32
    %c0_i32_0 = arith.constant 0 : i32
    %c0_i32_1 = arith.constant 0 : i32
    return %arg0, %c0_i32, %c0_i32_0 : i32, i32, i32
  }
  func.func @transform_1(%arg0: i32) -> (i32, i32, i32) {
    %c0_i32 = arith.constant 0 : i32
    %c0_i32_0 = arith.constant 0 : i32
    %c0_i32_1 = arith.constant 0 : i32
    %c0_i32_2 = arith.constant 0 : i32
    return %c0_i32, %c0_i32_0, %c0_i32_1 : i32, i32, i32
  }
  func.func @transform_2(%arg0: i32) -> (i32, i32) {
    %c0_i32 = arith.constant 0 : i32
    %c0_i32_0 = arith.constant 0 : i32
    %c0_i32_1 = arith.constant 0 : i32
    return %c0_i32, %c0_i32_0 : i32, i32
  }
  func.func @transform_3(%arg0: i32) -> (i32, i32, i32) {
    %c0_i32 = arith.constant 0 : i32
    %c0_i32_0 = arith.constant 0 : i32
    %c0_i32_1 = arith.constant 0 : i32
    return %arg0, %c0_i32, %c0_i32_0 : i32, i32, i32
  }
  func.func @transform_4(%arg0: i32) -> (i32, i32, i32) {
    %c0_i32 = arith.constant 0 : i32
    %c0_i32_0 = arith.constant 0 : i32
    %c0_i32_1 = arith.constant 0 : i32
    return %arg0, %c0_i32, %c0_i32_0 : i32, i32, i32
  }
  func.func @transform_5(%arg0: i32) -> (i32, i32, i32) {
    %c0_i32 = arith.constant 0 : i32
    %c0_i32_0 = arith.constant 0 : i32
    %c0_i32_1 = arith.constant 0 : i32
    return %arg0, %c0_i32, %c0_i32_0 : i32, i32, i32
  }
}

module attributes {stable_mosaic.version = 11 : i64} {
  func.func @_bn_gram_kernel(%arg0: i32, %arg1: i32, %arg2: memref<1x256x128xbf16, #tpu.memory_space<vmem>>, %arg3: memref<1x128xf32, #tpu.memory_space<vmem>>, %arg4: memref<1x128xf32, #tpu.memory_space<vmem>>, %arg5: memref<1x128x128xf32, #tpu.memory_space<vmem>>, %arg6: memref<1x1x128xf32, #tpu.memory_space<vmem>>) attributes {dimension_semantics = [#tpu.dimension_semantics<parallel>, #tpu.dimension_semantics<arbitrary>], iteration_bounds = array<i64: 2, 1>, scalar_prefetch = 0 : i64, scratch_operands = 0 : i64, tpu.core_type = #tpu.core_type<tc>, window_params = [{transform_indices = @transform_0, window_bounds = array<i64: 1, 256, 128>}, {pipeline_mode = #tpu.pipeline_mode<synchronous>, transform_indices = @transform_1, window_bounds = array<i64: 1, 128>}, {pipeline_mode = #tpu.pipeline_mode<synchronous>, transform_indices = @transform_2, window_bounds = array<i64: 1, 128>}, {transform_indices = @transform_3, window_bounds = array<i64: 1, 128, 128>}, {transform_indices = @transform_4, window_bounds = array<i64: 1, 1, 128>}]} {
    %c0_i32 = arith.constant 0 : i32
    %0 = arith.cmpi eq, %arg1, %c0_i32 : i32
    %1 = arith.extui %0 : i1 to i32
    %c0_i32_0 = arith.constant 0 : i32
    %2 = arith.cmpi ne, %1, %c0_i32_0 : i32
    scf.if %2 {
      %cst_21 = arith.constant 0.000000e+00 : f32
      %30 = vector.broadcast %cst_21 : f32 to vector<1x128x128xf32>
      %c0_22 = arith.constant 0 : index
      %c0_23 = arith.constant 0 : index
      %c0_24 = arith.constant 0 : index
      %31 = vector.load %arg5[%c0_22, %c0_23, %c0_24] : memref<1x128x128xf32, #tpu.memory_space<vmem>>, vector<1x128x128xf32>
      tpu.vector_store %arg5[%c0_22, %c0_23, %c0_24], %30 {strides = array<i32>} : memref<1x128x128xf32, #tpu.memory_space<vmem>>, vector<1x128x128xf32>,
      %cst_25 = arith.constant 0.000000e+00 : f32
      %32 = vector.broadcast %cst_25 : f32 to vector<1x1x128xf32>
      %c0_26 = arith.constant 0 : index
      %c0_27 = arith.constant 0 : index
      %c0_28 = arith.constant 0 : index
      %33 = vector.load %arg6[%c0_26, %c0_27, %c0_28] : memref<1x1x128xf32, #tpu.memory_space<vmem>>, vector<1x1x128xf32>
      tpu.vector_store %arg6[%c0_26, %c0_27, %c0_28], %32 {strides = array<i32>} : memref<1x1x128xf32, #tpu.memory_space<vmem>>, vector<1x1x128xf32>,
    } else {
    }
    %c0 = arith.constant 0 : index
    %c0_1 = arith.constant 0 : index
    %c0_2 = arith.constant 0 : index
    %3 = vector.load %arg2[%c0, %c0_1, %c0_2] : memref<1x256x128xbf16, #tpu.memory_space<vmem>>, vector<1x256x128xbf16>
    %4 = vector.shape_cast %3 : vector<1x256x128xbf16> to vector<256x128xbf16>
    %c0_3 = arith.constant 0 : index
    %c0_4 = arith.constant 0 : index
    %5 = vector.load %arg3[%c0_3, %c0_4] : memref<1x128xf32, #tpu.memory_space<vmem>>, vector<1x128xf32>
    %6 = arith.extf %4 : vector<256x128xbf16> to vector<256x128xf32>
    %7 = vector.broadcast %5 : vector<1x128xf32> to vector<256x128xf32>
    %8 = arith.mulf %6, %7 : vector<256x128xf32>
    %c0_5 = arith.constant 0 : index
    %c0_6 = arith.constant 0 : index
    %9 = vector.load %arg4[%c0_5, %c0_6] : memref<1x128xf32, #tpu.memory_space<vmem>>, vector<1x128xf32>
    %10 = vector.broadcast %9 : vector<1x128xf32> to vector<256x128xf32>
    %11 = arith.addf %8, %10 : vector<256x128xf32>
    %cst = arith.constant 0.000000e+00 : f32
    %12 = vector.broadcast %cst : f32 to vector<256x128xf32>
    %13 = arith.maximumf %11, %12 : vector<256x128xf32>
    %14 = arith.truncf %13 : vector<256x128xf32> to vector<256x128xbf16>
    %cst_7 = arith.constant dense<0.000000e+00> : vector<128x128xf32>
    %15 = tpu.matmul %14, %14, %cst_7 {dimension_numbers = #tpu.dot_dimension_numbers<[0], [0], [1], [1], [0, 1, 1, 1], [], []>} : vector<256x128xbf16>, vector<256x128xbf16>, vector<128x128xf32> -> vector<128x128xf32>
    %c0_8 = arith.constant 0 : index
    %c0_9 = arith.constant 0 : index
    %c0_10 = arith.constant 0 : index
    %16 = vector.load %arg5[%c0_8, %c0_9, %c0_10] : memref<1x128x128xf32, #tpu.memory_space<vmem>>, vector<1x128x128xf32>
    %17 = vector.shape_cast %16 : vector<1x128x128xf32> to vector<128x128xf32>
    %18 = arith.addf %17, %15 : vector<128x128xf32>
    %c0_11 = arith.constant 0 : index
    %c0_12 = arith.constant 0 : index
    %c0_13 = arith.constant 0 : index
    %19 = vector.load %arg5[%c0_11, %c0_12, %c0_13] : memref<1x128x128xf32, #tpu.memory_space<vmem>>, vector<1x128x128xf32>
    %20 = vector.shape_cast %19 : vector<1x128x128xf32> to vector<128x128xf32>
    %21 = vector.shape_cast %18 : vector<128x128xf32> to vector<1x128x128xf32>
    tpu.vector_store %arg5[%c0_11, %c0_12, %c0_13], %21 {strides = array<i32>} : memref<1x128x128xf32, #tpu.memory_space<vmem>>, vector<1x128x128xf32>,
    %c0_14 = arith.constant 0 : index
    %c0_15 = arith.constant 0 : index
    %c0_16 = arith.constant 0 : index
    %22 = vector.load %arg6[%c0_14, %c0_15, %c0_16] : memref<1x1x128xf32, #tpu.memory_space<vmem>>, vector<1x1x128xf32>
    %23 = vector.shape_cast %22 : vector<1x1x128xf32> to vector<1x128xf32>
    %cst_17 = arith.constant dense<0.000000e+00> : vector<128xf32>
    %24 = vector.multi_reduction <add>, %13, %cst_17 [0] : vector<256x128xf32> to vector<128xf32>
    %25 = vector.shape_cast %24 : vector<128xf32> to vector<1x128xf32>
    %26 = arith.addf %23, %25 : vector<1x128xf32>
    %c0_18 = arith.constant 0 : index
    %c0_19 = arith.constant 0 : index
    %c0_20 = arith.constant 0 : index
    %27 = vector.load %arg6[%c0_18, %c0_19, %c0_20] : memref<1x1x128xf32, #tpu.memory_space<vmem>>, vector<1x1x128xf32>
    %28 = vector.shape_cast %27 : vector<1x1x128xf32> to vector<1x128xf32>
    %29 = vector.shape_cast %26 : vector<1x128xf32> to vector<1x1x128xf32>
    tpu.vector_store %arg6[%c0_18, %c0_19, %c0_20], %29 {strides = array<i32>} : memref<1x1x128xf32, #tpu.memory_space<vmem>>, vector<1x1x128xf32>,
    return
  }
  func.func @transform_0(%arg0: i32, %arg1: i32) -> (i32, i32, i32) {
    %c0_i32 = arith.constant 0 : i32
    %c0_i32_0 = arith.constant 0 : i32
    return %arg0, %arg1, %c0_i32 : i32, i32, i32
  }
  func.func @transform_1(%arg0: i32, %arg1: i32) -> (i32, i32) {
    %c0_i32 = arith.constant 0 : i32
    %c0_i32_0 = arith.constant 0 : i32
    %c0_i32_1 = arith.constant 0 : i32
    return %c0_i32, %c0_i32_0 : i32, i32
  }
  func.func @transform_2(%arg0: i32, %arg1: i32) -> (i32, i32) {
    %c0_i32 = arith.constant 0 : i32
    %c0_i32_0 = arith.constant 0 : i32
    %c0_i32_1 = arith.constant 0 : i32
    return %c0_i32, %c0_i32_0 : i32, i32
  }
  func.func @transform_3(%arg0: i32, %arg1: i32) -> (i32, i32, i32) {
    %c0_i32 = arith.constant 0 : i32
    %c0_i32_0 = arith.constant 0 : i32
    %c0_i32_1 = arith.constant 0 : i32
    return %arg0, %c0_i32, %c0_i32_0 : i32, i32, i32
  }
  func.func @transform_4(%arg0: i32, %arg1: i32) -> (i32, i32, i32) {
    %c0_i32 = arith.constant 0 : i32
    %c0_i32_0 = arith.constant 0 : i32
    %c0_i32_1 = arith.constant 0 : i32
    return %arg0, %c0_i32, %c0_i32_0 : i32, i32, i32
  }
}

module attributes {stable_mosaic.version = 11 : i64} {
  func.func @_attn_residual_kernel(%arg0: i32, %arg1: i32, %arg2: memref<1x256x128xbf16, #tpu.memory_space<vmem>>, %arg3: memref<1x256x128xbf16, #tpu.memory_space<vmem>>, %arg4: memref<1x128x128xbf16, #tpu.memory_space<vmem>>, %arg5: memref<1x128xf32, #tpu.memory_space<vmem>>, %arg6: memref<1x128xf32, #tpu.memory_space<vmem>>, %arg7: memref<1x128xf32, #tpu.memory_space<vmem>>, %arg8: memref<1x128xf32, #tpu.memory_space<vmem>>, %arg9: memref<1x128xf32, #tpu.memory_space<vmem>>, %arg10: memref<1x128xf32, #tpu.memory_space<vmem>>, %arg11: memref<1x256x128xf32, #tpu.memory_space<vmem>>) attributes {dimension_semantics = [#tpu.dimension_semantics<parallel>, #tpu.dimension_semantics<parallel>], iteration_bounds = array<i64: 2, 1>, scalar_prefetch = 0 : i64, scratch_operands = 0 : i64, tpu.core_type = #tpu.core_type<tc>, window_params = [{transform_indices = @transform_0, window_bounds = array<i64: 1, 256, 128>}, {transform_indices = @transform_1, window_bounds = array<i64: 1, 256, 128>}, {transform_indices = @transform_2, window_bounds = array<i64: 1, 128, 128>}, {pipeline_mode = #tpu.pipeline_mode<synchronous>, transform_indices = @transform_3, window_bounds = array<i64: 1, 128>}, {pipeline_mode = #tpu.pipeline_mode<synchronous>, transform_indices = @transform_4, window_bounds = array<i64: 1, 128>}, {pipeline_mode = #tpu.pipeline_mode<synchronous>, transform_indices = @transform_5, window_bounds = array<i64: 1, 128>}, {pipeline_mode = #tpu.pipeline_mode<synchronous>, transform_indices = @transform_6, window_bounds = array<i64: 1, 128>}, {pipeline_mode = #tpu.pipeline_mode<synchronous>, transform_indices = @transform_7, window_bounds = array<i64: 1, 128>}, {pipeline_mode = #tpu.pipeline_mode<synchronous>, transform_indices = @transform_8, window_bounds = array<i64: 1, 128>}, {transform_indices = @transform_9, window_bounds = array<i64: 1, 256, 128>}]} {
    %c0 = arith.constant 0 : index
    %c0_0 = arith.constant 0 : index
    %c0_1 = arith.constant 0 : index
    %0 = vector.load %arg2[%c0, %c0_0, %c0_1] : memref<1x256x128xbf16, #tpu.memory_space<vmem>>, vector<1x256x128xbf16>
    %1 = vector.shape_cast %0 : vector<1x256x128xbf16> to vector<256x128xbf16>
    %c0_2 = arith.constant 0 : index
    %c0_3 = arith.constant 0 : index
    %2 = vector.load %arg5[%c0_2, %c0_3] : memref<1x128xf32, #tpu.memory_space<vmem>>, vector<1x128xf32>
    %3 = arith.extf %1 : vector<256x128xbf16> to vector<256x128xf32>
    %4 = vector.broadcast %2 : vector<1x128xf32> to vector<256x128xf32>
    %5 = arith.mulf %3, %4 : vector<256x128xf32>
    %c0_4 = arith.constant 0 : index
    %c0_5 = arith.constant 0 : index
    %6 = vector.load %arg6[%c0_4, %c0_5] : memref<1x128xf32, #tpu.memory_space<vmem>>, vector<1x128xf32>
    %7 = vector.broadcast %6 : vector<1x128xf32> to vector<256x128xf32>
    %8 = arith.addf %5, %7 : vector<256x128xf32>
    %cst = arith.constant 0.000000e+00 : f32
    %9 = vector.broadcast %cst : f32 to vector<256x128xf32>
    %10 = arith.maximumf %8, %9 : vector<256x128xf32>
    %11 = arith.truncf %10 : vector<256x128xf32> to vector<256x128xbf16>
    %c0_6 = arith.constant 0 : index
    %c0_7 = arith.constant 0 : index
    %c0_8 = arith.constant 0 : index
    %12 = vector.load %arg4[%c0_6, %c0_7, %c0_8] : memref<1x128x128xbf16, #tpu.memory_space<vmem>>, vector<1x128x128xbf16>
    %13 = vector.shape_cast %12 : vector<1x128x128xbf16> to vector<128x128xbf16>
    %cst_9 = arith.constant dense<0.000000e+00> : vector<256x128xf32>
    %14 = tpu.matmul %11, %13, %cst_9 {dimension_numbers = #tpu.dot_dimension_numbers<[1], [0], [0], [1], [0, 0, 1, 1], [], []>} : vector<256x128xbf16>, vector<128x128xbf16>, vector<256x128xf32> -> vector<256x128xf32>
    %c0_10 = arith.constant 0 : index
    %c0_11 = arith.constant 0 : index
    %15 = vector.load %arg7[%c0_10, %c0_11] : memref<1x128xf32, #tpu.memory_space<vmem>>, vector<1x128xf32>
    %16 = vector.broadcast %15 : vector<1x128xf32> to vector<256x128xf32>
    %17 = arith.mulf %14, %16 : vector<256x128xf32>
    %c0_12 = arith.constant 0 : index
    %c0_13 = arith.constant 0 : index
    %18 = vector.load %arg8[%c0_12, %c0_13] : memref<1x128xf32, #tpu.memory_space<vmem>>, vector<1x128xf32>
    %19 = vector.broadcast %18 : vector<1x128xf32> to vector<256x128xf32>
    %20 = arith.addf %17, %19 : vector<256x128xf32>
    %cst_14 = arith.constant 0.000000e+00 : f32
    %21 = vector.broadcast %cst_14 : f32 to vector<256x128xf32>
    %22 = arith.maximumf %20, %21 : vector<256x128xf32>
    %c0_15 = arith.constant 0 : index
    %c0_16 = arith.constant 0 : index
    %c0_17 = arith.constant 0 : index
    %23 = vector.load %arg3[%c0_15, %c0_16, %c0_17] : memref<1x256x128xbf16, #tpu.memory_space<vmem>>, vector<1x256x128xbf16>
    %24 = vector.shape_cast %23 : vector<1x256x128xbf16> to vector<256x128xbf16>
    %c0_18 = arith.constant 0 : index
    %c0_19 = arith.constant 0 : index
    %25 = vector.load %arg9[%c0_18, %c0_19] : memref<1x128xf32, #tpu.memory_space<vmem>>, vector<1x128xf32>
    %26 = arith.extf %24 : vector<256x128xbf16> to vector<256x128xf32>
    %27 = vector.broadcast %25 : vector<1x128xf32> to vector<256x128xf32>
    %28 = arith.mulf %26, %27 : vector<256x128xf32>
    %c0_20 = arith.constant 0 : index
    %c0_21 = arith.constant 0 : index
    %29 = vector.load %arg10[%c0_20, %c0_21] : memref<1x128xf32, #tpu.memory_space<vmem>>, vector<1x128xf32>
    %30 = vector.broadcast %29 : vector<1x128xf32> to vector<256x128xf32>
    %31 = arith.addf %28, %30 : vector<256x128xf32>
    %32 = arith.addf %22, %31 : vector<256x128xf32>
    %cst_22 = arith.constant 0.000000e+00 : f32
    %33 = vector.broadcast %cst_22 : f32 to vector<256x128xf32>
    %34 = arith.maximumf %32, %33 : vector<256x128xf32>
    %c0_23 = arith.constant 0 : index
    %c0_24 = arith.constant 0 : index
    %c0_25 = arith.constant 0 : index
    %35 = vector.load %arg11[%c0_23, %c0_24, %c0_25] : memref<1x256x128xf32, #tpu.memory_space<vmem>>, vector<1x256x128xf32>
    %36 = vector.shape_cast %35 : vector<1x256x128xf32> to vector<256x128xf32>
    %37 = vector.shape_cast %34 : vector<256x128xf32> to vector<1x256x128xf32>
    tpu.vector_store %arg11[%c0_23, %c0_24, %c0_25], %37 {strides = array<i32>} : memref<1x256x128xf32, #tpu.memory_space<vmem>>, vector<1x256x128xf32>,
    return
  }
  func.func @transform_0(%arg0: i32, %arg1: i32) -> (i32, i32, i32) {
    %c0_i32 = arith.constant 0 : i32
    %c0_i32_0 = arith.constant 0 : i32
    return %arg0, %arg1, %c0_i32 : i32, i32, i32
  }
  func.func @transform_1(%arg0: i32, %arg1: i32) -> (i32, i32, i32) {
    %c0_i32 = arith.constant 0 : i32
    %c0_i32_0 = arith.constant 0 : i32
    return %arg0, %arg1, %c0_i32 : i32, i32, i32
  }
  func.func @transform_2(%arg0: i32, %arg1: i32) -> (i32, i32, i32) {
    %c0_i32 = arith.constant 0 : i32
    %c0_i32_0 = arith.constant 0 : i32
    %c0_i32_1 = arith.constant 0 : i32
    return %arg0, %c0_i32, %c0_i32_0 : i32, i32, i32
  }
  func.func @transform_3(%arg0: i32, %arg1: i32) -> (i32, i32) {
    %c0_i32 = arith.constant 0 : i32
    %c0_i32_0 = arith.constant 0 : i32
    %c0_i32_1 = arith.constant 0 : i32
    return %c0_i32, %c0_i32_0 : i32, i32
  }
  func.func @transform_4(%arg0: i32, %arg1: i32) -> (i32, i32) {
    %c0_i32 = arith.constant 0 : i32
    %c0_i32_0 = arith.constant 0 : i32
    %c0_i32_1 = arith.constant 0 : i32
    return %c0_i32, %c0_i32_0 : i32, i32
  }
  func.func @transform_5(%arg0: i32, %arg1: i32) -> (i32, i32) {
    %c0_i32 = arith.constant 0 : i32
    %c0_i32_0 = arith.constant 0 : i32
    %c0_i32_1 = arith.constant 0 : i32
    return %c0_i32, %c0_i32_0 : i32, i32
  }
  func.func @transform_6(%arg0: i32, %arg1: i32) -> (i32, i32) {
    %c0_i32 = arith.constant 0 : i32
    %c0_i32_0 = arith.constant 0 : i32
    %c0_i32_1 = arith.constant 0 : i32
    return %c0_i32, %c0_i32_0 : i32, i32
  }
  func.func @transform_7(%arg0: i32, %arg1: i32) -> (i32, i32) {
    %c0_i32 = arith.constant 0 : i32
    %c0_i32_0 = arith.constant 0 : i32
    %c0_i32_1 = arith.constant 0 : i32
    return %c0_i32, %c0_i32_0 : i32, i32
  }
  func.func @transform_8(%arg0: i32, %arg1: i32) -> (i32, i32) {
    %c0_i32 = arith.constant 0 : i32
    %c0_i32_0 = arith.constant 0 : i32
    %c0_i32_1 = arith.constant 0 : i32
    return %c0_i32, %c0_i32_0 : i32, i32
  }
  func.func @transform_9(%arg0: i32, %arg1: i32) -> (i32, i32, i32) {
    %c0_i32 = arith.constant 0 : i32
    %c0_i32_0 = arith.constant 0 : i32
    return %arg0, %arg1, %c0_i32 : i32, i32, i32
  }
}

</mosaic_0001>

<llo_original>
// kernel: forward.4
$region0: #{forward.4}
  #allocation0 [shape = 'u32[]', space=smem, size = 0x4, offset = 0x4, fixed_abs, tag = 'smem constant byte address 0x4 - core index']
  #allocation1 [shape = 'u32[72,128]{1,0:T(1,128)}', space=vmem, size = 0x9000, scoped, tag = 'internal scratch']
  %s0 = inlined_call_operand.vmem [shape: bf16[2,256,128], index: 0, kind: input, shape index: {}]
  %s1 = inlined_call_operand.vmem [shape: f32[1,128], index: 1, kind: input, shape index: {}]
  %s2 = inlined_call_operand.vmem [shape: f32[1,128], index: 2, kind: input, shape index: {}]
  %s3 = inlined_call_operand.vmem [shape: f32[2,128,128], index: 3, kind: output, shape index: {0}]
  %s4 = inlined_call_operand.vmem [shape: f32[2,1,128], index: 4, kind: output, shape index: {1}]
  %5 = xla_tuple %s3, %s4
  %s6 = sld [smem:[#allocation0]]
  $region57: #{forward.4} parent=0
    _
  %s8 = ssub.s32 1, %s6
  %s9 = scalar_select 0, %s8, %s6
  loop: start=0, step=1, limit=4
  $region2: #{forward.4} parent=0 // loop_pre_header
    _
  $region3: #{forward.4} parent=0 // loop_header
    %s11 = sphi 0, %s15
    %p12 = scmp.ge.s32.totalorder %s11, 4
    %s18 = sphi 0, %s30
    %s19 = sphi 0, %s26
    %s20 = sphi 0, %s18
    %s21 = sphi 0, %s19
    %s22 = sphi 0, %s20
    %s23 = sphi 0, %s21
    %s35 = sphi 0, %s37
    %s38 = sphi 0, %s35
    %s39 = sphi 0, %s38
    %s55 = sphi 0, %s39
    %s59 = sphi 0, %s59
    %s61 = sphi 0, %s59
    %s62 = sphi 0, %s61
    %s76 = sphi 0, %s62
    %s80 = sphi 0, %s80
    %s82 = sphi 0, %s80
    %s83 = sphi 0, %s82
    %s97 = sphi 0, %s83
    %s103 = sphi 0, %s105
    %s106 = sphi 0, %s103
    %s107 = sphi 0, %s106
    %s123 = sphi 0, %s107
    %s129 = sphi 0, %s131
    %s132 = sphi 0, %s129
    %s133 = sphi 0, %s132
    %s149 = sphi 0, %s133
  $region4: #{forward.4} parent=0 // loop_header_branch
    %14 = sbr.rel (%p12) target = $region8
  $region5: #{forward.4} parent=0 // loop_body
    %s16 = ssub.s32 %s11, 1
    %s17 = ssub.s32 %s11, 2
    %s24 = sadd.s32 1, %s19
    %p25 = scmp.ge.s32.totalorder %s24, 1
    %s26 = scalar_select %p25, 0, %s24
    %s27 = sadd.s32 1, %s18
    %s28 = scalar_select %p25, %s27, %s18
    %p29 = scmp.ge.s32.totalorder %s28, 2
    %s30 = scalar_select %p29, 0, %s28
    %s31 = ssub.s32 %s18, %s30
    %s32 = ssub.s32 %s19, %s26
    %s33 = sor.u32 %s31, %s32
    %p34 = scmp.eq.s32.totalorder %s33, 0
    %s36 = sadd.s32 %s35, 1
    %s37 = scalar_select %p34, %s35, %s36
    %p40 = pneg %p34
    %p41 = scmp.eq.s32.totalorder %s11, 1
    %p42 = por %p40, %p41
    %p43 = scmp.ne.s32.totalorder %s35, %s38
    %p44 = scmp.eq.s32.totalorder %s11, 0
    %p45 = por %p43, %p44
    %p46 = scmp.ne.s32.totalorder %s35, %s38
    %p47 = scmp.eq.s32.totalorder %s16, 1
    %p48 = por %p46, %p47
    %p49 = scmp.ne.s32.totalorder %s38, %s39
    %p50 = scmp.eq.s32.totalorder %s16, 0
    %p51 = por %p49, %p50
    %p52 = scmp.ne.s32.totalorder %s38, %s39
    %p53 = scmp.eq.s32.totalorder %s17, 1
    %p54 = por %p52, %p53
    %p56 = scmp.ne.s32.totalorder %s39, %s55
    %p57 = scmp.eq.s32.totalorder %s17, 0
    %p58 = por %p56, %p57
    %s60 = sadd.s32 %s59, 1
    %p63 = scmp.eq.s32.totalorder %s11, 1
    %p64 = scmp.ne.s32.totalorder %s59, %s61
    %p65 = scmp.eq.s32.totalorder %s11, 0
    %p66 = por %p64, %p65
    %p67 = scmp.ne.s32.totalorder %s59, %s61
    %p68 = scmp.eq.s32.totalorder %s16, 1
    %p69 = por %p67, %p68
    %p70 = scmp.ne.s32.totalorder %s61, %s62
    %p71 = scmp.eq.s32.totalorder %s16, 0
    %p72 = por %p70, %p71
    %p73 = scmp.ne.s32.totalorder %s61, %s62
    %p74 = scmp.eq.s32.totalorder %s17, 1
    %p75 = por %p73, %p74
    %p77 = scmp.ne.s32.totalorder %s62, %s76
    %p78 = scmp.eq.s32.totalorder %s17, 0
    %p79 = por %p77, %p78
    %s81 = sadd.s32 %s80, 1
    %p84 = scmp.eq.s32.totalorder %s11, 1
    %p85 = scmp.ne.s32.totalorder %s80, %s82
    %p86 = scmp.eq.s32.totalorder %s11, 0
    %p87 = por %p85, %p86
    %p88 = scmp.ne.s32.totalorder %s80, %s82
    %p89 = scmp.eq.s32.totalorder %s16, 1
    %p90 = por %p88, %p89
    %p91 = scmp.ne.s32.totalorder %s82, %s83
    %p92 = scmp.eq.s32.totalorder %s16, 0
    %p93 = por %p91, %p92
    %p94 = scmp.ne.s32.totalorder %s82, %s83
    %p95 = scmp.eq.s32.totalorder %s17, 1
    %p96 = por %p94, %p95
    %p98 = scmp.ne.s32.totalorder %s83, %s97
    %p99 = scmp.eq.s32.totalorder %s17, 0
    %p100 = por %p98, %p99
    %s101 = ssub.s32 %s18, %s30
    %p102 = scmp.eq.s32.totalorder %s101, 0
    %s104 = sadd.s32 %s103, 1
    %s105 = scalar_select %p102, %s103, %s104
    %p108 = pneg %p102
    %p109 = scmp.eq.s32.totalorder %s11, 1
    %p110 = por %p108, %p109
    %p111 = scmp.ne.s32.totalorder %s103, %s106
    %p112 = scmp.eq.s32.totalorder %s11, 0
    %p113 = por %p111, %p112
    %p114 = scmp.ne.s32.totalorder %s103, %s106
    %p115 = scmp.eq.s32.totalorder %s16, 1
    %p116 = por %p114, %p115
    %p117 = scmp.ne.s32.totalorder %s106, %s107
    %p118 = scmp.eq.s32.totalorder %s16, 0
    %p119 = por %p117, %p118
    %p120 = scmp.ne.s32.totalorder %s106, %s107
    %p121 = scmp.eq.s32.totalorder %s17, 1
    %p122 = por %p120, %p121
    %p124 = scmp.ne.s32.totalorder %s107, %s123
    %p125 = scmp.eq.s32.totalorder %s17, 0
    %p126 = por %p124, %p125
    %s127 = ssub.s32 %s18, %s30
    %p128 = scmp.eq.s32.totalorder %s127, 0
    %s130 = sadd.s32 %s129, 1
    %s131 = scalar_select %p128, %s129, %s130
    %p134 = pneg %p128
    %p135 = scmp.eq.s32.totalorder %s11, 1
    %p136 = por %p134, %p135
    %p137 = scmp.ne.s32.totalorder %s129, %s132
    %p138 = scmp.eq.s32.totalorder %s11, 0
    %p139 = por %p137, %p138
    %p140 = scmp.ne.s32.totalorder %s129, %s132
    %p141 = scmp.eq.s32.totalorder %s16, 1
    %p142 = por %p140, %p141
    %p143 = scmp.ne.s32.totalorder %s132, %s133
    %p144 = scmp.eq.s32.totalorder %s16, 0
    %p145 = por %p143, %p144
    %p146 = scmp.ne.s32.totalorder %s132, %s133
    %p147 = scmp.eq.s32.totalorder %s17, 1
    %p148 = por %p146, %p147
    %p150 = scmp.ne.s32.totalorder %s133, %s149
    %p151 = scmp.eq.s32.totalorder %s17, 0
    %p152 = por %p150, %p151
    %p153 = scmp.le.s32.totalorder 1, %s11
    %p154 = scmp.lt.s32.totalorder %s11, 3
    %p155 = pnand %p153, %p154
    %p156 = pneg %p155
    // Predicated region
    $region9: #{forward.4} parent=5 // pred_check
      _
    $region10: #{forward.4} parent=5 // pred_check_branch
      %158 = sbr.rel (%p155) target = $region12
    $region11: #{forward.4} parent=5 // pred_region
      %s159 = ssub.s32 %s11, 1
      // Predicated region
      $region13: #{forward.4} parent=11 // pred_check
        %p160 = pneg %p72
      $region14: #{forward.4} parent=11 // pred_check_branch
        %162 = sbr.rel (%p160) target = $region16
      $region15: #{forward.4} parent=11 // pred_region
        _
      $region16: #{forward.4} parent=11 // pred_fallthru
        _
      // Predicated region
      $region17: #{forward.4} parent=11 // pred_check
        %p163 = pneg %p93
      $region18: #{forward.4} parent=11 // pred_check_branch
        %165 = sbr.rel (%p163) target = $region20
      $region19: #{forward.4} parent=11 // pred_region
        _
      $region20: #{forward.4} parent=11 // pred_fallthru
        _
    $region12: #{forward.4} parent=5 // pred_fallthru
      _
    %p166 = scmp.lt.s32.totalorder %s11, 2
    // Predicated region
    $region21: #{forward.4} parent=5 // pred_check
      %p167 = pneg %p166
    $region22: #{forward.4} parent=5 // pred_check_branch
      %169 = sbr.rel (%p167) target = $region24
    $region23: #{forward.4} parent=5 // pred_region
      // Predicated region
      $region25: #{forward.4} parent=23 // pred_check
        %p170 = pneg %p45
      $region26: #{forward.4} parent=23 // pred_check_branch
        %172 = sbr.rel (%p170) target = $region28
      $region27: #{forward.4} parent=23 // pred_region
        %s173 = smul.u32 32, %s19
        %p174 = scmp.lt.s32.totalorder %s18, 1
        %s175 = scalar_select %p174, %s18, 1
        %p176 = scmp.lt.s32.totalorder %s173, 31
        %s177 = scalar_select %p176, %s173, 31
        %s178 = smul.addr %s175, 32
        %s179 = sadd.s32 %s177, %s178
        %s180 = smul.addr %s179, 4
        %s181 = scalar_lea.vmem %s0, %s180
        %s182 = smul.u32 32, %s19
      $region28: #{forward.4} parent=23 // pred_fallthru
        _
    $region24: #{forward.4} parent=5 // pred_fallthru
      _
    %p183 = scmp.le.s32.totalorder 1, %s11
    %p184 = scmp.lt.s32.totalorder %s11, 3
    %p185 = pnand %p183, %p184
    %p186 = pneg %p185
    // Predicated region
    $region29: #{forward.4} parent=5 // pred_check
      _
    $region30: #{forward.4} parent=5 // pred_check_branch
      %188 = sbr.rel (%p185) target = $region32
    $region31: #{forward.4} parent=5 // pred_region
      %s189 = ssub.s32 %s11, 1
      %s190 = smul.u32 32, %s21
      %p191 = scmp.lt.s32.totalorder %s20, 1
      %s192 = scalar_select %p191, %s20, 1
      %p193 = scmp.lt.s32.totalorder %s190, 31
      %s194 = scalar_select %p193, %s190, 31
      %s195 = smul.addr %s192, 32
      %s196 = sadd.s32 %s194, %s195
      %s197 = smul.addr %s196, 4
      %s198 = scalar_lea.vmem %s0, %s197
      %p199 = pneg %p51
      %p200 = pneg %p48
      %p201 = pneg %p72
      %p202 = pneg %p69
      %p203 = pneg %p93
      %p204 = pneg %p90
      %p205 = pneg %p119
      %p206 = pneg %p116
      %p207 = scmp.lt.s32.totalorder %s20, 1
      %s208 = scalar_select %p207, %s20, 1
      %s209 = smul.addr %s208, 16
      %s210 = smul.addr %s209, 8
      %s211 = scalar_lea.vmem %s3, %s210
      %p212 = pneg %p145
      %p213 = pneg %p142
      %p214 = scmp.lt.s32.totalorder %s20, 1
      %s215 = scalar_select %p214, %s20, 1
      %s216 = scalar_lea.vmem %s4, %s215
      %s217 = smul.u32 32, %s21
      %p218 = scmp.lt.s32.totalorder %s20, 1
      %s219 = scalar_select %p218, %s20, 1
      %p220 = scmp.lt.s32.totalorder %s217, 31
      %s221 = scalar_select %p220, %s217, 31
      %s222 = smul.addr %s219, 32
      %s223 = sadd.s32 %s221, %s222
      %s224 = smul.addr %s223, 4
      %s225 = scalar_lea.vmem %s0, %s224
      %s226 = smul.u32 32, %s21
      %p227 = scmp.lt.s32.totalorder %s20, 1
      %s228 = scalar_select %p227, %s20, 1
      %s229 = smul.addr %s228, 16
      %s230 = smul.addr %s229, 8
      %s231 = scalar_lea.vmem %s3, %s230
      %p232 = scmp.lt.s32.totalorder %s20, 1
      %s233 = scalar_select %p232, %s20, 1
      %s234 = scalar_lea.vmem %s4, %s233
      %p235 = scmp.eq.s32.totalorder %s21, 0
      // Predicated region
      $region33: #{forward.4} parent=31 // pred_check
        %p236 = pneg %p235
      $region34: #{forward.4} parent=31 // pred_check_branch
        %238 = sbr.rel (%p236) target = $region36
      $region35: #{forward.4} parent=31 // pred_region
        %239 = vst [vmem:[%s231] sm:$0xff] 0.0
        %240 = vst [vmem:[%s231 + $0x8] sm:$0xff] 0.0
        %241 = vst [vmem:[%s231 + $0x10] sm:$0xff] 0.0
        %242 = vst [vmem:[%s231 + $0x18] sm:$0xff] 0.0
        %243 = vst [vmem:[%s231 + $0x20] sm:$0xff] 0.0
        %244 = vst [vmem:[%s231 + $0x28] sm:$0xff] 0.0
        %245 = vst [vmem:[%s231 + $0x30] sm:$0xff] 0.0
        %246 = vst [vmem:[%s231 + $0x38] sm:$0xff] 0.0
        %247 = vst [vmem:[%s231 + $0x40] sm:$0xff] 0.0
        %248 = vst [vmem:[%s231 + $0x48] sm:$0xff] 0.0
        %249 = vst [vmem:[%s231 + $0x50] sm:$0xff] 0.0
        %250 = vst [vmem:[%s231 + $0x58] sm:$0xff] 0.0
        %251 = vst [vmem:[%s231 + $0x60] sm:$0xff] 0.0
        %252 = vst [vmem:[%s231 + $0x68] sm:$0xff] 0.0
        %253 = vst [vmem:[%s231 + $0x70] sm:$0xff] 0.0
        %254 = vst [vmem:[%s231 + $0x78] sm:$0xff] 0.0
        %255 = vst [vmem:[%s234] sm:$0x1] 0.0
      $region36: #{forward.4} parent=31 // pred_fallthru
        _
      %v256 = vld [vmem:[%s225] sm:$0xf]
      %v257 = vld [vmem:[%s225 + $0x4] sm:$0xf]
      %v258 = vld [vmem:[%s225 + $0x8] sm:$0xf]
      %v259 = vld [vmem:[%s225 + $0xc] sm:$0xf]
      %v260 = vld [vmem:[%s225 + $0x10] sm:$0xf]
      %v261 = vld [vmem:[%s225 + $0x14] sm:$0xf]
      %v262 = vld [vmem:[%s225 + $0x18] sm:$0xf]
      %v263 = vld [vmem:[%s225 + $0x1c] sm:$0xf]
      %v264 = vld [vmem:[%s225 + $0x20] sm:$0xf]
      %v265 = vld [vmem:[%s225 + $0x24] sm:$0xf]
      %v266 = vld [vmem:[%s225 + $0x28] sm:$0xf]
      %v267 = vld [vmem:[%s225 + $0x2c] sm:$0xf]
      %v268 = vld [vmem:[%s225 + $0x30] sm:$0xf]
      %v269 = vld [vmem:[%s225 + $0x34] sm:$0xf]
      %v270 = vld [vmem:[%s225 + $0x38] sm:$0xf]
      %v271 = vld [vmem:[%s225 + $0x3c] sm:$0xf]
      %v272 = vld [vmem:[%s225 + $0x40] sm:$0xf]
      %v273 = vld [vmem:[%s225 + $0x44] sm:$0xf]
      %v274 = vld [vmem:[%s225 + $0x48] sm:$0xf]
      %v275 = vld [vmem:[%s225 + $0x4c] sm:$0xf]
      %v276 = vld [vmem:[%s225 + $0x50] sm:$0xf]
      %v277 = vld [vmem:[%s225 + $0x54] sm:$0xf]
      %v278 = vld [vmem:[%s225 + $0x58] sm:$0xf]
      %v279 = vld [vmem:[%s225 + $0x5c] sm:$0xf]
      %v280 = vld [vmem:[%s225 + $0x60] sm:$0xf]
      %v281 = vld [vmem:[%s225 + $0x64] sm:$0xf]
      %v282 = vld [vmem:[%s225 + $0x68] sm:$0xf]
      %v283 = vld [vmem:[%s225 + $0x6c] sm:$0xf]
      %v284 = vld [vmem:[%s225 + $0x70] sm:$0xf]
      %v285 = vld [vmem:[%s225 + $0x74] sm:$0xf]
      %v286 = vld [vmem:[%s225 + $0x78] sm:$0xf]
      %v287 = vld [vmem:[%s225 + $0x7c] sm:$0xf]
      %v288 = vld [vmem:[%s1] sm:$0x1]
      %v289 = vunpack.c.l.bf16 %v256
      %v290 = vunpack.c.l.bf16 %v257
      %v291 = vunpack.c.l.bf16 %v258
      %v292 = vunpack.c.l.bf16 %v259
      %v293 = vunpack.c.l.bf16 %v260
      %v294 = vunpack.c.l.bf16 %v261
      %v295 = vunpack.c.l.bf16 %v262
      %v296 = vunpack.c.l.bf16 %v263
      %v297 = vunpack.c.l.bf16 %v264
      %v298 = vunpack.c.l.bf16 %v265
      %v299 = vunpack.c.l.bf16 %v266
      %v300 = vunpack.c.l.bf16 %v267
      %v301 = vunpack.c.l.bf16 %v268
      %v302 = vunpack.c.l.bf16 %v269
      %v303 = vunpack.c.l.bf16 %v270
      %v304 = vunpack.c.l.bf16 %v271
      %v305 = vunpack.c.l.bf16 %v272
      %v306 = vunpack.c.l.bf16 %v273
      %v307 = vunpack.c.l.bf16 %v274
      %v308 = vunpack.c.l.bf16 %v275
      %v309 = vunpack.c.l.bf16 %v276
      %v310 = vunpack.c.l.bf16 %v277
      %v311 = vunpack.c.l.bf16 %v278
      %v312 = vunpack.c.l.bf16 %v279
      %v313 = vunpack.c.l.bf16 %v280
      %v314 = vunpack.c.l.bf16 %v281
      %v315 = vunpack.c.l.bf16 %v282
      %v316 = vunpack.c.l.bf16 %v283
      %v317 = vunpack.c.l.bf16 %v284
      %v318 = vunpack.c.l.bf16 %v285
      %v319 = vunpack.c.l.bf16 %v286
      %v320 = vunpack.c.l.bf16 %v287
      %v322 = vperm.slane %v288, 0
      %v324 = vmul.f32 %v289, %v322
      %v325 = vmul.f32 %v290, %v322
      %v326 = vmul.f32 %v291, %v322
      %v327 = vmul.f32 %v292, %v322
      %v328 = vmul.f32 %v293, %v322
      %v329 = vmul.f32 %v294, %v322
      %v330 = vmul.f32 %v295, %v322
      %v331 = vmul.f32 %v296, %v322
      %v332 = vmul.f32 %v297, %v322
      %v333 = vmul.f32 %v298, %v322
      %v334 = vmul.f32 %v299, %v322
      %v335 = vmul.f32 %v300, %v322
      %v336 = vmul.f32 %v301, %v322
      %v337 = vmul.f32 %v302, %v322
      %v338 = vmul.f32 %v303, %v322
      %v339 = vmul.f32 %v304, %v322
      %v340 = vmul.f32 %v305, %v322
      %v341 = vmul.f32 %v306, %v322
      %v342 = vmul.f32 %v307, %v322
      %v343 = vmul.f32 %v308, %v322
      %v344 = vmul.f32 %v309, %v322
      %v345 = vmul.f32 %v310, %v322
      %v346 = vmul.f32 %v311, %v322
      %v347 = vmul.f32 %v312, %v322
      %v348 = vmul.f32 %v313, %v322
      %v349 = vmul.f32 %v314, %v322
      %v350 = vmul.f32 %v315, %v322
      %v351 = vmul.f32 %v316, %v322
      %v352 = vmul.f32 %v317, %v322
      %v353 = vmul.f32 %v318, %v322
      %v354 = vmul.f32 %v319, %v322
      %v355 = vmul.f32 %v320, %v322
      %v356 = vld [vmem:[%s2] sm:$0x1]
      %v358 = vperm.slane %v356, 0
      %v360 = vadd.f32 %v324, %v358
      %v361 = vadd.f32 %v325, %v358
      %v362 = vadd.f32 %v326, %v358
      %v363 = vadd.f32 %v327, %v358
      %v364 = vadd.f32 %v328, %v358
      %v365 = vadd.f32 %v329, %v358
      %v366 = vadd.f32 %v330, %v358
      %v367 = vadd.f32 %v331, %v358
      %v368 = vadd.f32 %v332, %v358
      %v369 = vadd.f32 %v333, %v358
      %v370 = vadd.f32 %v334, %v358
      %v371 = vadd.f32 %v335, %v358
      %v372 = vadd.f32 %v336, %v358
      %v373 = vadd.f32 %v337, %v358
      %v374 = vadd.f32 %v338, %v358
      %v375 = vadd.f32 %v339, %v358
      %v376 = vadd.f32 %v340, %v358
      %v377 = vadd.f32 %v341, %v358
      %v378 = vadd.f32 %v342, %v358
      %v379 = vadd.f32 %v343, %v358
      %v380 = vadd.f32 %v344, %v358
      %v381 = vadd.f32 %v345, %v358
      %v382 = vadd.f32 %v346, %v358
      %v383 = vadd.f32 %v347, %v358
      %v384 = vadd.f32 %v348, %v358
      %v385 = vadd.f32 %v349, %v358
      %v386 = vadd.f32 %v350, %v358
      %v387 = vadd.f32 %v351, %v358
      %v388 = vadd.f32 %v352, %v358
      %v389 = vadd.f32 %v353, %v358
      %v390 = vadd.f32 %v354, %v358
      %v391 = vadd.f32 %v355, %v358
      %v392 = vmax.f32 %v360, 0.0
      %v393 = vmax.f32 %v361, 0.0
      %v394 = vmax.f32 %v362, 0.0
      %v395 = vmax.f32 %v363, 0.0
      %v396 = vmax.f32 %v364, 0.0
      %v397 = vmax.f32 %v365, 0.0
      %v398 = vmax.f32 %v366, 0.0
      %v399 = vmax.f32 %v367, 0.0
      %v400 = vmax.f32 %v368, 0.0
      %v401 = vmax.f32 %v369, 0.0
      %v402 = vmax.f32 %v370, 0.0
      %v403 = vmax.f32 %v371, 0.0
      %v404 = vmax.f32 %v372, 0.0
      %v405 = vmax.f32 %v373, 0.0
      %v406 = vmax.f32 %v374, 0.0
      %v407 = vmax.f32 %v375, 0.0
      %v408 = vmax.f32 %v376, 0.0
      %v409 = vmax.f32 %v377, 0.0
      %v410 = vmax.f32 %v378, 0.0
      %v411 = vmax.f32 %v379, 0.0
      %v412 = vmax.f32 %v380, 0.0
      %v413 = vmax.f32 %v381, 0.0
      %v414 = vmax.f32 %v382, 0.0
      %v415 = vmax.f32 %v383, 0.0
      %v416 = vmax.f32 %v384, 0.0
      %v417 = vmax.f32 %v385, 0.0
      %v418 = vmax.f32 %v386, 0.0
      %v419 = vmax.f32 %v387, 0.0
      %v420 = vmax.f32 %v388, 0.0
      %v421 = vmax.f32 %v389, 0.0
      %v422 = vmax.f32 %v390, 0.0
      %v423 = vmax.f32 %v391, 0.0
      %v424 = vpack.c.bf16 %v393, %v392
      %v425 = vpack.c.bf16 %v395, %v394
      %v426 = vpack.c.bf16 %v397, %v396
      %v427 = vpack.c.bf16 %v399, %v398
      %v428 = vpack.c.bf16 %v401, %v400
      %v429 = vpack.c.bf16 %v403, %v402
      %v430 = vpack.c.bf16 %v405, %v404
      %v431 = vpack.c.bf16 %v407, %v406
      %v432 = vpack.c.bf16 %v409, %v408
      %v433 = vpack.c.bf16 %v411, %v410
      %v434 = vpack.c.bf16 %v413, %v412
      %v435 = vpack.c.bf16 %v415, %v414
      %v436 = vpack.c.bf16 %v417, %v416
      %v437 = vpack.c.bf16 %v419, %v418
      %v438 = vpack.c.bf16 %v421, %v420
      %v439 = vpack.c.bf16 %v423, %v422
      %440 = vxpose.xlu0.c.b16.start [1/8] %v424, 128
      %441 = vxpose.xlu0.c.b16.cont [2/8] %v425, 128
      %442 = vxpose.xlu0.c.b16.cont [3/8] %v426, 128
      %443 = vxpose.xlu0.c.b16.cont [4/8] %v427, 128
      %444 = vxpose.xlu0.c.b16.cont [5/8] %v428, 128
      %445 = vxpose.xlu0.c.b16.cont [6/8] %v429, 128
      %446 = vxpose.xlu0.c.b16.cont [7/8] %v430, 128
      %447 = vxpose.xlu0.c.b16.end [8/8] %v431, 128
      %v448 = vpop.trf.xlu0
      %v449 = vpop.trf.xlu0
      %v450 = vpop.trf.xlu0
      %v451 = vpop.trf.xlu0
      %v452 = vpop.trf.xlu0
      %v453 = vpop.trf.xlu0
      %v454 = vpop.trf.xlu0
      %v455 = vpop.trf.xlu0
      %456 = vxpose.xlu0.c.b16.start [1/8] %v432, 128
      %457 = vxpose.xlu0.c.b16.cont [2/8] %v433, 128
      %458 = vxpose.xlu0.c.b16.cont [3/8] %v434, 128
      %459 = vxpose.xlu0.c.b16.cont [4/8] %v435, 128
      %460 = vxpose.xlu0.c.b16.cont [5/8] %v436, 128
      %461 = vxpose.xlu0.c.b16.cont [6/8] %v437, 128
      %462 = vxpose.xlu0.c.b16.cont [7/8] %v438, 128
      %463 = vxpose.xlu0.c.b16.end [8/8] %v439, 128
      %v464 = vpop.trf.xlu0
      %v465 = vpop.trf.xlu0
      %v466 = vpop.trf.xlu0
      %v467 = vpop.trf.xlu0
      %v468 = vpop.trf.xlu0
      %v469 = vpop.trf.xlu0
      %v470 = vpop.trf.xlu0
      %v471 = vpop.trf.xlu0
      %472 = vmatpush.bf16.msra.mxu0 %v431
      %473 = vmatpush.bf16.msra.mxu0 %v430
      %474 = vmatpush.bf16.msra.mxu0 %v429
      %475 = vmatpush.bf16.msra.mxu0 %v428
      %476 = vmatpush.bf16.msra.mxu0 %v427
      %477 = vmatpush.bf16.msra.mxu0 %v426
      %478 = vmatpush.bf16.msra.mxu0 %v425
      %479 = vmatpush.bf16.msra.mxu0 %v424
      %480 = vmatmul.bf16.gmra.mxu0 %v448
      %v481 = vpop.f32.mrf.mxu0
      %v482 = vadd.f32 0.0, %v481
      %v483 = vpop.f32.mrf.mxu0
      %v484 = vadd.f32 0.0, %v483
      %485 = vmatmul.bf16.gmra.mxu0 %v449
      %v486 = vpop.f32.mrf.mxu0
      %v487 = vadd.f32 0.0, %v486
      %v488 = vpop.f32.mrf.mxu0
      %v489 = vadd.f32 0.0, %v488
      %490 = vmatmul.bf16.gmra.mxu0 %v450
      %v491 = vpop.f32.mrf.mxu0
      %v492 = vadd.f32 0.0, %v491
      %v493 = vpop.f32.mrf.mxu0
      %v494 = vadd.f32 0.0, %v493
      %495 = vmatmul.bf16.gmra.mxu0 %v451
      %v496 = vpop.f32.mrf.mxu0
      %v497 = vadd.f32 0.0, %v496
      %v498 = vpop.f32.mrf.mxu0
      %v499 = vadd.f32 0.0, %v498
      %500 = vmatmul.bf16.gmra.mxu0 %v452
      %v501 = vpop.f32.mrf.mxu0
      %v502 = vadd.f32 0.0, %v501
      %v503 = vpop.f32.mrf.mxu0
      %v504 = vadd.f32 0.0, %v503
      %505 = vmatmul.bf16.gmra.mxu0 %v453
      %v506 = vpop.f32.mrf.mxu0
      %v507 = vadd.f32 0.0, %v506
      %v508 = vpop.f32.mrf.mxu0
      %v509 = vadd.f32 0.0, %v508
      %510 = vmatmul.bf16.gmra.mxu0 %v454
      %v511 = vpop.f32.mrf.mxu0
      %v512 = vadd.f32 0.0, %v511
      %v513 = vpop.f32.mrf.mxu0
      %v514 = vadd.f32 0.0, %v513
      %515 = vmatmul.bf16.gmra.mxu0 %v455
      %v516 = vpop.f32.mrf.mxu0
      %v517 = vadd.f32 0.0, %v516
      %v518 = vpop.f32.mrf.mxu0
      %v519 = vadd.f32 0.0, %v518
      %520 = vdwg.mxu0
      %521 = vmatpush.bf16.msra.mxu0 %v439
      %522 = vmatpush.bf16.msra.mxu0 %v438
      %523 = vmatpush.bf16.msra.mxu0 %v437
      %524 = vmatpush.bf16.msra.mxu0 %v436
      %525 = vmatpush.bf16.msra.mxu0 %v435
      %526 = vmatpush.bf16.msra.mxu0 %v434
      %527 = vmatpush.bf16.msra.mxu0 %v433
      %528 = vmatpush.bf16.msra.mxu0 %v432
      %529 = vmatmul.bf16.gmra.mxu0 %v464
      %v530 = vpop.f32.mrf.mxu0
      %v531 = vadd.f32 %v482, %v530
      %v532 = vpop.f32.mrf.mxu0
      %v533 = vadd.f32 %v484, %v532
      %534 = vmatmul.bf16.gmra.mxu0 %v465
      %v535 = vpop.f32.mrf.mxu0
      %v536 = vadd.f32 %v487, %v535
      %v537 = vpop.f32.mrf.mxu0
      %v538 = vadd.f32 %v489, %v537
      %539 = vmatmul.bf16.gmra.mxu0 %v466
      %v540 = vpop.f32.mrf.mxu0
      %v541 = vadd.f32 %v492, %v540
      %v542 = vpop.f32.mrf.mxu0
      %v543 = vadd.f32 %v494, %v542
      %544 = vmatmul.bf16.gmra.mxu0 %v467
      %v545 = vpop.f32.mrf.mxu0
      %v546 = vadd.f32 %v497, %v545
      %v547 = vpop.f32.mrf.mxu0
      %v548 = vadd.f32 %v499, %v547
      %549 = vmatmul.bf16.gmra.mxu0 %v468
      %v550 = vpop.f32.mrf.mxu0
      %v551 = vadd.f32 %v502, %v550
      %v552 = vpop.f32.mrf.mxu0
      %v553 = vadd.f32 %v504, %v552
      %554 = vmatmul.bf16.gmra.mxu0 %v469
      %v555 = vpop.f32.mrf.mxu0
      %v556 = vadd.f32 %v507, %v555
      %v557 = vpop.f32.mrf.mxu0
      %v558 = vadd.f32 %v509, %v557
      %559 = vmatmul.bf16.gmra.mxu0 %v470
      %v560 = vpop.f32.mrf.mxu0
      %v561 = vadd.f32 %v512, %v560
      %v562 = vpop.f32.mrf.mxu0
      %v563 = vadd.f32 %v514, %v562
      %564 = vmatmul.bf16.gmra.mxu0 %v471
      %v565 = vpop.f32.mrf.mxu0
      %v566 = vadd.f32 %v517, %v565
      %v567 = vpop.f32.mrf.mxu0
      %v568 = vadd.f32 %v519, %v567
      %569 = vdwg.mxu0
      %v570 = vld [vmem:[%s231] sm:$0xff]
      %v571 = vld [vmem:[%s231 + $0x8] sm:$0xff]
      %v572 = vld [vmem:[%s231 + $0x10] sm:$0xff]
      %v573 = vld [vmem:[%s231 + $0x18] sm:$0xff]
      %v574 = vld [vmem:[%s231 + $0x20] sm:$0xff]
      %v575 = vld [vmem:[%s231 + $0x28] sm:$0xff]
      %v576 = vld [vmem:[%s231 + $0x30] sm:$0xff]
      %v577 = vld [vmem:[%s231 + $0x38] sm:$0xff]
      %v578 = vld [vmem:[%s231 + $0x40] sm:$0xff]
      %v579 = vld [vmem:[%s231 + $0x48] sm:$0xff]
      %v580 = vld [vmem:[%s231 + $0x50] sm:$0xff]
      %v581 = vld [vmem:[%s231 + $0x58] sm:$0xff]
      %v582 = vld [vmem:[%s231 + $0x60] sm:$0xff]
      %v583 = vld [vmem:[%s231 + $0x68] sm:$0xff]
      %v584 = vld [vmem:[%s231 + $0x70] sm:$0xff]
      %v585 = vld [vmem:[%s231 + $0x78] sm:$0xff]
      %v586 = vadd.f32 %v570, %v531
      %v587 = vadd.f32 %v571, %v533
      %v588 = vadd.f32 %v572, %v536
      %v589 = vadd.f32 %v573, %v538
      %v590 = vadd.f32 %v574, %v541
      %v591 = vadd.f32 %v575, %v543
      %v592 = vadd.f32 %v576, %v546
      %v593 = vadd.f32 %v577, %v548
      %v594 = vadd.f32 %v578, %v551
      %v595 = vadd.f32 %v579, %v553
      %v596 = vadd.f32 %v580, %v556
      %v597 = vadd.f32 %v581, %v558
      %v598 = vadd.f32 %v582, %v561
      %v599 = vadd.f32 %v583, %v563
      %v600 = vadd.f32 %v584, %v566
      %v601 = vadd.f32 %v585, %v568
      %602 = vst [vmem:[%s231] sm:$0xff] %v586
      %603 = vst [vmem:[%s231 + $0x8] sm:$0xff] %v587
      %604 = vst [vmem:[%s231 + $0x10] sm:$0xff] %v588
      %605 = vst [vmem:[%s231 + $0x18] sm:$0xff] %v589
      %606 = vst [vmem:[%s231 + $0x20] sm:$0xff] %v590
      %607 = vst [vmem:[%s231 + $0x28] sm:$0xff] %v591
      %608 = vst [vmem:[%s231 + $0x30] sm:$0xff] %v592
      %609 = vst [vmem:[%s231 + $0x38] sm:$0xff] %v593
      %610 = vst [vmem:[%s231 + $0x40] sm:$0xff] %v594
      %611 = vst [vmem:[%s231 + $0x48] sm:$0xff] %v595
      %612 = vst [vmem:[%s231 + $0x50] sm:$0xff] %v596
      %613 = vst [vmem:[%s231 + $0x58] sm:$0xff] %v597
      %614 = vst [vmem:[%s231 + $0x60] sm:$0xff] %v598
      %615 = vst [vmem:[%s231 + $0x68] sm:$0xff] %v599
      %616 = vst [vmem:[%s231 + $0x70] sm:$0xff] %v600
      %617 = vst [vmem:[%s231 + $0x78] sm:$0xff] %v601
      %v618 = vld [vmem:[%s234] sm:$0x1]
      %v619 = vadd.f32 %v392, %v393
      %v620 = vadd.f32 %v619, %v394
      %v621 = vadd.f32 %v620, %v395
      %v622 = vadd.f32 %v621, %v396
      %v623 = vadd.f32 %v622, %v397
      %v624 = vadd.f32 %v623, %v398
      %v625 = vadd.f32 %v624, %v399
      %v626 = vadd.f32 %v625, %v400
      %v627 = vadd.f32 %v626, %v401
      %v628 = vadd.f32 %v627, %v402
      %v629 = vadd.f32 %v628, %v403
      %v630 = vadd.f32 %v629, %v404
      %v631 = vadd.f32 %v630, %v405
      %v632 = vadd.f32 %v631, %v406
      %v633 = vadd.f32 %v632, %v407
      %v634 = vadd.f32 %v633, %v408
      %v635 = vadd.f32 %v634, %v409
      %v636 = vadd.f32 %v635, %v410
      %v637 = vadd.f32 %v636, %v411
      %v638 = vadd.f32 %v637, %v412
      %v639 = vadd.f32 %v638, %v413
      %v640 = vadd.f32 %v639, %v414
      %v641 = vadd.f32 %v640, %v415
      %v642 = vadd.f32 %v641, %v416
      %v643 = vadd.f32 %v642, %v417
      %v644 = vadd.f32 %v643, %v418
      %v645 = vadd.f32 %v644, %v419
      %v646 = vadd.f32 %v645, %v420
      %v647 = vadd.f32 %v646, %v421
      %v648 = vadd.f32 %v647, %v422
      %v649 = vadd.f32 %v648, %v423
      %v650 = vrot.slane %v649, 4
      %v651 = vadd.f32 %v649, %v650
      %v652 = vrot.slane %v651, 2
      %v653 = vadd.f32 %v651, %v652
      %v654 = vrot.slane %v653, 1
      %v655 = vadd.f32 %v653, %v654
      %v656 = vadd.f32 %v618, %v655
      %657 = vst [vmem:[%s234] sm:$0x1] %v656
      %p658 = scmp.lt.s32.totalorder %s20, 1
      %s659 = scalar_select %p658, %s20, 1
      %s660 = smul.addr %s659, 16
      %s661 = smul.addr %s660, 8
      %s662 = scalar_lea.vmem %s3, %s661
      %p663 = scmp.lt.s32.totalorder %s20, 1
      %s664 = scalar_select %p663, %s20, 1
      %s665 = scalar_lea.vmem %s4, %s664
      // Predicated region
      $region37: #{forward.4} parent=31 // pred_check
        %p666 = pneg %p116
      $region38: #{forward.4} parent=31 // pred_check_branch
        %668 = sbr.rel (%p666) target = $region40
      $region39: #{forward.4} parent=31 // pred_region
        _
      $region40: #{forward.4} parent=31 // pred_fallthru
        _
      // Predicated region
      $region41: #{forward.4} parent=31 // pred_check
        %p669 = pneg %p142
      $region42: #{forward.4} parent=31 // pred_check_branch
        %671 = sbr.rel (%p669) target = $region44
      $region43: #{forward.4} parent=31 // pred_region
        _
      $region44: #{forward.4} parent=31 // pred_fallthru
        _
    $region32: #{forward.4} parent=5 // pred_fallthru
      _
    %p672 = scmp.le.s32.totalorder 2, %s11
    // Predicated region
    $region45: #{forward.4} parent=5 // pred_check
      %p673 = pneg %p672
    $region46: #{forward.4} parent=5 // pred_check_branch
      %675 = sbr.rel (%p673) target = $region48
    $region47: #{forward.4} parent=5 // pred_region
      %s676 = ssub.s32 %s11, 2
      // Predicated region
      $region49: #{forward.4} parent=47 // pred_check
        %p677 = pneg %p122
      $region50: #{forward.4} parent=47 // pred_check_branch
        %679 = sbr.rel (%p677) target = $region52
      $region51: #{forward.4} parent=47 // pred_region
        %p680 = scmp.lt.s32.totalorder %s22, 1
        %s681 = scalar_select %p680, %s22, 1
        %s682 = smul.addr %s681, 16
        %s683 = smul.addr %s682, 8
        %s684 = scalar_lea.vmem %s3, %s683
      $region52: #{forward.4} parent=47 // pred_fallthru
        _
      // Predicated region
      $region53: #{forward.4} parent=47 // pred_check
        %p685 = pneg %p148
      $region54: #{forward.4} parent=47 // pred_check_branch
        %687 = sbr.rel (%p685) target = $region56
      $region55: #{forward.4} parent=47 // pred_region
        %p688 = scmp.lt.s32.totalorder %s22, 1
        %s689 = scalar_select %p688, %s22, 1
        %s690 = scalar_lea.vmem %s4, %s689
      $region56: #{forward.4} parent=47 // pred_fallthru
        _
    $region48: #{forward.4} parent=5 // pred_fallthru
      _
  $region6: #{forward.4} parent=0 // loop_footer
    %s15 = sadd.s32 1, %s11
  $region7: #{forward.4} parent=0 // loop_footer_branch
    %10 = sbr.rel target = $region3
  $region8: #{forward.4} parent=0 // loop_exit
    _

// kernel: forward.3
$region0: #{forward.3}
  #allocation0 [shape = 'u32[]', space=smem, size = 0x4, offset = 0x4, fixed_abs, tag = 'smem constant byte address 0x4 - core index']
  #allocation1 [shape = 'u32[72,128]{1,0:T(1,128)}', space=vmem, size = 0x9000, scoped, tag = 'internal scratch']
  #allocation2 [shape = 'f32[256,128]{1,0:T(8,128)}', space=vmem, size = 0x20000, scoped, tag = 'scratch operand']
  %s0 = inlined_call_operand.vmem [shape: bf16[2,288,384], index: 0, kind: input, shape index: {}]
  %s1 = inlined_call_operand.vmem [shape: bf16[3,384,128], index: 1, kind: input, shape index: {}]
  %s2 = inlined_call_operand.vmem [shape: bf16[128,128], index: 2, kind: input, shape index: {}]
  %s3 = inlined_call_operand.vmem [shape: bf16[2,256,128], index: 3, kind: output, shape index: {0}]
  %s4 = inlined_call_operand.vmem [shape: bf16[2,256,128], index: 4, kind: output, shape index: {1}]
  %s5 = inlined_call_operand.vmem [shape: f32[2,4,128], index: 5, kind: output, shape index: {2}]
  %6 = xla_tuple %s3, %s4, %s5
  %s7 = sld [smem:[#allocation0]]
  $region61: #{forward.3} parent=0
    _
  %s9 = ssub.s32 1, %s7
  %s10 = scalar_select 0, %s9, %s7
  loop: start=0, step=1, limit=4
  $region2: #{forward.3} parent=0 // loop_pre_header
    _
  $region3: #{forward.3} parent=0 // loop_header
    %s12 = sphi 0, %s16
    %p13 = scmp.ge.s32.totalorder %s12, 4
    %s22 = sphi 0, %s24
    %s25 = sphi 0, %s22
    %s26 = sphi 0, %s25
    %s42 = sphi 0, %s26
    %s46 = sphi 0, %s46
    %s48 = sphi 0, %s46
    %s49 = sphi 0, %s48
    %s63 = sphi 0, %s49
    %s67 = sphi 0, %s67
    %s69 = sphi 0, %s67
    %s70 = sphi 0, %s69
    %s84 = sphi 0, %s70
    %s90 = sphi 0, %s92
    %s93 = sphi 0, %s90
    %s94 = sphi 0, %s93
    %s110 = sphi 0, %s94
    %s116 = sphi 0, %s118
    %s119 = sphi 0, %s116
    %s120 = sphi 0, %s119
    %s136 = sphi 0, %s120
    %s142 = sphi 0, %s144
    %s145 = sphi 0, %s142
    %s146 = sphi 0, %s145
    %s162 = sphi 0, %s146
  $region4: #{forward.3} parent=0 // loop_header_branch
    %15 = sbr.rel (%p13) target = $region8
  $region5: #{forward.3} parent=0 // loop_body
    %s17 = ssub.s32 %s12, 1
    %s18 = ssub.s32 %s12, 2
    %s19 = sadd.s32 %s12, 1
    %s20 = ssub.s32 %s12, %s19
    %p21 = scmp.eq.s32.totalorder %s20, 0
    %s23 = sadd.s32 %s22, 1
    %s24 = scalar_select %p21, %s22, %s23
    %p27 = pneg %p21
    %p28 = scmp.eq.s32.totalorder %s12, 1
    %p29 = por %p27, %p28
    %p30 = scmp.ne.s32.totalorder %s22, %s25
    %p31 = scmp.eq.s32.totalorder %s12, 0
    %p32 = por %p30, %p31
    %p33 = scmp.ne.s32.totalorder %s22, %s25
    %p34 = scmp.eq.s32.totalorder %s17, 1
    %p35 = por %p33, %p34
    %p36 = scmp.ne.s32.totalorder %s25, %s26
    %p37 = scmp.eq.s32.totalorder %s17, 0
    %p38 = por %p36, %p37
    %p39 = scmp.ne.s32.totalorder %s25, %s26
    %p40 = scmp.eq.s32.totalorder %s18, 1
    %p41 = por %p39, %p40
    %p43 = scmp.ne.s32.totalorder %s26, %s42
    %p44 = scmp.eq.s32.totalorder %s18, 0
    %p45 = por %p43, %p44
    %s47 = sadd.s32 %s46, 1
    %p50 = scmp.eq.s32.totalorder %s12, 1
    %p51 = scmp.ne.s32.totalorder %s46, %s48
    %p52 = scmp.eq.s32.totalorder %s12, 0
    %p53 = por %p51, %p52
    %p54 = scmp.ne.s32.totalorder %s46, %s48
    %p55 = scmp.eq.s32.totalorder %s17, 1
    %p56 = por %p54, %p55
    %p57 = scmp.ne.s32.totalorder %s48, %s49
    %p58 = scmp.eq.s32.totalorder %s17, 0
    %p59 = por %p57, %p58
    %p60 = scmp.ne.s32.totalorder %s48, %s49
    %p61 = scmp.eq.s32.totalorder %s18, 1
    %p62 = por %p60, %p61
    %p64 = scmp.ne.s32.totalorder %s49, %s63
    %p65 = scmp.eq.s32.totalorder %s18, 0
    %p66 = por %p64, %p65
    %s68 = sadd.s32 %s67, 1
    %p71 = scmp.eq.s32.totalorder %s12, 1
    %p72 = scmp.ne.s32.totalorder %s67, %s69
    %p73 = scmp.eq.s32.totalorder %s12, 0
    %p74 = por %p72, %p73
    %p75 = scmp.ne.s32.totalorder %s67, %s69
    %p76 = scmp.eq.s32.totalorder %s17, 1
    %p77 = por %p75, %p76
    %p78 = scmp.ne.s32.totalorder %s69, %s70
    %p79 = scmp.eq.s32.totalorder %s17, 0
    %p80 = por %p78, %p79
    %p81 = scmp.ne.s32.totalorder %s69, %s70
    %p82 = scmp.eq.s32.totalorder %s18, 1
    %p83 = por %p81, %p82
    %p85 = scmp.ne.s32.totalorder %s70, %s84
    %p86 = scmp.eq.s32.totalorder %s18, 0
    %p87 = por %p85, %p86
    %s88 = ssub.s32 %s12, %s19
    %p89 = scmp.eq.s32.totalorder %s88, 0
    %s91 = sadd.s32 %s90, 1
    %s92 = scalar_select %p89, %s90, %s91
    %p95 = pneg %p89
    %p96 = scmp.eq.s32.totalorder %s12, 1
    %p97 = por %p95, %p96
    %p98 = scmp.ne.s32.totalorder %s90, %s93
    %p99 = scmp.eq.s32.totalorder %s12, 0
    %p100 = por %p98, %p99
    %p101 = scmp.ne.s32.totalorder %s90, %s93
    %p102 = scmp.eq.s32.totalorder %s17, 1
    %p103 = por %p101, %p102
    %p104 = scmp.ne.s32.totalorder %s93, %s94
    %p105 = scmp.eq.s32.totalorder %s17, 0
    %p106 = por %p104, %p105
    %p107 = scmp.ne.s32.totalorder %s93, %s94
    %p108 = scmp.eq.s32.totalorder %s18, 1
    %p109 = por %p107, %p108
    %p111 = scmp.ne.s32.totalorder %s94, %s110
    %p112 = scmp.eq.s32.totalorder %s18, 0
    %p113 = por %p111, %p112
    %s114 = ssub.s32 %s12, %s19
    %p115 = scmp.eq.s32.totalorder %s114, 0
    %s117 = sadd.s32 %s116, 1
    %s118 = scalar_select %p115, %s116, %s117
    %p121 = pneg %p115
    %p122 = scmp.eq.s32.totalorder %s12, 1
    %p123 = por %p121, %p122
    %p124 = scmp.ne.s32.totalorder %s116, %s119
    %p125 = scmp.eq.s32.totalorder %s12, 0
    %p126 = por %p124, %p125
    %p127 = scmp.ne.s32.totalorder %s116, %s119
    %p128 = scmp.eq.s32.totalorder %s17, 1
    %p129 = por %p127, %p128
    %p130 = scmp.ne.s32.totalorder %s119, %s120
    %p131 = scmp.eq.s32.totalorder %s17, 0
    %p132 = por %p130, %p131
    %p133 = scmp.ne.s32.totalorder %s119, %s120
    %p134 = scmp.eq.s32.totalorder %s18, 1
    %p135 = por %p133, %p134
    %p137 = scmp.ne.s32.totalorder %s120, %s136
    %p138 = scmp.eq.s32.totalorder %s18, 0
    %p139 = por %p137, %p138
    %s140 = ssub.s32 %s12, %s19
    %p141 = scmp.eq.s32.totalorder %s140, 0
    %s143 = sadd.s32 %s142, 1
    %s144 = scalar_select %p141, %s142, %s143
    %p147 = pneg %p141
    %p148 = scmp.eq.s32.totalorder %s12, 1
    %p149 = por %p147, %p148
    %p150 = scmp.ne.s32.totalorder %s142, %s145
    %p151 = scmp.eq.s32.totalorder %s12, 0
    %p152 = por %p150, %p151
    %p153 = scmp.ne.s32.totalorder %s142, %s145
    %p154 = scmp.eq.s32.totalorder %s17, 1
    %p155 = por %p153, %p154
    %p156 = scmp.ne.s32.totalorder %s145, %s146
    %p157 = scmp.eq.s32.totalorder %s17, 0
    %p158 = por %p156, %p157
    %p159 = scmp.ne.s32.totalorder %s145, %s146
    %p160 = scmp.eq.s32.totalorder %s18, 1
    %p161 = por %p159, %p160
    %p163 = scmp.ne.s32.totalorder %s146, %s162
    %p164 = scmp.eq.s32.totalorder %s18, 0
    %p165 = por %p163, %p164
    %p166 = scmp.le.s32.totalorder 1, %s12
    %p167 = scmp.lt.s32.totalorder %s12, 3
    %p168 = pnand %p166, %p167
    %p169 = pneg %p168
    // Predicated region
    $region9: #{forward.3} parent=5 // pred_check
      _
    $region10: #{forward.3} parent=5 // pred_check_branch
      %171 = sbr.rel (%p168) target = $region12
    $region11: #{forward.3} parent=5 // pred_region
      %s172 = ssub.s32 %s12, 1
      // Predicated region
      $region13: #{forward.3} parent=11 // pred_check
        %p173 = pneg %p59
      $region14: #{forward.3} parent=11 // pred_check_branch
        %175 = sbr.rel (%p173) target = $region16
      $region15: #{forward.3} parent=11 // pred_region
        _
      $region16: #{forward.3} parent=11 // pred_fallthru
        _
      // Predicated region
      $region17: #{forward.3} parent=11 // pred_check
        %p176 = pneg %p80
      $region18: #{forward.3} parent=11 // pred_check_branch
        %178 = sbr.rel (%p176) target = $region20
      $region19: #{forward.3} parent=11 // pred_region
        _
      $region20: #{forward.3} parent=11 // pred_fallthru
        _
    $region12: #{forward.3} parent=5 // pred_fallthru
      _
    %p179 = scmp.lt.s32.totalorder %s12, 2
    // Predicated region
    $region21: #{forward.3} parent=5 // pred_check
      %p180 = pneg %p179
    $region22: #{forward.3} parent=5 // pred_check_branch
      %182 = sbr.rel (%p180) target = $region24
    $region23: #{forward.3} parent=5 // pred_region
      // Predicated region
      $region25: #{forward.3} parent=23 // pred_check
        %p183 = pneg %p32
      $region26: #{forward.3} parent=23 // pred_check_branch
        %185 = sbr.rel (%p183) target = $region28
      $region27: #{forward.3} parent=23 // pred_region
        %p186 = scmp.lt.s32.totalorder %s12, 1
        %s187 = scalar_select %p186, %s12, 1
        %s188 = smul.addr %s187, 108
        %s189 = smul.addr %s188, 4
        %s190 = scalar_lea.vmem %s0, %s189
      $region28: #{forward.3} parent=23 // pred_fallthru
        _
    $region24: #{forward.3} parent=5 // pred_fallthru
      _
    %p191 = scmp.le.s32.totalorder 1, %s12
    %p192 = scmp.lt.s32.totalorder %s12, 3
    %p193 = pnand %p191, %p192
    %p194 = pneg %p193
    // Predicated region
    $region29: #{forward.3} parent=5 // pred_check
      _
    $region30: #{forward.3} parent=5 // pred_check_branch
      %196 = sbr.rel (%p193) target = $region32
    $region31: #{forward.3} parent=5 // pred_region
      %s197 = ssub.s32 %s12, 1
      %p198 = scmp.lt.s32.totalorder %s17, 1
      %s199 = scalar_select %p198, %s17, 1
      %s200 = smul.addr %s199, 108
      %s201 = smul.addr %s200, 4
      %s202 = scalar_lea.vmem %s0, %s201
      %p203 = pneg %p38
      %p204 = pneg %p35
      %p205 = pneg %p59
      %p206 = pneg %p56
      %p207 = pneg %p80
      %p208 = pneg %p77
      %p209 = pneg %p106
      %p210 = pneg %p103
      %p211 = scmp.lt.s32.totalorder %s17, 1
      %s212 = scalar_select %p211, %s17, 1
      %s213 = smul.addr %s212, 32
      %s214 = smul.addr %s213, 4
      %s215 = scalar_lea.vmem %s3, %s214
      %p216 = pneg %p132
      %p217 = pneg %p129
      %p218 = scmp.lt.s32.totalorder %s17, 1
      %s219 = scalar_select %p218, %s17, 1
      %s220 = smul.addr %s219, 32
      %s221 = smul.addr %s220, 4
      %s222 = scalar_lea.vmem %s4, %s221
      %p223 = pneg %p158
      %p224 = pneg %p155
      %p225 = scmp.lt.s32.totalorder %s17, 1
      %s226 = scalar_select %p225, %s17, 1
      %s227 = smul.addr %s226, 4
      %s228 = scalar_lea.vmem %s5, %s227
      %p229 = scmp.lt.s32.totalorder %s17, 1
      %s230 = scalar_select %p229, %s17, 1
      %s231 = smul.addr %s230, 108
      %s232 = smul.addr %s231, 4
      %s233 = scalar_lea.vmem %s0, %s232
      %p234 = scmp.lt.s32.totalorder %s17, 1
      %s235 = scalar_select %p234, %s17, 1
      %s236 = smul.addr %s235, 32
      %s237 = smul.addr %s236, 4
      %s238 = scalar_lea.vmem %s3, %s237
      %p239 = scmp.lt.s32.totalorder %s17, 1
      %s240 = scalar_select %p239, %s17, 1
      %s241 = smul.addr %s240, 32
      %s242 = smul.addr %s241, 4
      %s243 = scalar_lea.vmem %s4, %s242
      %p244 = scmp.lt.s32.totalorder %s17, 1
      %s245 = scalar_select %p244, %s17, 1
      %s246 = smul.addr %s245, 4
      %s247 = scalar_lea.vmem %s5, %s246
      %v248 = vld [vmem:[%s233] sm:$0xff]
      %v249 = vld [vmem:[%s233 + $0x8] sm:$0xf]
      %v250 = vld [vmem:[%s233 + $0xc] sm:$0xff]
      %v251 = vld [vmem:[%s233 + $0x14] sm:$0xf]
      %v252 = vld [vmem:[%s233 + $0x18] sm:$0xff]
      %v253 = vld [vmem:[%s233 + $0x20] sm:$0xf]
      %v254 = vld [vmem:[%s233 + $0x24] sm:$0xff]
      %v255 = vld [vmem:[%s233 + $0x2c] sm:$0xf]
      %v256 = vld [vmem:[%s233 + $0x30] sm:$0xff]
      %v257 = vld [vmem:[%s233 + $0x38] sm:$0xf]
      %v258 = vld [vmem:[%s233 + $0x3c] sm:$0xff]
      %v259 = vld [vmem:[%s233 + $0x44] sm:$0xf]
      %v260 = vld [vmem:[%s233 + $0x48] sm:$0xff]
      %v261 = vld [vmem:[%s233 + $0x50] sm:$0xf]
      %v262 = vld [vmem:[%s233 + $0x54] sm:$0xff]
      %v263 = vld [vmem:[%s233 + $0x5c] sm:$0xf]
      %v264 = vld [vmem:[%s233 + $0x60] sm:$0xff]
      %v265 = vld [vmem:[%s233 + $0x68] sm:$0xf]
      %v266 = vld [vmem:[%s233 + $0x6c] sm:$0xff]
      %v267 = vld [vmem:[%s233 + $0x74] sm:$0xf]
      %v268 = vld [vmem:[%s233 + $0x78] sm:$0xff]
      %v269 = vld [vmem:[%s233 + $0x80] sm:$0xf]
      %v270 = vld [vmem:[%s233 + $0x84] sm:$0xff]
      %v271 = vld [vmem:[%s233 + $0x8c] sm:$0xf]
      %v272 = vld [vmem:[%s233 + $0x90] sm:$0xff]
      %v273 = vld [vmem:[%s233 + $0x98] sm:$0xf]
      %v274 = vld [vmem:[%s233 + $0x9c] sm:$0xff]
      %v275 = vld [vmem:[%s233 + $0xa4] sm:$0xf]
      %v276 = vld [vmem:[%s233 + $0xa8] sm:$0xff]
      %v277 = vld [vmem:[%s233 + $0xb0] sm:$0xf]
      %v278 = vld [vmem:[%s233 + $0xb4] sm:$0xff]
      %v279 = vld [vmem:[%s233 + $0xbc] sm:$0xf]
      %v280 = vld [vmem:[%s233 + $0xc0] sm:$0xff]
      %v281 = vld [vmem:[%s233 + $0xc8] sm:$0xf]
      %v282 = vld [vmem:[%s233 + $0xcc] sm:$0xff]
      %v283 = vld [vmem:[%s233 + $0xd4] sm:$0xf]
      %v284 = vld [vmem:[%s233 + $0xd8] sm:$0xff]
      %v285 = vld [vmem:[%s233 + $0xe0] sm:$0xf]
      %v286 = vld [vmem:[%s233 + $0xe4] sm:$0xff]
      %v287 = vld [vmem:[%s233 + $0xec] sm:$0xf]
      %v288 = vld [vmem:[%s233 + $0xf0] sm:$0xff]
      %v289 = vld [vmem:[%s233 + $0xf8] sm:$0xf]
      %v290 = vld [vmem:[%s233 + $0xfc] sm:$0xff]
      %v291 = vld [vmem:[%s233 + $0x104] sm:$0xf]
      %v292 = vld [vmem:[%s233 + $0x108] sm:$0xff]
      %v293 = vld [vmem:[%s233 + $0x110] sm:$0xf]
      %v294 = vld [vmem:[%s233 + $0x114] sm:$0xff]
      %v295 = vld [vmem:[%s233 + $0x11c] sm:$0xf]
      %v296 = vld [vmem:[%s233 + $0x120] sm:$0xff]
      %v297 = vld [vmem:[%s233 + $0x128] sm:$0xf]
      %v298 = vld [vmem:[%s233 + $0x12c] sm:$0xff]
      %v299 = vld [vmem:[%s233 + $0x134] sm:$0xf]
      %v300 = vld [vmem:[%s233 + $0x138] sm:$0xff]
      %v301 = vld [vmem:[%s233 + $0x140] sm:$0xf]
      %v302 = vld [vmem:[%s233 + $0x144] sm:$0xff]
      %v303 = vld [vmem:[%s233 + $0x14c] sm:$0xf]
      %v304 = vld [vmem:[%s233 + $0x150] sm:$0xff]
      %v305 = vld [vmem:[%s233 + $0x158] sm:$0xf]
      %v306 = vld [vmem:[%s233 + $0x15c] sm:$0xff]
      %v307 = vld [vmem:[%s233 + $0x164] sm:$0xf]
      %v308 = vld [vmem:[%s233 + $0x168] sm:$0xff]
      %v309 = vld [vmem:[%s233 + $0x170] sm:$0xf]
      %v310 = vld [vmem:[%s233 + $0x174] sm:$0xff]
      %v311 = vld [vmem:[%s233 + $0x17c] sm:$0xf]
      %v312 = vld [vmem:[%s1] sm:$0xf]
      %v313 = vld [vmem:[%s1 + $0x4] sm:$0xf]
      %v314 = vld [vmem:[%s1 + $0x8] sm:$0xf]
      %v315 = vld [vmem:[%s1 + $0xc] sm:$0xf]
      %v316 = vld [vmem:[%s1 + $0x10] sm:$0xf]
      %v317 = vld [vmem:[%s1 + $0x14] sm:$0xf]
      %v318 = vld [vmem:[%s1 + $0x18] sm:$0xf]
      %v319 = vld [vmem:[%s1 + $0x1c] sm:$0xf]
      %v320 = vld [vmem:[%s1 + $0x20] sm:$0xf]
      %v321 = vld [vmem:[%s1 + $0x24] sm:$0xf]
      %v322 = vld [vmem:[%s1 + $0x28] sm:$0xf]
      %v323 = vld [vmem:[%s1 + $0x2c] sm:$0xf]
      %v324 = vld [vmem:[%s1 + $0x30] sm:$0xf]
      %v325 = vld [vmem:[%s1 + $0x34] sm:$0xf]
      %v326 = vld [vmem:[%s1 + $0x38] sm:$0xf]
      %v327 = vld [vmem:[%s1 + $0x3c] sm:$0xf]
      %v328 = vld [vmem:[%s1 + $0x40] sm:$0xf]
      %v329 = vld [vmem:[%s1 + $0x44] sm:$0xf]
      %v330 = vld [vmem:[%s1 + $0x48] sm:$0xf]
      %v331 = vld [vmem:[%s1 + $0x4c] sm:$0xf]
      %v332 = vld [vmem:[%s1 + $0x50] sm:$0xf]
      %v333 = vld [vmem:[%s1 + $0x54] sm:$0xf]
      %v334 = vld [vmem:[%s1 + $0x58] sm:$0xf]
      %v335 = vld [vmem:[%s1 + $0x5c] sm:$0xf]
      %v336 = vld [vmem:[%s1 + $0x60] sm:$0xf]
      %v337 = vld [vmem:[%s1 + $0x64] sm:$0xf]
      %v338 = vld [vmem:[%s1 + $0x68] sm:$0xf]
      %v339 = vld [vmem:[%s1 + $0x6c] sm:$0xf]
      %v340 = vld [vmem:[%s1 + $0x70] sm:$0xf]
      %v341 = vld [vmem:[%s1 + $0x74] sm:$0xf]
      %v342 = vld [vmem:[%s1 + $0x78] sm:$0xf]
      %v343 = vld [vmem:[%s1 + $0x7c] sm:$0xf]
      %v344 = vld [vmem:[%s1 + $0x80] sm:$0xf]
      %v345 = vld [vmem:[%s1 + $0x84] sm:$0xf]
      %v346 = vld [vmem:[%s1 + $0x88] sm:$0xf]
      %v347 = vld [vmem:[%s1 + $0x8c] sm:$0xf]
      %v348 = vld [vmem:[%s1 + $0x90] sm:$0xf]
      %v349 = vld [vmem:[%s1 + $0x94] sm:$0xf]
      %v350 = vld [vmem:[%s1 + $0x98] sm:$0xf]
      %v351 = vld [vmem:[%s1 + $0x9c] sm:$0xf]
      %v352 = vld [vmem:[%s1 + $0xa0] sm:$0xf]
      %v353 = vld [vmem:[%s1 + $0xa4] sm:$0xf]
      %v354 = vld [vmem:[%s1 + $0xa8] sm:$0xf]
      %v355 = vld [vmem:[%s1 + $0xac] sm:$0xf]
      %v356 = vld [vmem:[%s1 + $0xb0] sm:$0xf]
      %v357 = vld [vmem:[%s1 + $0xb4] sm:$0xf]
      %v358 = vld [vmem:[%s1 + $0xb8] sm:$0xf]
      %v359 = vld [vmem:[%s1 + $0xbc] sm:$0xf]
      %v424 = vunpack.c.l.b16 %v248
      %v425 = vunpack.c.h.b16 %v248
      %v426 = vunpack.c.l.b16 %v249
      %v427 = vunpack.c.l.b16 %v250
      %v428 = vunpack.c.h.b16 %v250
      %v429 = vunpack.c.l.b16 %v251
      %v430 = vunpack.c.l.b16 %v252
      %v431 = vunpack.c.h.b16 %v252
      %v432 = vunpack.c.l.b16 %v253
      %v433 = vunpack.c.l.b16 %v254
      %v434 = vunpack.c.h.b16 %v254
      %v435 = vunpack.c.l.b16 %v255
      %v436 = vunpack.c.l.b16 %v256
      %v437 = vunpack.c.h.b16 %v256
      %v438 = vunpack.c.l.b16 %v257
      %v439 = vunpack.c.l.b16 %v258
      %v440 = vunpack.c.h.b16 %v258
      %v441 = vunpack.c.l.b16 %v259
      %v442 = vunpack.c.l.b16 %v260
      %v443 = vunpack.c.h.b16 %v260
      %v444 = vunpack.c.l.b16 %v261
      %v445 = vunpack.c.l.b16 %v262
      %v446 = vunpack.c.h.b16 %v262
      %v447 = vunpack.c.l.b16 %v263
      %v448 = vunpack.c.l.b16 %v264
      %v449 = vunpack.c.h.b16 %v264
      %v450 = vunpack.c.l.b16 %v265
      %v451 = vunpack.c.l.b16 %v266
      %v452 = vunpack.c.h.b16 %v266
      %v453 = vunpack.c.l.b16 %v267
      %v454 = vunpack.c.l.b16 %v268
      %v455 = vunpack.c.h.b16 %v268
      %v456 = vunpack.c.l.b16 %v269
      %v457 = vunpack.c.l.b16 %v270
      %v458 = vunpack.c.h.b16 %v270
      %v459 = vunpack.c.l.b16 %v271
      %v460 = vunpack.c.l.b16 %v272
      %v461 = vunpack.c.h.b16 %v272
      %v462 = vunpack.c.l.b16 %v273
      %v463 = vunpack.c.l.b16 %v274
      %v464 = vunpack.c.h.b16 %v274
      %v465 = vunpack.c.l.b16 %v275
      %v466 = vunpack.c.l.b16 %v276
      %v467 = vunpack.c.h.b16 %v276
      %v468 = vunpack.c.l.b16 %v277
      %v469 = vunpack.c.l.b16 %v278
      %v470 = vunpack.c.h.b16 %v278
      %v471 = vunpack.c.l.b16 %v279
      %v472 = vunpack.c.l.b16 %v280
      %v473 = vunpack.c.h.b16 %v280
      %v474 = vunpack.c.l.b16 %v281
      %v475 = vunpack.c.l.b16 %v282
      %v476 = vunpack.c.h.b16 %v282
      %v477 = vunpack.c.l.b16 %v283
      %v478 = vunpack.c.l.b16 %v284
      %v479 = vunpack.c.h.b16 %v284
      %v480 = vunpack.c.l.b16 %v285
      %v481 = vunpack.c.l.b16 %v286
      %v482 = vunpack.c.h.b16 %v286
      %v483 = vunpack.c.l.b16 %v287
      %v484 = vunpack.c.l.b16 %v288
      %v485 = vunpack.c.h.b16 %v288
      %v486 = vunpack.c.l.b16 %v289
      %v487 = vunpack.c.l.b16 %v290
      %v488 = vunpack.c.h.b16 %v290
      %v489 = vunpack.c.l.b16 %v291
      %v490 = vunpack.c.l.b16 %v292
      %v491 = vunpack.c.h.b16 %v292
      %v492 = vunpack.c.l.b16 %v293
      %v493 = vunpack.c.l.b16 %v294
      %v494 = vunpack.c.h.b16 %v294
      %v495 = vunpack.c.l.b16 %v295
      %v496 = vunpack.c.l.b16 %v296
      %v497 = vunpack.c.h.b16 %v296
      %v498 = vunpack.c.l.b16 %v297
      %v499 = vunpack.c.l.b16 %v298
      %v500 = vunpack.c.h.b16 %v298
      %v501 = vunpack.c.l.b16 %v299
      %v502 = vunpack.c.l.b16 %v300
      %v503 = vunpack.c.h.b16 %v300
      %v504 = vunpack.c.l.b16 %v301
      %v505 = vunpack.c.l.b16 %v302
      %v506 = vunpack.c.h.b16 %v302
      %v507 = vunpack.c.l.b16 %v303
      %v508 = vunpack.c.l.b16 %v304
      %v509 = vunpack.c.h.b16 %v304
      %v510 = vunpack.c.l.b16 %v305
      %v511 = vunpack.c.l.b16 %v306
      %v512 = vunpack.c.h.b16 %v306
      %v513 = vunpack.c.l.b16 %v307
      %v514 = vunpack.c.l.b16 %v308
      %v515 = vunpack.c.h.b16 %v308
      %v516 = vunpack.c.l.b16 %v309
      %v517 = vunpack.c.l.b16 %v310
      %v518 = vunpack.c.h.b16 %v310
      %v519 = vunpack.c.l.b16 %v311
      %v520 = vpack.c.b16 %v427, %v424
      %v521 = vpack.c.b16 %v428, %v425
      %v522 = vpack.c.b16 %v429, %v426
      %v523 = vpack.c.b16 %v433, %v430
      %v524 = vpack.c.b16 %v434, %v431
      %v525 = vpack.c.b16 %v435, %v432
      %v526 = vpack.c.b16 %v439, %v436
      %v527 = vpack.c.b16 %v440, %v437
      %v528 = vpack.c.b16 %v441, %v438
      %v529 = vpack.c.b16 %v445, %v442
      %v530 = vpack.c.b16 %v446, %v443
      %v531 = vpack.c.b16 %v447, %v444
      %v532 = vpack.c.b16 %v451, %v448
      %v533 = vpack.c.b16 %v452, %v449
      %v534 = vpack.c.b16 %v453, %v450
      %v535 = vpack.c.b16 %v457, %v454
      %v536 = vpack.c.b16 %v458, %v455
      %v537 = vpack.c.b16 %v459, %v456
      %v538 = vpack.c.b16 %v463, %v460
      %v539 = vpack.c.b16 %v464, %v461
      %v540 = vpack.c.b16 %v465, %v462
      %v541 = vpack.c.b16 %v469, %v466
      %v542 = vpack.c.b16 %v470, %v467
      %v543 = vpack.c.b16 %v471, %v468
      %v544 = vpack.c.b16 %v475, %v472
      %v545 = vpack.c.b16 %v476, %v473
      %v546 = vpack.c.b16 %v477, %v474
      %v547 = vpack.c.b16 %v481, %v478
      %v548 = vpack.c.b16 %v482, %v479
      %v549 = vpack.c.b16 %v483, %v480
      %v550 = vpack.c.b16 %v487, %v484
      %v551 = vpack.c.b16 %v488, %v485
      %v552 = vpack.c.b16 %v489, %v486
      %v553 = vpack.c.b16 %v493, %v490
      %v554 = vpack.c.b16 %v494, %v491
      %v555 = vpack.c.b16 %v495, %v492
      %v556 = vpack.c.b16 %v499, %v496
      %v557 = vpack.c.b16 %v500, %v497
      %v558 = vpack.c.b16 %v501, %v498
      %v559 = vpack.c.b16 %v505, %v502
      %v560 = vpack.c.b16 %v506, %v503
      %v561 = vpack.c.b16 %v507, %v504
      %v562 = vpack.c.b16 %v511, %v508
      %v563 = vpack.c.b16 %v512, %v509
      %v564 = vpack.c.b16 %v513, %v510
      %v565 = vpack.c.b16 %v517, %v514
      %v566 = vpack.c.b16 %v518, %v515
      %v567 = vpack.c.b16 %v519, %v516
      %v664 = vunpack.c.l.b16 %v312
      %v665 = vunpack.c.l.b16 %v313
      %v666 = vunpack.c.l.b16 %v314
      %v667 = vunpack.c.l.b16 %v315
      %v668 = vunpack.c.l.b16 %v316
      %v669 = vunpack.c.l.b16 %v317
      %v670 = vunpack.c.l.b16 %v318
      %v671 = vunpack.c.l.b16 %v319
      %v672 = vunpack.c.l.b16 %v320
      %v673 = vunpack.c.l.b16 %v321
      %v674 = vunpack.c.l.b16 %v322
      %v675 = vunpack.c.l.b16 %v323
      %v676 = vunpack.c.l.b16 %v324
      %v677 = vunpack.c.l.b16 %v325
      %v678 = vunpack.c.l.b16 %v326
      %v679 = vunpack.c.l.b16 %v327
      %v680 = vunpack.c.l.b16 %v328
      %v681 = vunpack.c.l.b16 %v329
      %v682 = vunpack.c.l.b16 %v330
      %v683 = vunpack.c.l.b16 %v331
      %v684 = vunpack.c.l.b16 %v332
      %v685 = vunpack.c.l.b16 %v333
      %v686 = vunpack.c.l.b16 %v334
      %v687 = vunpack.c.l.b16 %v335
      %v688 = vunpack.c.l.b16 %v336
      %v689 = vunpack.c.l.b16 %v337
      %v690 = vunpack.c.l.b16 %v338
      %v691 = vunpack.c.l.b16 %v339
      %v692 = vunpack.c.l.b16 %v340
      %v693 = vunpack.c.l.b16 %v341
      %v694 = vunpack.c.l.b16 %v342
      %v695 = vunpack.c.l.b16 %v343
      %v696 = vunpack.c.l.b16 %v344
      %v697 = vunpack.c.l.b16 %v345
      %v698 = vunpack.c.l.b16 %v346
      %v699 = vunpack.c.l.b16 %v347
      %v700 = vunpack.c.l.b16 %v348
      %v701 = vunpack.c.l.b16 %v349
      %v702 = vunpack.c.l.b16 %v350
      %v703 = vunpack.c.l.b16 %v351
      %v704 = vunpack.c.l.b16 %v352
      %v705 = vunpack.c.l.b16 %v353
      %v706 = vunpack.c.l.b16 %v354
      %v707 = vunpack.c.l.b16 %v355
      %v708 = vunpack.c.l.b16 %v356
      %v709 = vunpack.c.l.b16 %v357
      %v710 = vunpack.c.l.b16 %v358
      %v711 = vunpack.c.l.b16 %v359
      %v712 = vpack.c.b16 %v665, %v664
      %v713 = vpack.c.b16 %v667, %v666
      %v714 = vpack.c.b16 %v669, %v668
      %v715 = vpack.c.b16 %v671, %v670
      %v716 = vpack.c.b16 %v673, %v672
      %v717 = vpack.c.b16 %v675, %v674
      %v718 = vpack.c.b16 %v677, %v676
      %v719 = vpack.c.b16 %v679, %v678
      %v720 = vpack.c.b16 %v681, %v680
      %v721 = vpack.c.b16 %v683, %v682
      %v722 = vpack.c.b16 %v685, %v684
      %v723 = vpack.c.b16 %v687, %v686
      %v724 = vpack.c.b16 %v689, %v688
      %v725 = vpack.c.b16 %v691, %v690
      %v726 = vpack.c.b16 %v693, %v692
      %v727 = vpack.c.b16 %v695, %v694
      %v728 = vpack.c.b16 %v697, %v696
      %v729 = vpack.c.b16 %v699, %v698
      %v730 = vpack.c.b16 %v701, %v700
      %v731 = vpack.c.b16 %v703, %v702
      %v732 = vpack.c.b16 %v705, %v704
      %v733 = vpack.c.b16 %v707, %v706
      %v734 = vpack.c.b16 %v709, %v708
      %v735 = vpack.c.b16 %v711, %v710
      %760 = vmatpush.bf16.msra.mxu0 %v719
      %761 = vmatpush.bf16.msra.mxu0 %v718
      %762 = vmatpush.bf16.msra.mxu0 %v717
      %763 = vmatpush.bf16.msra.mxu0 %v716
      %764 = vmatpush.bf16.msra.mxu0 %v715
      %765 = vmatpush.bf16.msra.mxu0 %v714
      %766 = vmatpush.bf16.msra.mxu0 %v713
      %767 = vmatpush.bf16.msra.mxu0 %v712
      %768 = vmatmul.bf16.gmra.mxu0 %v520
      %v769 = vpop.f32.mrf.mxu0
      %v770 = vadd.f32 0.0, %v769
      %v771 = vpop.f32.mrf.mxu0
      %v772 = vadd.f32 0.0, %v771
      %773 = vmatmul.bf16.gmra.mxu0 %v523
      %v774 = vpop.f32.mrf.mxu0
      %v775 = vadd.f32 0.0, %v774
      %v776 = vpop.f32.mrf.mxu0
      %v777 = vadd.f32 0.0, %v776
      %778 = vmatmul.bf16.gmra.mxu0 %v526
      %v779 = vpop.f32.mrf.mxu0
      %v780 = vadd.f32 0.0, %v779
      %v781 = vpop.f32.mrf.mxu0
      %v782 = vadd.f32 0.0, %v781
      %783 = vmatmul.bf16.gmra.mxu0 %v529
      %v784 = vpop.f32.mrf.mxu0
      %v785 = vadd.f32 0.0, %v784
      %v786 = vpop.f32.mrf.mxu0
      %v787 = vadd.f32 0.0, %v786
      %788 = vmatmul.bf16.gmra.mxu0 %v532
      %v789 = vpop.f32.mrf.mxu0
      %v790 = vadd.f32 0.0, %v789
      %v791 = vpop.f32.mrf.mxu0
      %v792 = vadd.f32 0.0, %v791
      %793 = vmatmul.bf16.gmra.mxu0 %v535
      %v794 = vpop.f32.mrf.mxu0
      %v795 = vadd.f32 0.0, %v794
      %v796 = vpop.f32.mrf.mxu0
      %v797 = vadd.f32 0.0, %v796
      %798 = vmatmul.bf16.gmra.mxu0 %v538
      %v799 = vpop.f32.mrf.mxu0
      %v800 = vadd.f32 0.0, %v799
      %v801 = vpop.f32.mrf.mxu0
      %v802 = vadd.f32 0.0, %v801
      %803 = vmatmul.bf16.gmra.mxu0 %v541
      %v804 = vpop.f32.mrf.mxu0
      %v805 = vadd.f32 0.0, %v804
      %v806 = vpop.f32.mrf.mxu0
      %v807 = vadd.f32 0.0, %v806
      %808 = vmatmul.bf16.gmra.mxu0 %v544
      %v809 = vpop.f32.mrf.mxu0
      %v810 = vadd.f32 0.0, %v809
      %v811 = vpop.f32.mrf.mxu0
      %v812 = vadd.f32 0.0, %v811
      %813 = vmatmul.bf16.gmra.mxu0 %v547
      %v814 = vpop.f32.mrf.mxu0
      %v815 = vadd.f32 0.0, %v814
      %v816 = vpop.f32.mrf.mxu0
      %v817 = vadd.f32 0.0, %v816
      %818 = vmatmul.bf16.gmra.mxu0 %v550
      %v819 = vpop.f32.mrf.mxu0
      %v820 = vadd.f32 0.0, %v819
      %v821 = vpop.f32.mrf.mxu0
      %v822 = vadd.f32 0.0, %v821
      %823 = vmatmul.bf16.gmra.mxu0 %v553
      %v824 = vpop.f32.mrf.mxu0
      %v825 = vadd.f32 0.0, %v824
      %v826 = vpop.f32.mrf.mxu0
      %v827 = vadd.f32 0.0, %v826
      %828 = vmatmul.bf16.gmra.mxu0 %v556
      %v829 = vpop.f32.mrf.mxu0
      %v830 = vadd.f32 0.0, %v829
      %v831 = vpop.f32.mrf.mxu0
      %v832 = vadd.f32 0.0, %v831
      %833 = vmatmul.bf16.gmra.mxu0 %v559
      %v834 = vpop.f32.mrf.mxu0
      %v835 = vadd.f32 0.0, %v834
      %v836 = vpop.f32.mrf.mxu0
      %v837 = vadd.f32 0.0, %v836
      %838 = vmatmul.bf16.gmra.mxu0 %v562
      %v839 = vpop.f32.mrf.mxu0
      %v840 = vadd.f32 0.0, %v839
      %v841 = vpop.f32.mrf.mxu0
      %v842 = vadd.f32 0.0, %v841
      %843 = vmatmul.bf16.gmra.mxu0 %v565
      %v844 = vpop.f32.mrf.mxu0
      %v845 = vadd.f32 0.0, %v844
      %v846 = vpop.f32.mrf.mxu0
      %v847 = vadd.f32 0.0, %v846
      %848 = vdwg.mxu0
      %849 = vmatpush.bf16.msra.mxu0 %v727
      %850 = vmatpush.bf16.msra.mxu0 %v726
      %851 = vmatpush.bf16.msra.mxu0 %v725
      %852 = vmatpush.bf16.msra.mxu0 %v724
      %853 = vmatpush.bf16.msra.mxu0 %v723
      %854 = vmatpush.bf16.msra.mxu0 %v722
      %855 = vmatpush.bf16.msra.mxu0 %v721
      %856 = vmatpush.bf16.msra.mxu0 %v720
      %857 = vmatmul.bf16.gmra.mxu0 %v521
      %v858 = vpop.f32.mrf.mxu0
      %v859 = vadd.f32 %v770, %v858
      %v860 = vpop.f32.mrf.mxu0
      %v861 = vadd.f32 %v772, %v860
      %862 = vmatmul.bf16.gmra.mxu0 %v524
      %v863 = vpop.f32.mrf.mxu0
      %v864 = vadd.f32 %v775, %v863
      %v865 = vpop.f32.mrf.mxu0
      %v866 = vadd.f32 %v777, %v865
      %867 = vmatmul.bf16.gmra.mxu0 %v527
      %v868 = vpop.f32.mrf.mxu0
      %v869 = vadd.f32 %v780, %v868
      %v870 = vpop.f32.mrf.mxu0
      %v871 = vadd.f32 %v782, %v870
      %872 = vmatmul.bf16.gmra.mxu0 %v530
      %v873 = vpop.f32.mrf.mxu0
      %v874 = vadd.f32 %v785, %v873
      %v875 = vpop.f32.mrf.mxu0
      %v876 = vadd.f32 %v787, %v875
      %877 = vmatmul.bf16.gmra.mxu0 %v533
      %v878 = vpop.f32.mrf.mxu0
      %v879 = vadd.f32 %v790, %v878
      %v880 = vpop.f32.mrf.mxu0
      %v881 = vadd.f32 %v792, %v880
      %882 = vmatmul.bf16.gmra.mxu0 %v536
      %v883 = vpop.f32.mrf.mxu0
      %v884 = vadd.f32 %v795, %v883
      %v885 = vpop.f32.mrf.mxu0
      %v886 = vadd.f32 %v797, %v885
      %887 = vmatmul.bf16.gmra.mxu0 %v539
      %v888 = vpop.f32.mrf.mxu0
      %v889 = vadd.f32 %v800, %v888
      %v890 = vpop.f32.mrf.mxu0
      %v891 = vadd.f32 %v802, %v890
      %892 = vmatmul.bf16.gmra.mxu0 %v542
      %v893 = vpop.f32.mrf.mxu0
      %v894 = vadd.f32 %v805, %v893
      %v895 = vpop.f32.mrf.mxu0
      %v896 = vadd.f32 %v807, %v895
      %897 = vmatmul.bf16.gmra.mxu0 %v545
      %v898 = vpop.f32.mrf.mxu0
      %v899 = vadd.f32 %v810, %v898
      %v900 = vpop.f32.mrf.mxu0
      %v901 = vadd.f32 %v812, %v900
      %902 = vmatmul.bf16.gmra.mxu0 %v548
      %v903 = vpop.f32.mrf.mxu0
      %v904 = vadd.f32 %v815, %v903
      %v905 = vpop.f32.mrf.mxu0
      %v906 = vadd.f32 %v817, %v905
      %907 = vmatmul.bf16.gmra.mxu0 %v551
      %v908 = vpop.f32.mrf.mxu0
      %v909 = vadd.f32 %v820, %v908
      %v910 = vpop.f32.mrf.mxu0
      %v911 = vadd.f32 %v822, %v910
      %912 = vmatmul.bf16.gmra.mxu0 %v554
      %v913 = vpop.f32.mrf.mxu0
      %v914 = vadd.f32 %v825, %v913
      %v915 = vpop.f32.mrf.mxu0
      %v916 = vadd.f32 %v827, %v915
      %917 = vmatmul.bf16.gmra.mxu0 %v557
      %v918 = vpop.f32.mrf.mxu0
      %v919 = vadd.f32 %v830, %v918
      %v920 = vpop.f32.mrf.mxu0
      %v921 = vadd.f32 %v832, %v920
      %922 = vmatmul.bf16.gmra.mxu0 %v560
      %v923 = vpop.f32.mrf.mxu0
      %v924 = vadd.f32 %v835, %v923
      %v925 = vpop.f32.mrf.mxu0
      %v926 = vadd.f32 %v837, %v925
      %927 = vmatmul.bf16.gmra.mxu0 %v563
      %v928 = vpop.f32.mrf.mxu0
      %v929 = vadd.f32 %v840, %v928
      %v930 = vpop.f32.mrf.mxu0
      %v931 = vadd.f32 %v842, %v930
      %932 = vmatmul.bf16.gmra.mxu0 %v566
      %v933 = vpop.f32.mrf.mxu0
      %v934 = vadd.f32 %v845, %v933
      %v935 = vpop.f32.mrf.mxu0
      %v936 = vadd.f32 %v847, %v935
      %937 = vdwg.mxu0
      %938 = vmatpush.bf16.msra.mxu0 %v735
      %939 = vmatpush.bf16.msra.mxu0 %v734
      %940 = vmatpush.bf16.msra.mxu0 %v733
      %941 = vmatpush.bf16.msra.mxu0 %v732
      %942 = vmatpush.bf16.msra.mxu0 %v731
      %943 = vmatpush.bf16.msra.mxu0 %v730
      %944 = vmatpush.bf16.msra.mxu0 %v729
      %945 = vmatpush.bf16.msra.mxu0 %v728
      %946 = vmatmul.bf16.gmra.mxu0 %v522
      %v947 = vpop.f32.mrf.mxu0
      %v948 = vadd.f32 %v859, %v947
      %v949 = vpop.f32.mrf.mxu0
      %v950 = vadd.f32 %v861, %v949
      %951 = vmatmul.bf16.gmra.mxu0 %v525
      %v952 = vpop.f32.mrf.mxu0
      %v953 = vadd.f32 %v864, %v952
      %v954 = vpop.f32.mrf.mxu0
      %v955 = vadd.f32 %v866, %v954
      %956 = vmatmul.bf16.gmra.mxu0 %v528
      %v957 = vpop.f32.mrf.mxu0
      %v958 = vadd.f32 %v869, %v957
      %v959 = vpop.f32.mrf.mxu0
      %v960 = vadd.f32 %v871, %v959
      %961 = vmatmul.bf16.gmra.mxu0 %v531
      %v962 = vpop.f32.mrf.mxu0
      %v963 = vadd.f32 %v874, %v962
      %v964 = vpop.f32.mrf.mxu0
      %v965 = vadd.f32 %v876, %v964
      %966 = vmatmul.bf16.gmra.mxu0 %v534
      %v967 = vpop.f32.mrf.mxu0
      %v968 = vadd.f32 %v879, %v967
      %v969 = vpop.f32.mrf.mxu0
      %v970 = vadd.f32 %v881, %v969
      %971 = vmatmul.bf16.gmra.mxu0 %v537
      %v972 = vpop.f32.mrf.mxu0
      %v973 = vadd.f32 %v884, %v972
      %v974 = vpop.f32.mrf.mxu0
      %v975 = vadd.f32 %v886, %v974
      %976 = vmatmul.bf16.gmra.mxu0 %v540
      %v977 = vpop.f32.mrf.mxu0
      %v978 = vadd.f32 %v889, %v977
      %v979 = vpop.f32.mrf.mxu0
      %v980 = vadd.f32 %v891, %v979
      %981 = vmatmul.bf16.gmra.mxu0 %v543
      %v982 = vpop.f32.mrf.mxu0
      %v983 = vadd.f32 %v894, %v982
      %v984 = vpop.f32.mrf.mxu0
      %v985 = vadd.f32 %v896, %v984
      %986 = vmatmul.bf16.gmra.mxu0 %v546
      %v987 = vpop.f32.mrf.mxu0
      %v988 = vadd.f32 %v899, %v987
      %v989 = vpop.f32.mrf.mxu0
      %v990 = vadd.f32 %v901, %v989
      %991 = vmatmul.bf16.gmra.mxu0 %v549
      %v992 = vpop.f32.mrf.mxu0
      %v993 = vadd.f32 %v904, %v992
      %v994 = vpop.f32.mrf.mxu0
      %v995 = vadd.f32 %v906, %v994
      %996 = vmatmul.bf16.gmra.mxu0 %v552
      %v997 = vpop.f32.mrf.mxu0
      %v998 = vadd.f32 %v909, %v997
      %v999 = vpop.f32.mrf.mxu0
      %v1000 = vadd.f32 %v911, %v999
      %1001 = vmatmul.bf16.gmra.mxu0 %v555
      %v1002 = vpop.f32.mrf.mxu0
      %v1003 = vadd.f32 %v914, %v1002
      %v1004 = vpop.f32.mrf.mxu0
      %v1005 = vadd.f32 %v916, %v1004
      %1006 = vmatmul.bf16.gmra.mxu0 %v558
      %v1007 = vpop.f32.mrf.mxu0
      %v1008 = vadd.f32 %v919, %v1007
      %v1009 = vpop.f32.mrf.mxu0
      %v1010 = vadd.f32 %v921, %v1009
      %1011 = vmatmul.bf16.gmra.mxu0 %v561
      %v1012 = vpop.f32.mrf.mxu0
      %v1013 = vadd.f32 %v924, %v1012
      %v1014 = vpop.f32.mrf.mxu0
      %v1015 = vadd.f32 %v926, %v1014
      %1016 = vmatmul.bf16.gmra.mxu0 %v564
      %v1017 = vpop.f32.mrf.mxu0
      %v1018 = vadd.f32 %v929, %v1017
      %v1019 = vpop.f32.mrf.mxu0
      %v1020 = vadd.f32 %v931, %v1019
      %1021 = vmatmul.bf16.gmra.mxu0 %v567
      %v1022 = vpop.f32.mrf.mxu0
      %v1023 = vadd.f32 %v934, %v1022
      %v1024 = vpop.f32.mrf.mxu0
      %v1025 = vadd.f32 %v936, %v1024
      %1026 = vdwg.mxu0
      %1027 = vst [vmem:[#allocation2] sm:$0xff] %v948
      %1028 = vst [vmem:[#allocation2 + $0x8] sm:$0xff] %v950
      %1029 = vst [vmem:[#allocation2 + $0x10] sm:$0xff] %v953
      %1030 = vst [vmem:[#allocation2 + $0x18] sm:$0xff] %v955
      %1031 = vst [vmem:[#allocation2 + $0x20] sm:$0xff] %v958
      %1032 = vst [vmem:[#allocation2 + $0x28] sm:$0xff] %v960
      %1033 = vst [vmem:[#allocation2 + $0x30] sm:$0xff] %v963
      %1034 = vst [vmem:[#allocation2 + $0x38] sm:$0xff] %v965
      %1035 = vst [vmem:[#allocation2 + $0x40] sm:$0xff] %v968
      %1036 = vst [vmem:[#allocation2 + $0x48] sm:$0xff] %v970
      %1037 = vst [vmem:[#allocation2 + $0x50] sm:$0xff] %v973
      %1038 = vst [vmem:[#allocation2 + $0x58] sm:$0xff] %v975
      %1039 = vst [vmem:[#allocation2 + $0x60] sm:$0xff] %v978
      %1040 = vst [vmem:[#allocation2 + $0x68] sm:$0xff] %v980
      %1041 = vst [vmem:[#allocation2 + $0x70] sm:$0xff] %v983
      %1042 = vst [vmem:[#allocation2 + $0x78] sm:$0xff] %v985
      %1043 = vst [vmem:[#allocation2 + $0x80] sm:$0xff] %v988
      %1044 = vst [vmem:[#allocation2 + $0x88] sm:$0xff] %v990
      %1045 = vst [vmem:[#allocation2 + $0x90] sm:$0xff] %v993
      %1046 = vst [vmem:[#allocation2 + $0x98] sm:$0xff] %v995
      %1047 = vst [vmem:[#allocation2 + $0xa0] sm:$0xff] %v998
      %1048 = vst [vmem:[#allocation2 + $0xa8] sm:$0xff] %v1000
      %1049 = vst [vmem:[#allocation2 + $0xb0] sm:$0xff] %v1003
      %1050 = vst [vmem:[#allocation2 + $0xb8] sm:$0xff] %v1005
      %1051 = vst [vmem:[#allocation2 + $0xc0] sm:$0xff] %v1008
      %1052 = vst [vmem:[#allocation2 + $0xc8] sm:$0xff] %v1010
      %1053 = vst [vmem:[#allocation2 + $0xd0] sm:$0xff] %v1013
      %1054 = vst [vmem:[#allocation2 + $0xd8] sm:$0xff] %v1015
      %1055 = vst [vmem:[#allocation2 + $0xe0] sm:$0xff] %v1018
      %1056 = vst [vmem:[#allocation2 + $0xe8] sm:$0xff] %v1020
      %1057 = vst [vmem:[#allocation2 + $0xf0] sm:$0xff] %v1023
      %1058 = vst [vmem:[#allocation2 + $0xf8] sm:$0xff] %v1025
      %v1059 = vld [vmem:[#allocation2] sm:$0xff]
      %v1060 = vld [vmem:[#allocation2 + $0x8] sm:$0xff]
      %v1061 = vld [vmem:[#allocation2 + $0x10] sm:$0xff]
      %v1062 = vld [vmem:[#allocation2 + $0x18] sm:$0xff]
      %v1063 = vld [vmem:[#allocation2 + $0x20] sm:$0xff]
      %v1064 = vld [vmem:[#allocation2 + $0x28] sm:$0xff]
      %v1065 = vld [vmem:[#allocation2 + $0x30] sm:$0xff]
      %v1066 = vld [vmem:[#allocation2 + $0x38] sm:$0xff]
      %v1067 = vld [vmem:[#allocation2 + $0x40] sm:$0xff]
      %v1068 = vld [vmem:[#allocation2 + $0x48] sm:$0xff]
      %v1069 = vld [vmem:[#allocation2 + $0x50] sm:$0xff]
      %v1070 = vld [vmem:[#allocation2 + $0x58] sm:$0xff]
      %v1071 = vld [vmem:[#allocation2 + $0x60] sm:$0xff]
      %v1072 = vld [vmem:[#allocation2 + $0x68] sm:$0xff]
      %v1073 = vld [vmem:[#allocation2 + $0x70] sm:$0xff]
      %v1074 = vld [vmem:[#allocation2 + $0x78] sm:$0xff]
      %v1075 = vld [vmem:[#allocation2 + $0x80] sm:$0xff]
      %v1076 = vld [vmem:[#allocation2 + $0x88] sm:$0xff]
      %v1077 = vld [vmem:[#allocation2 + $0x90] sm:$0xff]
      %v1078 = vld [vmem:[#allocation2 + $0x98] sm:$0xff]
      %v1079 = vld [vmem:[#allocation2 + $0xa0] sm:$0xff]
      %v1080 = vld [vmem:[#allocation2 + $0xa8] sm:$0xff]
      %v1081 = vld [vmem:[#allocation2 + $0xb0] sm:$0xff]
      %v1082 = vld [vmem:[#allocation2 + $0xb8] sm:$0xff]
      %v1083 = vld [vmem:[#allocation2 + $0xc0] sm:$0xff]
      %v1084 = vld [vmem:[#allocation2 + $0xc8] sm:$0xff]
      %v1085 = vld [vmem:[#allocation2 + $0xd0] sm:$0xff]
      %v1086 = vld [vmem:[#allocation2 + $0xd8] sm:$0xff]
      %v1087 = vld [vmem:[#allocation2 + $0xe0] sm:$0xff]
      %v1088 = vld [vmem:[#allocation2 + $0xe8] sm:$0xff]
      %v1089 = vld [vmem:[#allocation2 + $0xf0] sm:$0xff]
      %v1090 = vld [vmem:[#allocation2 + $0xf8] sm:$0xff]
      %v1091 = vld [vmem:[%s233 + $0x18] sm:$0xff]
      %v1092 = vld [vmem:[%s233 + $0x20] sm:$0xf]
      %v1093 = vld [vmem:[%s233 + $0x24] sm:$0xff]
      %v1094 = vld [vmem:[%s233 + $0x2c] sm:$0xf]
      %v1095 = vld [vmem:[%s233 + $0x30] sm:$0xff]
      %v1096 = vld [vmem:[%s233 + $0x38] sm:$0xf]
      %v1097 = vld [vmem:[%s233 + $0x3c] sm:$0xff]
      %v1098 = vld [vmem:[%s233 + $0x44] sm:$0xf]
      %v1099 = vld [vmem:[%s233 + $0x48] sm:$0xff]
      %v1100 = vld [vmem:[%s233 + $0x50] sm:$0xf]
      %v1101 = vld [vmem:[%s233 + $0x54] sm:$0xff]
      %v1102 = vld [vmem:[%s233 + $0x5c] sm:$0xf]
      %v1103 = vld [vmem:[%s233 + $0x60] sm:$0xff]
      %v1104 = vld [vmem:[%s233 + $0x68] sm:$0xf]
      %v1105 = vld [vmem:[%s233 + $0x6c] sm:$0xff]
      %v1106 = vld [vmem:[%s233 + $0x74] sm:$0xf]
      %v1107 = vld [vmem:[%s233 + $0x78] sm:$0xff]
      %v1108 = vld [vmem:[%s233 + $0x80] sm:$0xf]
      %v1109 = vld [vmem:[%s233 + $0x84] sm:$0xff]
      %v1110 = vld [vmem:[%s233 + $0x8c] sm:$0xf]
      %v1111 = vld [vmem:[%s233 + $0x90] sm:$0xff]
      %v1112 = vld [vmem:[%s233 + $0x98] sm:$0xf]
      %v1113 = vld [vmem:[%s233 + $0x9c] sm:$0xff]
      %v1114 = vld [vmem:[%s233 + $0xa4] sm:$0xf]
      %v1115 = vld [vmem:[%s233 + $0xa8] sm:$0xff]
      %v1116 = vld [vmem:[%s233 + $0xb0] sm:$0xf]
      %v1117 = vld [vmem:[%s233 + $0xb4] sm:$0xff]
      %v1118 = vld [vmem:[%s233 + $0xbc] sm:$0xf]
      %v1119 = vld [vmem:[%s233 + $0xc0] sm:$0xff]
      %v1120 = vld [vmem:[%s233 + $0xc8] sm:$0xf]
      %v1121 = vld [vmem:[%s233 + $0xcc] sm:$0xff]
      %v1122 = vld [vmem:[%s233 + $0xd4] sm:$0xf]
      %v1123 = vld [vmem:[%s233 + $0xd8] sm:$0xff]
      %v1124 = vld [vmem:[%s233 + $0xe0] sm:$0xf]
      %v1125 = vld [vmem:[%s233 + $0xe4] sm:$0xff]
      %v1126 = vld [vmem:[%s233 + $0xec] sm:$0xf]
      %v1127 = vld [vmem:[%s233 + $0xf0] sm:$0xff]
      %v1128 = vld [vmem:[%s233 + $0xf8] sm:$0xf]
      %v1129 = vld [vmem:[%s233 + $0xfc] sm:$0xff]
      %v1130 = vld [vmem:[%s233 + $0x104] sm:$0xf]
      %v1131 = vld [vmem:[%s233 + $0x108] sm:$0xff]
      %v1132 = vld [vmem:[%s233 + $0x110] sm:$0xf]
      %v1133 = vld [vmem:[%s233 + $0x114] sm:$0xff]
      %v1134 = vld [vmem:[%s233 + $0x11c] sm:$0xf]
      %v1135 = vld [vmem:[%s233 + $0x120] sm:$0xff]
      %v1136 = vld [vmem:[%s233 + $0x128] sm:$0xf]
      %v1137 = vld [vmem:[%s233 + $0x12c] sm:$0xff]
      %v1138 = vld [vmem:[%s233 + $0x134] sm:$0xf]
      %v1139 = vld [vmem:[%s233 + $0x138] sm:$0xff]
      %v1140 = vld [vmem:[%s233 + $0x140] sm:$0xf]
      %v1141 = vld [vmem:[%s233 + $0x144] sm:$0xff]
      %v1142 = vld [vmem:[%s233 + $0x14c] sm:$0xf]
      %v1143 = vld [vmem:[%s233 + $0x150] sm:$0xff]
      %v1144 = vld [vmem:[%s233 + $0x158] sm:$0xf]
      %v1145 = vld [vmem:[%s233 + $0x15c] sm:$0xff]
      %v1146 = vld [vmem:[%s233 + $0x164] sm:$0xf]
      %v1147 = vld [vmem:[%s233 + $0x168] sm:$0xff]
      %v1148 = vld [vmem:[%s233 + $0x170] sm:$0xf]
      %v1149 = vld [vmem:[%s233 + $0x174] sm:$0xff]
      %v1150 = vld [vmem:[%s233 + $0x17c] sm:$0xf]
      %v1151 = vld [vmem:[%s233 + $0x180] sm:$0xff]
      %v1152 = vld [vmem:[%s233 + $0x188] sm:$0xf]
      %v1153 = vld [vmem:[%s233 + $0x18c] sm:$0xff]
      %v1154 = vld [vmem:[%s233 + $0x194] sm:$0xf]
      %s1155 = scalar_lea.vmem %s1, 192
      %v1156 = vld [vmem:[%s1155] sm:$0xf]
      %v1157 = vld [vmem:[%s1155 + $0x4] sm:$0xf]
      %v1158 = vld [vmem:[%s1155 + $0x8] sm:$0xf]
      %v1159 = vld [vmem:[%s1155 + $0xc] sm:$0xf]
      %v1160 = vld [vmem:[%s1155 + $0x10] sm:$0xf]
      %v1161 = vld [vmem:[%s1155 + $0x14] sm:$0xf]
      %v1162 = vld [vmem:[%s1155 + $0x18] sm:$0xf]
      %v1163 = vld [vmem:[%s1155 + $0x1c] sm:$0xf]
      %v1164 = vld [vmem:[%s1155 + $0x20] sm:$0xf]
      %v1165 = vld [vmem:[%s1155 + $0x24] sm:$0xf]
      %v1166 = vld [vmem:[%s1155 + $0x28] sm:$0xf]
      %v1167 = vld [vmem:[%s1155 + $0x2c] sm:$0xf]
      %v1168 = vld [vmem:[%s1155 + $0x30] sm:$0xf]
      %v1169 = vld [vmem:[%s1155 + $0x34] sm:$0xf]
      %v1170 = vld [vmem:[%s1155 + $0x38] sm:$0xf]
      %v1171 = vld [vmem:[%s1155 + $0x3c] sm:$0xf]
      %v1172 = vld [vmem:[%s1155 + $0x40] sm:$0xf]
      %v1173 = vld [vmem:[%s1155 + $0x44] sm:$0xf]
      %v1174 = vld [vmem:[%s1155 + $0x48] sm:$0xf]
      %v1175 = vld [vmem:[%s1155 + $0x4c] sm:$0xf]
      %v1176 = vld [vmem:[%s1155 + $0x50] sm:$0xf]
      %v1177 = vld [vmem:[%s1155 + $0x54] sm:$0xf]
      %v1178 = vld [vmem:[%s1155 + $0x58] sm:$0xf]
      %v1179 = vld [vmem:[%s1155 + $0x5c] sm:$0xf]
      %v1180 = vld [vmem:[%s1155 + $0x60] sm:$0xf]
      %v1181 = vld [vmem:[%s1155 + $0x64] sm:$0xf]
      %v1182 = vld [vmem:[%s1155 + $0x68] sm:$0xf]
      %v1183 = vld [vmem:[%s1155 + $0x6c] sm:$0xf]
      %v1184 = vld [vmem:[%s1155 + $0x70] sm:$0xf]
      %v1185 = vld [vmem:[%s1155 + $0x74] sm:$0xf]
      %v1186 = vld [vmem:[%s1155 + $0x78] sm:$0xf]
      %v1187 = vld [vmem:[%s1155 + $0x7c] sm:$0xf]
      %v1188 = vld [vmem:[%s1155 + $0x80] sm:$0xf]
      %v1189 = vld [vmem:[%s1155 + $0x84] sm:$0xf]
      %v1190 = vld [vmem:[%s1155 + $0x88] sm:$0xf]
      %v1191 = vld [vmem:[%s1155 + $0x8c] sm:$0xf]
      %v1192 = vld [vmem:[%s1155 + $0x90] sm:$0xf]
      %v1193 = vld [vmem:[%s1155 + $0x94] sm:$0xf]
      %v1194 = vld [vmem:[%s1155 + $0x98] sm:$0xf]
      %v1195 = vld [vmem:[%s1155 + $0x9c] sm:$0xf]
      %v1196 = vld [vmem:[%s1155 + $0xa0] sm:$0xf]
      %v1197 = vld [vmem:[%s1155 + $0xa4] sm:$0xf]
      %v1198 = vld [vmem:[%s1155 + $0xa8] sm:$0xf]
      %v1199 = vld [vmem:[%s1155 + $0xac] sm:$0xf]
      %v1200 = vld [vmem:[%s1155 + $0xb0] sm:$0xf]
      %v1201 = vld [vmem:[%s1155 + $0xb4] sm:$0xf]
      %v1202 = vld [vmem:[%s1155 + $0xb8] sm:$0xf]
      %v1203 = vld [vmem:[%s1155 + $0xbc] sm:$0xf]
      %v1268 = vunpack.c.l.b16 %v1091
      %v1269 = vunpack.c.h.b16 %v1091
      %v1270 = vunpack.c.l.b16 %v1092
      %v1271 = vunpack.c.l.b16 %v1093
      %v1272 = vunpack.c.h.b16 %v1093
      %v1273 = vunpack.c.l.b16 %v1094
      %v1274 = vunpack.c.l.b16 %v1095
      %v1275 = vunpack.c.h.b16 %v1095
      %v1276 = vunpack.c.l.b16 %v1096
      %v1277 = vunpack.c.l.b16 %v1097
      %v1278 = vunpack.c.h.b16 %v1097
      %v1279 = vunpack.c.l.b16 %v1098
      %v1280 = vunpack.c.l.b16 %v1099
      %v1281 = vunpack.c.h.b16 %v1099
      %v1282 = vunpack.c.l.b16 %v1100
      %v1283 = vunpack.c.l.b16 %v1101
      %v1284 = vunpack.c.h.b16 %v1101
      %v1285 = vunpack.c.l.b16 %v1102
      %v1286 = vunpack.c.l.b16 %v1103
      %v1287 = vunpack.c.h.b16 %v1103
      %v1288 = vunpack.c.l.b16 %v1104
      %v1289 = vunpack.c.l.b16 %v1105
      %v1290 = vunpack.c.h.b16 %v1105
      %v1291 = vunpack.c.l.b16 %v1106
      %v1292 = vunpack.c.l.b16 %v1107
      %v1293 = vunpack.c.h.b16 %v1107
      %v1294 = vunpack.c.l.b16 %v1108
      %v1295 = vunpack.c.l.b16 %v1109
      %v1296 = vunpack.c.h.b16 %v1109
      %v1297 = vunpack.c.l.b16 %v1110
      %v1298 = vunpack.c.l.b16 %v1111
      %v1299 = vunpack.c.h.b16 %v1111
      %v1300 = vunpack.c.l.b16 %v1112
      %v1301 = vunpack.c.l.b16 %v1113
      %v1302 = vunpack.c.h.b16 %v1113
      %v1303 = vunpack.c.l.b16 %v1114
      %v1304 = vunpack.c.l.b16 %v1115
      %v1305 = vunpack.c.h.b16 %v1115
      %v1306 = vunpack.c.l.b16 %v1116
      %v1307 = vunpack.c.l.b16 %v1117
      %v1308 = vunpack.c.h.b16 %v1117
      %v1309 = vunpack.c.l.b16 %v1118
      %v1310 = vunpack.c.l.b16 %v1119
      %v1311 = vunpack.c.h.b16 %v1119
      %v1312 = vunpack.c.l.b16 %v1120
      %v1313 = vunpack.c.l.b16 %v1121
      %v1314 = vunpack.c.h.b16 %v1121
      %v1315 = vunpack.c.l.b16 %v1122
      %v1316 = vunpack.c.l.b16 %v1123
      %v1317 = vunpack.c.h.b16 %v1123
      %v1318 = vunpack.c.l.b16 %v1124
      %v1319 = vunpack.c.l.b16 %v1125
      %v1320 = vunpack.c.h.b16 %v1125
      %v1321 = vunpack.c.l.b16 %v1126
      %v1322 = vunpack.c.l.b16 %v1127
      %v1323 = vunpack.c.h.b16 %v1127
      %v1324 = vunpack.c.l.b16 %v1128
      %v1325 = vunpack.c.l.b16 %v1129
      %v1326 = vunpack.c.h.b16 %v1129
      %v1327 = vunpack.c.l.b16 %v1130
      %v1328 = vunpack.c.l.b16 %v1131
      %v1329 = vunpack.c.h.b16 %v1131
      %v1330 = vunpack.c.l.b16 %v1132
      %v1331 = vunpack.c.l.b16 %v1133
      %v1332 = vunpack.c.h.b16 %v1133
      %v1333 = vunpack.c.l.b16 %v1134
      %v1334 = vunpack.c.l.b16 %v1135
      %v1335 = vunpack.c.h.b16 %v1135
      %v1336 = vunpack.c.l.b16 %v1136
      %v1337 = vunpack.c.l.b16 %v1137
      %v1338 = vunpack.c.h.b16 %v1137
      %v1339 = vunpack.c.l.b16 %v1138
      %v1340 = vunpack.c.l.b16 %v1139
      %v1341 = vunpack.c.h.b16 %v1139
      %v1342 = vunpack.c.l.b16 %v1140
      %v1343 = vunpack.c.l.b16 %v1141
      %v1344 = vunpack.c.h.b16 %v1141
      %v1345 = vunpack.c.l.b16 %v1142
      %v1346 = vunpack.c.l.b16 %v1143
      %v1347 = vunpack.c.h.b16 %v1143
      %v1348 = vunpack.c.l.b16 %v1144
      %v1349 = vunpack.c.l.b16 %v1145
      %v1350 = vunpack.c.h.b16 %v1145
      %v1351 = vunpack.c.l.b16 %v1146
      %v1352 = vunpack.c.l.b16 %v1147
      %v1353 = vunpack.c.h.b16 %v1147
      %v1354 = vunpack.c.l.b16 %v1148
      %v1355 = vunpack.c.l.b16 %v1149
      %v1356 = vunpack.c.h.b16 %v1149
      %v1357 = vunpack.c.l.b16 %v1150
      %v1358 = vunpack.c.l.b16 %v1151
      %v1359 = vunpack.c.h.b16 %v1151
      %v1360 = vunpack.c.l.b16 %v1152
      %v1361 = vunpack.c.l.b16 %v1153
      %v1362 = vunpack.c.h.b16 %v1153
      %v1363 = vunpack.c.l.b16 %v1154
      %v1364 = vpack.c.b16 %v1271, %v1268
      %v1365 = vpack.c.b16 %v1272, %v1269
      %v1366 = vpack.c.b16 %v1273, %v1270
      %v1367 = vpack.c.b16 %v1277, %v1274
      %v1368 = vpack.c.b16 %v1278, %v1275
      %v1369 = vpack.c.b16 %v1279, %v1276
      %v1370 = vpack.c.b16 %v1283, %v1280
      %v1371 = vpack.c.b16 %v1284, %v1281
      %v1372 = vpack.c.b16 %v1285, %v1282
      %v1373 = vpack.c.b16 %v1289, %v1286
      %v1374 = vpack.c.b16 %v1290, %v1287
      %v1375 = vpack.c.b16 %v1291, %v1288
      %v1376 = vpack.c.b16 %v1295, %v1292
      %v1377 = vpack.c.b16 %v1296, %v1293
      %v1378 = vpack.c.b16 %v1297, %v1294
      %v1379 = vpack.c.b16 %v1301, %v1298
      %v1380 = vpack.c.b16 %v1302, %v1299
      %v1381 = vpack.c.b16 %v1303, %v1300
      %v1382 = vpack.c.b16 %v1307, %v1304
      %v1383 = vpack.c.b16 %v1308, %v1305
      %v1384 = vpack.c.b16 %v1309, %v1306
      %v1385 = vpack.c.b16 %v1313, %v1310
      %v1386 = vpack.c.b16 %v1314, %v1311
      %v1387 = vpack.c.b16 %v1315, %v1312
      %v1388 = vpack.c.b16 %v1319, %v1316
      %v1389 = vpack.c.b16 %v1320, %v1317
      %v1390 = vpack.c.b16 %v1321, %v1318
      %v1391 = vpack.c.b16 %v1325, %v1322
      %v1392 = vpack.c.b16 %v1326, %v1323
      %v1393 = vpack.c.b16 %v1327, %v1324
      %v1394 = vpack.c.b16 %v1331, %v1328
      %v1395 = vpack.c.b16 %v1332, %v1329
      %v1396 = vpack.c.b16 %v1333, %v1330
      %v1397 = vpack.c.b16 %v1337, %v1334
      %v1398 = vpack.c.b16 %v1338, %v1335
      %v1399 = vpack.c.b16 %v1339, %v1336
      %v1400 = vpack.c.b16 %v1343, %v1340
      %v1401 = vpack.c.b16 %v1344, %v1341
      %v1402 = vpack.c.b16 %v1345, %v1342
      %v1403 = vpack.c.b16 %v1349, %v1346
      %v1404 = vpack.c.b16 %v1350, %v1347
      %v1405 = vpack.c.b16 %v1351, %v1348
      %v1406 = vpack.c.b16 %v1355, %v1352
      %v1407 = vpack.c.b16 %v1356, %v1353
      %v1408 = vpack.c.b16 %v1357, %v1354
      %v1409 = vpack.c.b16 %v1361, %v1358
      %v1410 = vpack.c.b16 %v1362, %v1359
      %v1411 = vpack.c.b16 %v1363, %v1360
      %v1508 = vunpack.c.l.b16 %v1156
      %v1509 = vunpack.c.l.b16 %v1157
      %v1510 = vunpack.c.l.b16 %v1158
      %v1511 = vunpack.c.l.b16 %v1159
      %v1512 = vunpack.c.l.b16 %v1160
      %v1513 = vunpack.c.l.b16 %v1161
      %v1514 = vunpack.c.l.b16 %v1162
      %v1515 = vunpack.c.l.b16 %v1163
      %v1516 = vunpack.c.l.b16 %v1164
      %v1517 = vunpack.c.l.b16 %v1165
      %v1518 = vunpack.c.l.b16 %v1166
      %v1519 = vunpack.c.l.b16 %v1167
      %v1520 = vunpack.c.l.b16 %v1168
      %v1521 = vunpack.c.l.b16 %v1169
      %v1522 = vunpack.c.l.b16 %v1170
      %v1523 = vunpack.c.l.b16 %v1171
      %v1524 = vunpack.c.l.b16 %v1172
      %v1525 = vunpack.c.l.b16 %v1173
      %v1526 = vunpack.c.l.b16 %v1174
      %v1527 = vunpack.c.l.b16 %v1175
      %v1528 = vunpack.c.l.b16 %v1176
      %v1529 = vunpack.c.l.b16 %v1177
      %v1530 = vunpack.c.l.b16 %v1178
      %v1531 = vunpack.c.l.b16 %v1179
      %v1532 = vunpack.c.l.b16 %v1180
      %v1533 = vunpack.c.l.b16 %v1181
      %v1534 = vunpack.c.l.b16 %v1182
      %v1535 = vunpack.c.l.b16 %v1183
      %v1536 = vunpack.c.l.b16 %v1184
      %v1537 = vunpack.c.l.b16 %v1185
      %v1538 = vunpack.c.l.b16 %v1186
      %v1539 = vunpack.c.l.b16 %v1187
      %v1540 = vunpack.c.l.b16 %v1188
      %v1541 = vunpack.c.l.b16 %v1189
      %v1542 = vunpack.c.l.b16 %v1190
      %v1543 = vunpack.c.l.b16 %v1191
      %v1544 = vunpack.c.l.b16 %v1192
      %v1545 = vunpack.c.l.b16 %v1193
      %v1546 = vunpack.c.l.b16 %v1194
      %v1547 = vunpack.c.l.b16 %v1195
      %v1548 = vunpack.c.l.b16 %v1196
      %v1549 = vunpack.c.l.b16 %v1197
      %v1550 = vunpack.c.l.b16 %v1198
      %v1551 = vunpack.c.l.b16 %v1199
      %v1552 = vunpack.c.l.b16 %v1200
      %v1553 = vunpack.c.l.b16 %v1201
      %v1554 = vunpack.c.l.b16 %v1202
      %v1555 = vunpack.c.l.b16 %v1203
      %v1556 = vpack.c.b16 %v1509, %v1508
      %v1557 = vpack.c.b16 %v1511, %v1510
      %v1558 = vpack.c.b16 %v1513, %v1512
      %v1559 = vpack.c.b16 %v1515, %v1514
      %v1560 = vpack.c.b16 %v1517, %v1516
      %v1561 = vpack.c.b16 %v1519, %v1518
      %v1562 = vpack.c.b16 %v1521, %v1520
      %v1563 = vpack.c.b16 %v1523, %v1522
      %v1564 = vpack.c.b16 %v1525, %v1524
      %v1565 = vpack.c.b16 %v1527, %v1526
      %v1566 = vpack.c.b16 %v1529, %v1528
      %v1567 = vpack.c.b16 %v1531, %v1530
      %v1568 = vpack.c.b16 %v1533, %v1532
      %v1569 = vpack.c.b16 %v1535, %v1534
      %v1570 = vpack.c.b16 %v1537, %v1536
      %v1571 = vpack.c.b16 %v1539, %v1538
      %v1572 = vpack.c.b16 %v1541, %v1540
      %v1573 = vpack.c.b16 %v1543, %v1542
      %v1574 = vpack.c.b16 %v1545, %v1544
      %v1575 = vpack.c.b16 %v1547, %v1546
      %v1576 = vpack.c.b16 %v1549, %v1548
      %v1577 = vpack.c.b16 %v1551, %v1550
      %v1578 = vpack.c.b16 %v1553, %v1552
      %v1579 = vpack.c.b16 %v1555, %v1554
      %1604 = vmatpush.bf16.msra.mxu0 %v1563
      %1605 = vmatpush.bf16.msra.mxu0 %v1562
      %1606 = vmatpush.bf16.msra.mxu0 %v1561
      %1607 = vmatpush.bf16.msra.mxu0 %v1560
      %1608 = vmatpush.bf16.msra.mxu0 %v1559
      %1609 = vmatpush.bf16.msra.mxu0 %v1558
      %1610 = vmatpush.bf16.msra.mxu0 %v1557
      %1611 = vmatpush.bf16.msra.mxu0 %v1556
      %1612 = vmatmul.bf16.gmra.mxu0 %v1364
      %v1613 = vpop.f32.mrf.mxu0
      %v1614 = vadd.f32 0.0, %v1613
      %v1615 = vpop.f32.mrf.mxu0
      %v1616 = vadd.f32 0.0, %v1615
      %1617 = vmatmul.bf16.gmra.mxu0 %v1367
      %v1618 = vpop.f32.mrf.mxu0
      %v1619 = vadd.f32 0.0, %v1618
      %v1620 = vpop.f32.mrf.mxu0
      %v1621 = vadd.f32 0.0, %v1620
      %1622 = vmatmul.bf16.gmra.mxu0 %v1370
      %v1623 = vpop.f32.mrf.mxu0
      %v1624 = vadd.f32 0.0, %v1623
      %v1625 = vpop.f32.mrf.mxu0
      %v1626 = vadd.f32 0.0, %v1625
      %1627 = vmatmul.bf16.gmra.mxu0 %v1373
      %v1628 = vpop.f32.mrf.mxu0
      %v1629 = vadd.f32 0.0, %v1628
      %v1630 = vpop.f32.mrf.mxu0
      %v1631 = vadd.f32 0.0, %v1630
      %1632 = vmatmul.bf16.gmra.mxu0 %v1376
      %v1633 = vpop.f32.mrf.mxu0
      %v1634 = vadd.f32 0.0, %v1633
      %v1635 = vpop.f32.mrf.mxu0
      %v1636 = vadd.f32 0.0, %v1635
      %1637 = vmatmul.bf16.gmra.mxu0 %v1379
      %v1638 = vpop.f32.mrf.mxu0
      %v1639 = vadd.f32 0.0, %v1638
      %v1640 = vpop.f32.mrf.mxu0
      %v1641 = vadd.f32 0.0, %v1640
      %1642 = vmatmul.bf16.gmra.mxu0 %v1382
      %v1643 = vpop.f32.mrf.mxu0
      %v1644 = vadd.f32 0.0, %v1643
      %v1645 = vpop.f32.mrf.mxu0
      %v1646 = vadd.f32 0.0, %v1645
      %1647 = vmatmul.bf16.gmra.mxu0 %v1385
      %v1648 = vpop.f32.mrf.mxu0
      %v1649 = vadd.f32 0.0, %v1648
      %v1650 = vpop.f32.mrf.mxu0
      %v1651 = vadd.f32 0.0, %v1650
      %1652 = vmatmul.bf16.gmra.mxu0 %v1388
      %v1653 = vpop.f32.mrf.mxu0
      %v1654 = vadd.f32 0.0, %v1653
      %v1655 = vpop.f32.mrf.mxu0
      %v1656 = vadd.f32 0.0, %v1655
      %1657 = vmatmul.bf16.gmra.mxu0 %v1391
      %v1658 = vpop.f32.mrf.mxu0
      %v1659 = vadd.f32 0.0, %v1658
      %v1660 = vpop.f32.mrf.mxu0
      %v1661 = vadd.f32 0.0, %v1660
      %1662 = vmatmul.bf16.gmra.mxu0 %v1394
      %v1663 = vpop.f32.mrf.mxu0
      %v1664 = vadd.f32 0.0, %v1663
      %v1665 = vpop.f32.mrf.mxu0
      %v1666 = vadd.f32 0.0, %v1665
      %1667 = vmatmul.bf16.gmra.mxu0 %v1397
      %v1668 = vpop.f32.mrf.mxu0
      %v1669 = vadd.f32 0.0, %v1668
      %v1670 = vpop.f32.mrf.mxu0
      %v1671 = vadd.f32 0.0, %v1670
      %1672 = vmatmul.bf16.gmra.mxu0 %v1400
      %v1673 = vpop.f32.mrf.mxu0
      %v1674 = vadd.f32 0.0, %v1673
      %v1675 = vpop.f32.mrf.mxu0
      %v1676 = vadd.f32 0.0, %v1675
      %1677 = vmatmul.bf16.gmra.mxu0 %v1403
      %v1678 = vpop.f32.mrf.mxu0
      %v1679 = vadd.f32 0.0, %v1678
      %v1680 = vpop.f32.mrf.mxu0
      %v1681 = vadd.f32 0.0, %v1680
      %1682 = vmatmul.bf16.gmra.mxu0 %v1406
      %v1683 = vpop.f32.mrf.mxu0
      %v1684 = vadd.f32 0.0, %v1683
      %v1685 = vpop.f32.mrf.mxu0
      %v1686 = vadd.f32 0.0, %v1685
      %1687 = vmatmul.bf16.gmra.mxu0 %v1409
      %v1688 = vpop.f32.mrf.mxu0
      %v1689 = vadd.f32 0.0, %v1688
      %v1690 = vpop.f32.mrf.mxu0
      %v1691 = vadd.f32 0.0, %v1690
      %1692 = vdwg.mxu0
      %1693 = vmatpush.bf16.msra.mxu0 %v1571
      %1694 = vmatpush.bf16.msra.mxu0 %v1570
      %1695 = vmatpush.bf16.msra.mxu0 %v1569
      %1696 = vmatpush.bf16.msra.mxu0 %v1568
      %1697 = vmatpush.bf16.msra.mxu0 %v1567
      %1698 = vmatpush.bf16.msra.mxu0 %v1566
      %1699 = vmatpush.bf16.msra.mxu0 %v1565
      %1700 = vmatpush.bf16.msra.mxu0 %v1564
      %1701 = vmatmul.bf16.gmra.mxu0 %v1365
      %v1702 = vpop.f32.mrf.mxu0
      %v1703 = vadd.f32 %v1614, %v1702
      %v1704 = vpop.f32.mrf.mxu0
      %v1705 = vadd.f32 %v1616, %v1704
      %1706 = vmatmul.bf16.gmra.mxu0 %v1368
      %v1707 = vpop.f32.mrf.mxu0
      %v1708 = vadd.f32 %v1619, %v1707
      %v1709 = vpop.f32.mrf.mxu0
      %v1710 = vadd.f32 %v1621, %v1709
      %1711 = vmatmul.bf16.gmra.mxu0 %v1371
      %v1712 = vpop.f32.mrf.mxu0
      %v1713 = vadd.f32 %v1624, %v1712
      %v1714 = vpop.f32.mrf.mxu0
      %v1715 = vadd.f32 %v1626, %v1714
      %1716 = vmatmul.bf16.gmra.mxu0 %v1374
      %v1717 = vpop.f32.mrf.mxu0
      %v1718 = vadd.f32 %v1629, %v1717
      %v1719 = vpop.f32.mrf.mxu0
      %v1720 = vadd.f32 %v1631, %v1719
      %1721 = vmatmul.bf16.gmra.mxu0 %v1377
      %v1722 = vpop.f32.mrf.mxu0
      %v1723 = vadd.f32 %v1634, %v1722
      %v1724 = vpop.f32.mrf.mxu0
      %v1725 = vadd.f32 %v1636, %v1724
      %1726 = vmatmul.bf16.gmra.mxu0 %v1380
      %v1727 = vpop.f32.mrf.mxu0
      %v1728 = vadd.f32 %v1639, %v1727
      %v1729 = vpop.f32.mrf.mxu0
      %v1730 = vadd.f32 %v1641, %v1729
      %1731 = vmatmul.bf16.gmra.mxu0 %v1383
      %v1732 = vpop.f32.mrf.mxu0
      %v1733 = vadd.f32 %v1644, %v1732
      %v1734 = vpop.f32.mrf.mxu0
      %v1735 = vadd.f32 %v1646, %v1734
      %1736 = vmatmul.bf16.gmra.mxu0 %v1386
      %v1737 = vpop.f32.mrf.mxu0
      %v1738 = vadd.f32 %v1649, %v1737
      %v1739 = vpop.f32.mrf.mxu0
      %v1740 = vadd.f32 %v1651, %v1739
      %1741 = vmatmul.bf16.gmra.mxu0 %v1389
      %v1742 = vpop.f32.mrf.mxu0
      %v1743 = vadd.f32 %v1654, %v1742
      %v1744 = vpop.f32.mrf.mxu0
      %v1745 = vadd.f32 %v1656, %v1744
      %1746 = vmatmul.bf16.gmra.mxu0 %v1392
      %v1747 = vpop.f32.mrf.mxu0
      %v1748 = vadd.f32 %v1659, %v1747
      %v1749 = vpop.f32.mrf.mxu0
      %v1750 = vadd.f32 %v1661, %v1749
      %1751 = vmatmul.bf16.gmra.mxu0 %v1395
      %v1752 = vpop.f32.mrf.mxu0
      %v1753 = vadd.f32 %v1664, %v1752
      %v1754 = vpop.f32.mrf.mxu0
      %v1755 = vadd.f32 %v1666, %v1754
      %1756 = vmatmul.bf16.gmra.mxu0 %v1398
      %v1757 = vpop.f32.mrf.mxu0
      %v1758 = vadd.f32 %v1669, %v1757
      %v1759 = vpop.f32.mrf.mxu0
      %v1760 = vadd.f32 %v1671, %v1759
      %1761 = vmatmul.bf16.gmra.mxu0 %v1401
      %v1762 = vpop.f32.mrf.mxu0
      %v1763 = vadd.f32 %v1674, %v1762
      %v1764 = vpop.f32.mrf.mxu0
      %v1765 = vadd.f32 %v1676, %v1764
      %1766 = vmatmul.bf16.gmra.mxu0 %v1404
      %v1767 = vpop.f32.mrf.mxu0
      %v1768 = vadd.f32 %v1679, %v1767
      %v1769 = vpop.f32.mrf.mxu0
      %v1770 = vadd.f32 %v1681, %v1769
      %1771 = vmatmul.bf16.gmra.mxu0 %v1407
      %v1772 = vpop.f32.mrf.mxu0
      %v1773 = vadd.f32 %v1684, %v1772
      %v1774 = vpop.f32.mrf.mxu0
      %v1775 = vadd.f32 %v1686, %v1774
      %1776 = vmatmul.bf16.gmra.mxu0 %v1410
      %v1777 = vpop.f32.mrf.mxu0
      %v1778 = vadd.f32 %v1689, %v1777
      %v1779 = vpop.f32.mrf.mxu0
      %v1780 = vadd.f32 %v1691, %v1779
      %1781 = vdwg.mxu0
      %1782 = vmatpush.bf16.msra.mxu0 %v1579
      %1783 = vmatpush.bf16.msra.mxu0 %v1578
      %1784 = vmatpush.bf16.msra.mxu0 %v1577
      %1785 = vmatpush.bf16.msra.mxu0 %v1576
      %1786 = vmatpush.bf16.msra.mxu0 %v1575
      %1787 = vmatpush.bf16.msra.mxu0 %v1574
      %1788 = vmatpush.bf16.msra.mxu0 %v1573
      %1789 = vmatpush.bf16.msra.mxu0 %v1572
      %1790 = vmatmul.bf16.gmra.mxu0 %v1366
      %v1791 = vpop.f32.mrf.mxu0
      %v1792 = vadd.f32 %v1703, %v1791
      %v1793 = vpop.f32.mrf.mxu0
      %v1794 = vadd.f32 %v1705, %v1793
      %1795 = vmatmul.bf16.gmra.mxu0 %v1369
      %v1796 = vpop.f32.mrf.mxu0
      %v1797 = vadd.f32 %v1708, %v1796
      %v1798 = vpop.f32.mrf.mxu0
      %v1799 = vadd.f32 %v1710, %v1798
      %1800 = vmatmul.bf16.gmra.mxu0 %v1372
      %v1801 = vpop.f32.mrf.mxu0
      %v1802 = vadd.f32 %v1713, %v1801
      %v1803 = vpop.f32.mrf.mxu0
      %v1804 = vadd.f32 %v1715, %v1803
      %1805 = vmatmul.bf16.gmra.mxu0 %v1375
      %v1806 = vpop.f32.mrf.mxu0
      %v1807 = vadd.f32 %v1718, %v1806
      %v1808 = vpop.f32.mrf.mxu0
      %v1809 = vadd.f32 %v1720, %v1808
      %1810 = vmatmul.bf16.gmra.mxu0 %v1378
      %v1811 = vpop.f32.mrf.mxu0
      %v1812 = vadd.f32 %v1723, %v1811
      %v1813 = vpop.f32.mrf.mxu0
      %v1814 = vadd.f32 %v1725, %v1813
      %1815 = vmatmul.bf16.gmra.mxu0 %v1381
      %v1816 = vpop.f32.mrf.mxu0
      %v1817 = vadd.f32 %v1728, %v1816
      %v1818 = vpop.f32.mrf.mxu0
      %v1819 = vadd.f32 %v1730, %v1818
      %1820 = vmatmul.bf16.gmra.mxu0 %v1384
      %v1821 = vpop.f32.mrf.mxu0
      %v1822 = vadd.f32 %v1733, %v1821
      %v1823 = vpop.f32.mrf.mxu0
      %v1824 = vadd.f32 %v1735, %v1823
      %1825 = vmatmul.bf16.gmra.mxu0 %v1387
      %v1826 = vpop.f32.mrf.mxu0
      %v1827 = vadd.f32 %v1738, %v1826
      %v1828 = vpop.f32.mrf.mxu0
      %v1829 = vadd.f32 %v1740, %v1828
      %1830 = vmatmul.bf16.gmra.mxu0 %v1390
      %v1831 = vpop.f32.mrf.mxu0
      %v1832 = vadd.f32 %v1743, %v1831
      %v1833 = vpop.f32.mrf.mxu0
      %v1834 = vadd.f32 %v1745, %v1833
      %1835 = vmatmul.bf16.gmra.mxu0 %v1393
      %v1836 = vpop.f32.mrf.mxu0
      %v1837 = vadd.f32 %v1748, %v1836
      %v1838 = vpop.f32.mrf.mxu0
      %v1839 = vadd.f32 %v1750, %v1838
      %1840 = vmatmul.bf16.gmra.mxu0 %v1396
      %v1841 = vpop.f32.mrf.mxu0
      %v1842 = vadd.f32 %v1753, %v1841
      %v1843 = vpop.f32.mrf.mxu0
      %v1844 = vadd.f32 %v1755, %v1843
      %1845 = vmatmul.bf16.gmra.mxu0 %v1399
      %v1846 = vpop.f32.mrf.mxu0
      %v1847 = vadd.f32 %v1758, %v1846
      %v1848 = vpop.f32.mrf.mxu0
      %v1849 = vadd.f32 %v1760, %v1848
      %1850 = vmatmul.bf16.gmra.mxu0 %v1402
      %v1851 = vpop.f32.mrf.mxu0
      %v1852 = vadd.f32 %v1763, %v1851
      %v1853 = vpop.f32.mrf.mxu0
      %v1854 = vadd.f32 %v1765, %v1853
      %1855 = vmatmul.bf16.gmra.mxu0 %v1405
      %v1856 = vpop.f32.mrf.mxu0
      %v1857 = vadd.f32 %v1768, %v1856
      %v1858 = vpop.f32.mrf.mxu0
      %v1859 = vadd.f32 %v1770, %v1858
      %1860 = vmatmul.bf16.gmra.mxu0 %v1408
      %v1861 = vpop.f32.mrf.mxu0
      %v1862 = vadd.f32 %v1773, %v1861
      %v1863 = vpop.f32.mrf.mxu0
      %v1864 = vadd.f32 %v1775, %v1863
      %1865 = vmatmul.bf16.gmra.mxu0 %v1411
      %v1866 = vpop.f32.mrf.mxu0
      %v1867 = vadd.f32 %v1778, %v1866
      %v1868 = vpop.f32.mrf.mxu0
      %v1869 = vadd.f32 %v1780, %v1868
      %1870 = vdwg.mxu0
      %v1871 = vadd.f32 %v1059, %v1792
      %v1872 = vadd.f32 %v1060, %v1794
      %v1873 = vadd.f32 %v1061, %v1797
      %v1874 = vadd.f32 %v1062, %v1799
      %v1875 = vadd.f32 %v1063, %v1802
      %v1876 = vadd.f32 %v1064, %v1804
      %v1877 = vadd.f32 %v1065, %v1807
      %v1878 = vadd.f32 %v1066, %v1809
      %v1879 = vadd.f32 %v1067, %v1812
      %v1880 = vadd.f32 %v1068, %v1814
      %v1881 = vadd.f32 %v1069, %v1817
      %v1882 = vadd.f32 %v1070, %v1819
      %v1883 = vadd.f32 %v1071, %v1822
      %v1884 = vadd.f32 %v1072, %v1824
      %v1885 = vadd.f32 %v1073, %v1827
      %v1886 = vadd.f32 %v1074, %v1829
      %v1887 = vadd.f32 %v1075, %v1832
      %v1888 = vadd.f32 %v1076, %v1834
      %v1889 = vadd.f32 %v1077, %v1837
      %v1890 = vadd.f32 %v1078, %v1839
      %v1891 = vadd.f32 %v1079, %v1842
      %v1892 = vadd.f32 %v1080, %v1844
      %v1893 = vadd.f32 %v1081, %v1847
      %v1894 = vadd.f32 %v1082, %v1849
      %v1895 = vadd.f32 %v1083, %v1852
      %v1896 = vadd.f32 %v1084, %v1854
      %v1897 = vadd.f32 %v1085, %v1857
      %v1898 = vadd.f32 %v1086, %v1859
      %v1899 = vadd.f32 %v1087, %v1862
      %v1900 = vadd.f32 %v1088, %v1864
      %v1901 = vadd.f32 %v1089, %v1867
      %v1902 = vadd.f32 %v1090, %v1869
      %1903 = vst [vmem:[#allocation2] sm:$0xff] %v1871
      %1904 = vst [vmem:[#allocation2 + $0x8] sm:$0xff] %v1872
      %1905 = vst [vmem:[#allocation2 + $0x10] sm:$0xff] %v1873
      %1906 = vst [vmem:[#allocation2 + $0x18] sm:$0xff] %v1874
      %1907 = vst [vmem:[#allocation2 + $0x20] sm:$0xff] %v1875
      %1908 = vst [vmem:[#allocation2 + $0x28] sm:$0xff] %v1876
      %1909 = vst [vmem:[#allocation2 + $0x30] sm:$0xff] %v1877
      %1910 = vst [vmem:[#allocation2 + $0x38] sm:$0xff] %v1878
      %1911 = vst [vmem:[#allocation2 + $0x40] sm:$0xff] %v1879
      %1912 = vst [vmem:[#allocation2 + $0x48] sm:$0xff] %v1880
      %1913 = vst [vmem:[#allocation2 + $0x50] sm:$0xff] %v1881
      %1914 = vst [vmem:[#allocation2 + $0x58] sm:$0xff] %v1882
      %1915 = vst [vmem:[#allocation2 + $0x60] sm:$0xff] %v1883
      %1916 = vst [vmem:[#allocation2 + $0x68] sm:$0xff] %v1884
      %1917 = vst [vmem:[#allocation2 + $0x70] sm:$0xff] %v1885
      %1918 = vst [vmem:[#allocation2 + $0x78] sm:$0xff] %v1886
      %1919 = vst [vmem:[#allocation2 + $0x80] sm:$0xff] %v1887
      %1920 = vst [vmem:[#allocation2 + $0x88] sm:$0xff] %v1888
      %1921 = vst [vmem:[#allocation2 + $0x90] sm:$0xff] %v1889
      %1922 = vst [vmem:[#allocation2 + $0x98] sm:$0xff] %v1890
      %1923 = vst [vmem:[#allocation2 + $0xa0] sm:$0xff] %v1891
      %1924 = vst [vmem:[#allocation2 + $0xa8] sm:$0xff] %v1892
      %1925 = vst [vmem:[#allocation2 + $0xb0] sm:$0xff] %v1893
      %1926 = vst [vmem:[#allocation2 + $0xb8] sm:$0xff] %v1894
      %1927 = vst [vmem:[#allocation2 + $0xc0] sm:$0xff] %v1895
      %1928 = vst [vmem:[#allocation2 + $0xc8] sm:$0xff] %v1896
      %1929 = vst [vmem:[#allocation2 + $0xd0] sm:$0xff] %v1897
      %1930 = vst [vmem:[#allocation2 + $0xd8] sm:$0xff] %v1898
      %1931 = vst [vmem:[#allocation2 + $0xe0] sm:$0xff] %v1899
      %1932 = vst [vmem:[#allocation2 + $0xe8] sm:$0xff] %v1900
      %1933 = vst [vmem:[#allocation2 + $0xf0] sm:$0xff] %v1901
      %1934 = vst [vmem:[#allocation2 + $0xf8] sm:$0xff] %v1902
      %v1935 = vld [vmem:[#allocation2] sm:$0xff]
      %v1936 = vld [vmem:[#allocation2 + $0x8] sm:$0xff]
      %v1937 = vld [vmem:[#allocation2 + $0x10] sm:$0xff]
      %v1938 = vld [vmem:[#allocation2 + $0x18] sm:$0xff]
      %v1939 = vld [vmem:[#allocation2 + $0x20] sm:$0xff]
      %v1940 = vld [vmem:[#allocation2 + $0x28] sm:$0xff]
      %v1941 = vld [vmem:[#allocation2 + $0x30] sm:$0xff]
      %v1942 = vld [vmem:[#allocation2 + $0x38] sm:$0xff]
      %v1943 = vld [vmem:[#allocation2 + $0x40] sm:$0xff]
      %v1944 = vld [vmem:[#allocation2 + $0x48] sm:$0xff]
      %v1945 = vld [vmem:[#allocation2 + $0x50] sm:$0xff]
      %v1946 = vld [vmem:[#allocation2 + $0x58] sm:$0xff]
      %v1947 = vld [vmem:[#allocation2 + $0x60] sm:$0xff]
      %v1948 = vld [vmem:[#allocation2 + $0x68] sm:$0xff]
      %v1949 = vld [vmem:[#allocation2 + $0x70] sm:$0xff]
      %v1950 = vld [vmem:[#allocation2 + $0x78] sm:$0xff]
      %v1951 = vld [vmem:[#allocation2 + $0x80] sm:$0xff]
      %v1952 = vld [vmem:[#allocation2 + $0x88] sm:$0xff]
      %v1953 = vld [vmem:[#allocation2 + $0x90] sm:$0xff]
      %v1954 = vld [vmem:[#allocation2 + $0x98] sm:$0xff]
      %v1955 = vld [vmem:[#allocation2 + $0xa0] sm:$0xff]
      %v1956 = vld [vmem:[#allocation2 + $0xa8] sm:$0xff]
      %v1957 = vld [vmem:[#allocation2 + $0xb0] sm:$0xff]
      %v1958 = vld [vmem:[#allocation2 + $0xb8] sm:$0xff]
      %v1959 = vld [vmem:[#allocation2 + $0xc0] sm:$0xff]
      %v1960 = vld [vmem:[#allocation2 + $0xc8] sm:$0xff]
      %v1961 = vld [vmem:[#allocation2 + $0xd0] sm:$0xff]
      %v1962 = vld [vmem:[#allocation2 + $0xd8] sm:$0xff]
      %v1963 = vld [vmem:[#allocation2 + $0xe0] sm:$0xff]
      %v1964 = vld [vmem:[#allocation2 + $0xe8] sm:$0xff]
      %v1965 = vld [vmem:[#allocation2 + $0xf0] sm:$0xff]
      %v1966 = vld [vmem:[#allocation2 + $0xf8] sm:$0xff]
      %v1967 = vld [vmem:[%s233 + $0x30] sm:$0xff]
      %v1968 = vld [vmem:[%s233 + $0x38] sm:$0xf]
      %v1969 = vld [vmem:[%s233 + $0x3c] sm:$0xff]
      %v1970 = vld [vmem:[%s233 + $0x44] sm:$0xf]
      %v1971 = vld [vmem:[%s233 + $0x48] sm:$0xff]
      %v1972 = vld [vmem:[%s233 + $0x50] sm:$0xf]
      %v1973 = vld [vmem:[%s233 + $0x54] sm:$0xff]
      %v1974 = vld [vmem:[%s233 + $0x5c] sm:$0xf]
      %v1975 = vld [vmem:[%s233 + $0x60] sm:$0xff]
      %v1976 = vld [vmem:[%s233 + $0x68] sm:$0xf]
      %v1977 = vld [vmem:[%s233 + $0x6c] sm:$0xff]
      %v1978 = vld [vmem:[%s233 + $0x74] sm:$0xf]
      %v1979 = vld [vmem:[%s233 + $0x78] sm:$0xff]
      %v1980 = vld [vmem:[%s233 + $0x80] sm:$0xf]
      %v1981 = vld [vmem:[%s233 + $0x84] sm:$0xff]
      %v1982 = vld [vmem:[%s233 + $0x8c] sm:$0xf]
      %v1983 = vld [vmem:[%s233 + $0x90] sm:$0xff]
      %v1984 = vld [vmem:[%s233 + $0x98] sm:$0xf]
      %v1985 = vld [vmem:[%s233 + $0x9c] sm:$0xff]
      %v1986 = vld [vmem:[%s233 + $0xa4] sm:$0xf]
      %v1987 = vld [vmem:[%s233 + $0xa8] sm:$0xff]
      %v1988 = vld [vmem:[%s233 + $0xb0] sm:$0xf]
      %v1989 = vld [vmem:[%s233 + $0xb4] sm:$0xff]
      %v1990 = vld [vmem:[%s233 + $0xbc] sm:$0xf]
      %v1991 = vld [vmem:[%s233 + $0xc0] sm:$0xff]
      %v1992 = vld [vmem:[%s233 + $0xc8] sm:$0xf]
      %v1993 = vld [vmem:[%s233 + $0xcc] sm:$0xff]
      %v1994 = vld [vmem:[%s233 + $0xd4] sm:$0xf]
      %v1995 = vld [vmem:[%s233 + $0xd8] sm:$0xff]
      %v1996 = vld [vmem:[%s233 + $0xe0] sm:$0xf]
      %v1997 = vld [vmem:[%s233 + $0xe4] sm:$0xff]
      %v1998 = vld [vmem:[%s233 + $0xec] sm:$0xf]
      %v1999 = vld [vmem:[%s233 + $0xf0] sm:$0xff]
      %v2000 = vld [vmem:[%s233 + $0xf8] sm:$0xf]
      %v2001 = vld [vmem:[%s233 + $0xfc] sm:$0xff]
      %v2002 = vld [vmem:[%s233 + $0x104] sm:$0xf]
      %v2003 = vld [vmem:[%s233 + $0x108] sm:$0xff]
      %v2004 = vld [vmem:[%s233 + $0x110] sm:$0xf]
      %v2005 = vld [vmem:[%s233 + $0x114] sm:$0xff]
      %v2006 = vld [vmem:[%s233 + $0x11c] sm:$0xf]
      %v2007 = vld [vmem:[%s233 + $0x120] sm:$0xff]
      %v2008 = vld [vmem:[%s233 + $0x128] sm:$0xf]
      %v2009 = vld [vmem:[%s233 + $0x12c] sm:$0xff]
      %v2010 = vld [vmem:[%s233 + $0x134] sm:$0xf]
      %v2011 = vld [vmem:[%s233 + $0x138] sm:$0xff]
      %v2012 = vld [vmem:[%s233 + $0x140] sm:$0xf]
      %v2013 = vld [vmem:[%s233 + $0x144] sm:$0xff]
      %v2014 = vld [vmem:[%s233 + $0x14c] sm:$0xf]
      %v2015 = vld [vmem:[%s233 + $0x150] sm:$0xff]
      %v2016 = vld [vmem:[%s233 + $0x158] sm:$0xf]
      %v2017 = vld [vmem:[%s233 + $0x15c] sm:$0xff]
      %v2018 = vld [vmem:[%s233 + $0x164] sm:$0xf]
      %v2019 = vld [vmem:[%s233 + $0x168] sm:$0xff]
      %v2020 = vld [vmem:[%s233 + $0x170] sm:$0xf]
      %v2021 = vld [vmem:[%s233 + $0x174] sm:$0xff]
      %v2022 = vld [vmem:[%s233 + $0x17c] sm:$0xf]
      %v2023 = vld [vmem:[%s233 + $0x180] sm:$0xff]
      %v2024 = vld [vmem:[%s233 + $0x188] sm:$0xf]
      %v2025 = vld [vmem:[%s233 + $0x18c] sm:$0xff]
      %v2026 = vld [vmem:[%s233 + $0x194] sm:$0xf]
      %v2027 = vld [vmem:[%s233 + $0x198] sm:$0xff]
      %v2028 = vld [vmem:[%s233 + $0x1a0] sm:$0xf]
      %v2029 = vld [vmem:[%s233 + $0x1a4] sm:$0xff]
      %v2030 = vld [vmem:[%s233 + $0x1ac] sm:$0xf]
      %s2031 = scalar_lea.vmem %s1, 384
      %v2032 = vld [vmem:[%s2031] sm:$0xf]
      %v2033 = vld [vmem:[%s2031 + $0x4] sm:$0xf]
      %v2034 = vld [vmem:[%s2031 + $0x8] sm:$0xf]
      %v2035 = vld [vmem:[%s2031 + $0xc] sm:$0xf]
      %v2036 = vld [vmem:[%s2031 + $0x10] sm:$0xf]
      %v2037 = vld [vmem:[%s2031 + $0x14] sm:$0xf]
      %v2038 = vld [vmem:[%s2031 + $0x18] sm:$0xf]
      %v2039 = vld [vmem:[%s2031 + $0x1c] sm:$0xf]
      %v2040 = vld [vmem:[%s2031 + $0x20] sm:$0xf]
      %v2041 = vld [vmem:[%s2031 + $0x24] sm:$0xf]
      %v2042 = vld [vmem:[%s2031 + $0x28] sm:$0xf]
      %v2043 = vld [vmem:[%s2031 + $0x2c] sm:$0xf]
      %v2044 = vld [vmem:[%s2031 + $0x30] sm:$0xf]
      %v2045 = vld [vmem:[%s2031 + $0x34] sm:$0xf]
      %v2046 = vld [vmem:[%s2031 + $0x38] sm:$0xf]
      %v2047 = vld [vmem:[%s2031 + $0x3c] sm:$0xf]
      %v2048 = vld [vmem:[%s2031 + $0x40] sm:$0xf]
      %v2049 = vld [vmem:[%s2031 + $0x44] sm:$0xf]
      %v2050 = vld [vmem:[%s2031 + $0x48] sm:$0xf]
      %v2051 = vld [vmem:[%s2031 + $0x4c] sm:$0xf]
      %v2052 = vld [vmem:[%s2031 + $0x50] sm:$0xf]
      %v2053 = vld [vmem:[%s2031 + $0x54] sm:$0xf]
      %v2054 = vld [vmem:[%s2031 + $0x58] sm:$0xf]
      %v2055 = vld [vmem:[%s2031 + $0x5c] sm:$0xf]
      %v2056 = vld [vmem:[%s2031 + $0x60] sm:$0xf]
      %v2057 = vld [vmem:[%s2031 + $0x64] sm:$0xf]
      %v2058 = vld [vmem:[%s2031 + $0x68] sm:$0xf]
      %v2059 = vld [vmem:[%s2031 + $0x6c] sm:$0xf]
      %v2060 = vld [vmem:[%s2031 + $0x70] sm:$0xf]
      %v2061 = vld [vmem:[%s2031 + $0x74] sm:$0xf]
      %v2062 = vld [vmem:[%s2031 + $0x78] sm:$0xf]
      %v2063 = vld [vmem:[%s2031 + $0x7c] sm:$0xf]
      %v2064 = vld [vmem:[%s2031 + $0x80] sm:$0xf]
      %v2065 = vld [vmem:[%s2031 + $0x84] sm:$0xf]
      %v2066 = vld [vmem:[%s2031 + $0x88] sm:$0xf]
      %v2067 = vld [vmem:[%s2031 + $0x8c] sm:$0xf]
      %v2068 = vld [vmem:[%s2031 + $0x90] sm:$0xf]
      %v2069 = vld [vmem:[%s2031 + $0x94] sm:$0xf]
      %v2070 = vld [vmem:[%s2031 + $0x98] sm:$0xf]
      %v2071 = vld [vmem:[%s2031 + $0x9c] sm:$0xf]
      %v2072 = vld [vmem:[%s2031 + $0xa0] sm:$0xf]
      %v2073 = vld [vmem:[%s2031 + $0xa4] sm:$0xf]
      %v2074 = vld [vmem:[%s2031 + $0xa8] sm:$0xf]
      %v2075 = vld [vmem:[%s2031 + $0xac] sm:$0xf]
      %v2076 = vld [vmem:[%s2031 + $0xb0] sm:$0xf]
      %v2077 = vld [vmem:[%s2031 + $0xb4] sm:$0xf]
      %v2078 = vld [vmem:[%s2031 + $0xb8] sm:$0xf]
      %v2079 = vld [vmem:[%s2031 + $0xbc] sm:$0xf]
      %v2144 = vunpack.c.l.b16 %v1967
      %v2145 = vunpack.c.h.b16 %v1967
      %v2146 = vunpack.c.l.b16 %v1968
      %v2147 = vunpack.c.l.b16 %v1969
      %v2148 = vunpack.c.h.b16 %v1969
      %v2149 = vunpack.c.l.b16 %v1970
      %v2150 = vunpack.c.l.b16 %v1971
      %v2151 = vunpack.c.h.b16 %v1971
      %v2152 = vunpack.c.l.b16 %v1972
      %v2153 = vunpack.c.l.b16 %v1973
      %v2154 = vunpack.c.h.b16 %v1973
      %v2155 = vunpack.c.l.b16 %v1974
      %v2156 = vunpack.c.l.b16 %v1975
      %v2157 = vunpack.c.h.b16 %v1975
      %v2158 = vunpack.c.l.b16 %v1976
      %v2159 = vunpack.c.l.b16 %v1977
      %v2160 = vunpack.c.h.b16 %v1977
      %v2161 = vunpack.c.l.b16 %v1978
      %v2162 = vunpack.c.l.b16 %v1979
      %v2163 = vunpack.c.h.b16 %v1979
      %v2164 = vunpack.c.l.b16 %v1980
      %v2165 = vunpack.c.l.b16 %v1981
      %v2166 = vunpack.c.h.b16 %v1981
      %v2167 = vunpack.c.l.b16 %v1982
      %v2168 = vunpack.c.l.b16 %v1983
      %v2169 = vunpack.c.h.b16 %v1983
      %v2170 = vunpack.c.l.b16 %v1984
      %v2171 = vunpack.c.l.b16 %v1985
      %v2172 = vunpack.c.h.b16 %v1985
      %v2173 = vunpack.c.l.b16 %v1986
      %v2174 = vunpack.c.l.b16 %v1987
      %v2175 = vunpack.c.h.b16 %v1987
      %v2176 = vunpack.c.l.b16 %v1988
      %v2177 = vunpack.c.l.b16 %v1989
      %v2178 = vunpack.c.h.b16 %v1989
      %v2179 = vunpack.c.l.b16 %v1990
      %v2180 = vunpack.c.l.b16 %v1991
      %v2181 = vunpack.c.h.b16 %v1991
      %v2182 = vunpack.c.l.b16 %v1992
      %v2183 = vunpack.c.l.b16 %v1993
      %v2184 = vunpack.c.h.b16 %v1993
      %v2185 = vunpack.c.l.b16 %v1994
      %v2186 = vunpack.c.l.b16 %v1995
      %v2187 = vunpack.c.h.b16 %v1995
      %v2188 = vunpack.c.l.b16 %v1996
      %v2189 = vunpack.c.l.b16 %v1997
      %v2190 = vunpack.c.h.b16 %v1997
      %v2191 = vunpack.c.l.b16 %v1998
      %v2192 = vunpack.c.l.b16 %v1999
      %v2193 = vunpack.c.h.b16 %v1999
      %v2194 = vunpack.c.l.b16 %v2000
      %v2195 = vunpack.c.l.b16 %v2001
      %v2196 = vunpack.c.h.b16 %v2001
      %v2197 = vunpack.c.l.b16 %v2002
      %v2198 = vunpack.c.l.b16 %v2003
      %v2199 = vunpack.c.h.b16 %v2003
      %v2200 = vunpack.c.l.b16 %v2004
      %v2201 = vunpack.c.l.b16 %v2005
      %v2202 = vunpack.c.h.b16 %v2005
      %v2203 = vunpack.c.l.b16 %v2006
      %v2204 = vunpack.c.l.b16 %v2007
      %v2205 = vunpack.c.h.b16 %v2007
      %v2206 = vunpack.c.l.b16 %v2008
      %v2207 = vunpack.c.l.b16 %v2009
      %v2208 = vunpack.c.h.b16 %v2009
      %v2209 = vunpack.c.l.b16 %v2010
      %v2210 = vunpack.c.l.b16 %v2011
      %v2211 = vunpack.c.h.b16 %v2011
      %v2212 = vunpack.c.l.b16 %v2012
      %v2213 = vunpack.c.l.b16 %v2013
      %v2214 = vunpack.c.h.b16 %v2013
      %v2215 = vunpack.c.l.b16 %v2014
      %v2216 = vunpack.c.l.b16 %v2015
      %v2217 = vunpack.c.h.b16 %v2015
      %v2218 = vunpack.c.l.b16 %v2016
      %v2219 = vunpack.c.l.b16 %v2017
      %v2220 = vunpack.c.h.b16 %v2017
      %v2221 = vunpack.c.l.b16 %v2018
      %v2222 = vunpack.c.l.b16 %v2019
      %v2223 = vunpack.c.h.b16 %v2019
      %v2224 = vunpack.c.l.b16 %v2020
      %v2225 = vunpack.c.l.b16 %v2021
      %v2226 = vunpack.c.h.b16 %v2021
      %v2227 = vunpack.c.l.b16 %v2022
      %v2228 = vunpack.c.l.b16 %v2023
      %v2229 = vunpack.c.h.b16 %v2023
      %v2230 = vunpack.c.l.b16 %v2024
      %v2231 = vunpack.c.l.b16 %v2025
      %v2232 = vunpack.c.h.b16 %v2025
      %v2233 = vunpack.c.l.b16 %v2026
      %v2234 = vunpack.c.l.b16 %v2027
      %v2235 = vunpack.c.h.b16 %v2027
      %v2236 = vunpack.c.l.b16 %v2028
      %v2237 = vunpack.c.l.b16 %v2029
      %v2238 = vunpack.c.h.b16 %v2029
      %v2239 = vunpack.c.l.b16 %v2030
      %v2240 = vpack.c.b16 %v2147, %v2144
      %v2241 = vpack.c.b16 %v2148, %v2145
      %v2242 = vpack.c.b16 %v2149, %v2146
      %v2243 = vpack.c.b16 %v2153, %v2150
      %v2244 = vpack.c.b16 %v2154, %v2151
      %v2245 = vpack.c.b16 %v2155, %v2152
      %v2246 = vpack.c.b16 %v2159, %v2156
      %v2247 = vpack.c.b16 %v2160, %v2157
      %v2248 = vpack.c.b16 %v2161, %v2158
      %v2249 = vpack.c.b16 %v2165, %v2162
      %v2250 = vpack.c.b16 %v2166, %v2163
      %v2251 = vpack.c.b16 %v2167, %v2164
      %v2252 = vpack.c.b16 %v2171, %v2168
      %v2253 = vpack.c.b16 %v2172, %v2169
      %v2254 = vpack.c.b16 %v2173, %v2170
      %v2255 = vpack.c.b16 %v2177, %v2174
      %v2256 = vpack.c.b16 %v2178, %v2175
      %v2257 = vpack.c.b16 %v2179, %v2176
      %v2258 = vpack.c.b16 %v2183, %v2180
      %v2259 = vpack.c.b16 %v2184, %v2181
      %v2260 = vpack.c.b16 %v2185, %v2182
      %v2261 = vpack.c.b16 %v2189, %v2186
      %v2262 = vpack.c.b16 %v2190, %v2187
      %v2263 = vpack.c.b16 %v2191, %v2188
      %v2264 = vpack.c.b16 %v2195, %v2192
      %v2265 = vpack.c.b16 %v2196, %v2193
      %v2266 = vpack.c.b16 %v2197, %v2194
      %v2267 = vpack.c.b16 %v2201, %v2198
      %v2268 = vpack.c.b16 %v2202, %v2199
      %v2269 = vpack.c.b16 %v2203, %v2200
      %v2270 = vpack.c.b16 %v2207, %v2204
      %v2271 = vpack.c.b16 %v2208, %v2205
      %v2272 = vpack.c.b16 %v2209, %v2206
      %v2273 = vpack.c.b16 %v2213, %v2210
      %v2274 = vpack.c.b16 %v2214, %v2211
      %v2275 = vpack.c.b16 %v2215, %v2212
      %v2276 = vpack.c.b16 %v2219, %v2216
      %v2277 = vpack.c.b16 %v2220, %v2217
      %v2278 = vpack.c.b16 %v2221, %v2218
      %v2279 = vpack.c.b16 %v2225, %v2222
      %v2280 = vpack.c.b16 %v2226, %v2223
      %v2281 = vpack.c.b16 %v2227, %v2224
      %v2282 = vpack.c.b16 %v2231, %v2228
      %v2283 = vpack.c.b16 %v2232, %v2229
      %v2284 = vpack.c.b16 %v2233, %v2230
      %v2285 = vpack.c.b16 %v2237, %v2234
      %v2286 = vpack.c.b16 %v2238, %v2235
      %v2287 = vpack.c.b16 %v2239, %v2236
      %v2384 = vunpack.c.l.b16 %v2032
      %v2385 = vunpack.c.l.b16 %v2033
      %v2386 = vunpack.c.l.b16 %v2034
      %v2387 = vunpack.c.l.b16 %v2035
      %v2388 = vunpack.c.l.b16 %v2036
      %v2389 = vunpack.c.l.b16 %v2037
      %v2390 = vunpack.c.l.b16 %v2038
      %v2391 = vunpack.c.l.b16 %v2039
      %v2392 = vunpack.c.l.b16 %v2040
      %v2393 = vunpack.c.l.b16 %v2041
      %v2394 = vunpack.c.l.b16 %v2042
      %v2395 = vunpack.c.l.b16 %v2043
      %v2396 = vunpack.c.l.b16 %v2044
      %v2397 = vunpack.c.l.b16 %v2045
      %v2398 = vunpack.c.l.b16 %v2046
      %v2399 = vunpack.c.l.b16 %v2047
      %v2400 = vunpack.c.l.b16 %v2048
      %v2401 = vunpack.c.l.b16 %v2049
      %v2402 = vunpack.c.l.b16 %v2050
      %v2403 = vunpack.c.l.b16 %v2051
      %v2404 = vunpack.c.l.b16 %v2052
      %v2405 = vunpack.c.l.b16 %v2053
      %v2406 = vunpack.c.l.b16 %v2054
      %v2407 = vunpack.c.l.b16 %v2055
      %v2408 = vunpack.c.l.b16 %v2056
      %v2409 = vunpack.c.l.b16 %v2057
      %v2410 = vunpack.c.l.b16 %v2058
      %v2411 = vunpack.c.l.b16 %v2059
      %v2412 = vunpack.c.l.b16 %v2060
      %v2413 = vunpack.c.l.b16 %v2061
      %v2414 = vunpack.c.l.b16 %v2062
      %v2415 = vunpack.c.l.b16 %v2063
      %v2416 = vunpack.c.l.b16 %v2064
      %v2417 = vunpack.c.l.b16 %v2065
      %v2418 = vunpack.c.l.b16 %v2066
      %v2419 = vunpack.c.l.b16 %v2067
      %v2420 = vunpack.c.l.b16 %v2068
      %v2421 = vunpack.c.l.b16 %v2069
      %v2422 = vunpack.c.l.b16 %v2070
      %v2423 = vunpack.c.l.b16 %v2071
      %v2424 = vunpack.c.l.b16 %v2072
      %v2425 = vunpack.c.l.b16 %v2073
      %v2426 = vunpack.c.l.b16 %v2074
      %v2427 = vunpack.c.l.b16 %v2075
      %v2428 = vunpack.c.l.b16 %v2076
      %v2429 = vunpack.c.l.b16 %v2077
      %v2430 = vunpack.c.l.b16 %v2078
      %v2431 = vunpack.c.l.b16 %v2079
      %v2432 = vpack.c.b16 %v2385, %v2384
      %v2433 = vpack.c.b16 %v2387, %v2386
      %v2434 = vpack.c.b16 %v2389, %v2388
      %v2435 = vpack.c.b16 %v2391, %v2390
      %v2436 = vpack.c.b16 %v2393, %v2392
      %v2437 = vpack.c.b16 %v2395, %v2394
      %v2438 = vpack.c.b16 %v2397, %v2396
      %v2439 = vpack.c.b16 %v2399, %v2398
      %v2440 = vpack.c.b16 %v2401, %v2400
      %v2441 = vpack.c.b16 %v2403, %v2402
      %v2442 = vpack.c.b16 %v2405, %v2404
      %v2443 = vpack.c.b16 %v2407, %v2406
      %v2444 = vpack.c.b16 %v2409, %v2408
      %v2445 = vpack.c.b16 %v2411, %v2410
      %v2446 = vpack.c.b16 %v2413, %v2412
      %v2447 = vpack.c.b16 %v2415, %v2414
      %v2448 = vpack.c.b16 %v2417, %v2416
      %v2449 = vpack.c.b16 %v2419, %v2418
      %v2450 = vpack.c.b16 %v2421, %v2420
      %v2451 = vpack.c.b16 %v2423, %v2422
      %v2452 = vpack.c.b16 %v2425, %v2424
      %v2453 = vpack.c.b16 %v2427, %v2426
      %v2454 = vpack.c.b16 %v2429, %v2428
      %v2455 = vpack.c.b16 %v2431, %v2430
      %2480 = vmatpush.bf16.msra.mxu0 %v2439
      %2481 = vmatpush.bf16.msra.mxu0 %v2438
      %2482 = vmatpush.bf16.msra.mxu0 %v2437
      %2483 = vmatpush.bf16.msra.mxu0 %v2436
      %2484 = vmatpush.bf16.msra.mxu0 %v2435
      %2485 = vmatpush.bf16.msra.mxu0 %v2434
      %2486 = vmatpush.bf16.msra.mxu0 %v2433
      %2487 = vmatpush.bf16.msra.mxu0 %v2432
      %2488 = vmatmul.bf16.gmra.mxu0 %v2240
      %v2489 = vpop.f32.mrf.mxu0
      %v2490 = vadd.f32 0.0, %v2489
      %v2491 = vpop.f32.mrf.mxu0
      %v2492 = vadd.f32 0.0, %v2491
      %2493 = vmatmul.bf16.gmra.mxu0 %v2243
      %v2494 = vpop.f32.mrf.mxu0
      %v2495 = vadd.f32 0.0, %v2494
      %v2496 = vpop.f32.mrf.mxu0
      %v2497 = vadd.f32 0.0, %v2496
      %2498 = vmatmul.bf16.gmra.mxu0 %v2246
      %v2499 = vpop.f32.mrf.mxu0
      %v2500 = vadd.f32 0.0, %v2499
      %v2501 = vpop.f32.mrf.mxu0
      %v2502 = vadd.f32 0.0, %v2501
      %2503 = vmatmul.bf16.gmra.mxu0 %v2249
      %v2504 = vpop.f32.mrf.mxu0
      %v2505 = vadd.f32 0.0, %v2504
      %v2506 = vpop.f32.mrf.mxu0
      %v2507 = vadd.f32 0.0, %v2506
      %2508 = vmatmul.bf16.gmra.mxu0 %v2252
      %v2509 = vpop.f32.mrf.mxu0
      %v2510 = vadd.f32 0.0, %v2509
      %v2511 = vpop.f32.mrf.mxu0
      %v2512 = vadd.f32 0.0, %v2511
      %2513 = vmatmul.bf16.gmra.mxu0 %v2255
      %v2514 = vpop.f32.mrf.mxu0
      %v2515 = vadd.f32 0.0, %v2514
      %v2516 = vpop.f32.mrf.mxu0
      %v2517 = vadd.f32 0.0, %v2516
      %2518 = vmatmul.bf16.gmra.mxu0 %v2258
      %v2519 = vpop.f32.mrf.mxu0
      %v2520 = vadd.f32 0.0, %v2519
      %v2521 = vpop.f32.mrf.mxu0
      %v2522 = vadd.f32 0.0, %v2521
      %2523 = vmatmul.bf16.gmra.mxu0 %v2261
      %v2524 = vpop.f32.mrf.mxu0
      %v2525 = vadd.f32 0.0, %v2524
      %v2526 = vpop.f32.mrf.mxu0
      %v2527 = vadd.f32 0.0, %v2526
      %2528 = vmatmul.bf16.gmra.mxu0 %v2264
      %v2529 = vpop.f32.mrf.mxu0
      %v2530 = vadd.f32 0.0, %v2529
      %v2531 = vpop.f32.mrf.mxu0
      %v2532 = vadd.f32 0.0, %v2531
      %2533 = vmatmul.bf16.gmra.mxu0 %v2267
      %v2534 = vpop.f32.mrf.mxu0
      %v2535 = vadd.f32 0.0, %v2534
      %v2536 = vpop.f32.mrf.mxu0
      %v2537 = vadd.f32 0.0, %v2536
      %2538 = vmatmul.bf16.gmra.mxu0 %v2270
      %v2539 = vpop.f32.mrf.mxu0
      %v2540 = vadd.f32 0.0, %v2539
      %v2541 = vpop.f32.mrf.mxu0
      %v2542 = vadd.f32 0.0, %v2541
      %2543 = vmatmul.bf16.gmra.mxu0 %v2273
      %v2544 = vpop.f32.mrf.mxu0
      %v2545 = vadd.f32 0.0, %v2544
      %v2546 = vpop.f32.mrf.mxu0
      %v2547 = vadd.f32 0.0, %v2546
      %2548 = vmatmul.bf16.gmra.mxu0 %v2276
      %v2549 = vpop.f32.mrf.mxu0
      %v2550 = vadd.f32 0.0, %v2549
      %v2551 = vpop.f32.mrf.mxu0
      %v2552 = vadd.f32 0.0, %v2551
      %2553 = vmatmul.bf16.gmra.mxu0 %v2279
      %v2554 = vpop.f32.mrf.mxu0
      %v2555 = vadd.f32 0.0, %v2554
      %v2556 = vpop.f32.mrf.mxu0
      %v2557 = vadd.f32 0.0, %v2556
      %2558 = vmatmul.bf16.gmra.mxu0 %v2282
      %v2559 = vpop.f32.mrf.mxu0
      %v2560 = vadd.f32 0.0, %v2559
      %v2561 = vpop.f32.mrf.mxu0
      %v2562 = vadd.f32 0.0, %v2561
      %2563 = vmatmul.bf16.gmra.mxu0 %v2285
      %v2564 = vpop.f32.mrf.mxu0
      %v2565 = vadd.f32 0.0, %v2564
      %v2566 = vpop.f32.mrf.mxu0
      %v2567 = vadd.f32 0.0, %v2566
      %2568 = vdwg.mxu0
      %2569 = vmatpush.bf16.msra.mxu0 %v2447
      %2570 = vmatpush.bf16.msra.mxu0 %v2446
      %2571 = vmatpush.bf16.msra.mxu0 %v2445
      %2572 = vmatpush.bf16.msra.mxu0 %v2444
      %2573 = vmatpush.bf16.msra.mxu0 %v2443
      %2574 = vmatpush.bf16.msra.mxu0 %v2442
      %2575 = vmatpush.bf16.msra.mxu0 %v2441
      %2576 = vmatpush.bf16.msra.mxu0 %v2440
      %2577 = vmatmul.bf16.gmra.mxu0 %v2241
      %v2578 = vpop.f32.mrf.mxu0
      %v2579 = vadd.f32 %v2490, %v2578
      %v2580 = vpop.f32.mrf.mxu0
      %v2581 = vadd.f32 %v2492, %v2580
      %2582 = vmatmul.bf16.gmra.mxu0 %v2244
      %v2583 = vpop.f32.mrf.mxu0
      %v2584 = vadd.f32 %v2495, %v2583
      %v2585 = vpop.f32.mrf.mxu0
      %v2586 = vadd.f32 %v2497, %v2585
      %2587 = vmatmul.bf16.gmra.mxu0 %v2247
      %v2588 = vpop.f32.mrf.mxu0
      %v2589 = vadd.f32 %v2500, %v2588
      %v2590 = vpop.f32.mrf.mxu0
      %v2591 = vadd.f32 %v2502, %v2590
      %2592 = vmatmul.bf16.gmra.mxu0 %v2250
      %v2593 = vpop.f32.mrf.mxu0
      %v2594 = vadd.f32 %v2505, %v2593
      %v2595 = vpop.f32.mrf.mxu0
      %v2596 = vadd.f32 %v2507, %v2595
      %2597 = vmatmul.bf16.gmra.mxu0 %v2253
      %v2598 = vpop.f32.mrf.mxu0
      %v2599 = vadd.f32 %v2510, %v2598
      %v2600 = vpop.f32.mrf.mxu0
      %v2601 = vadd.f32 %v2512, %v2600
      %2602 = vmatmul.bf16.gmra.mxu0 %v2256
      %v2603 = vpop.f32.mrf.mxu0
      %v2604 = vadd.f32 %v2515, %v2603
      %v2605 = vpop.f32.mrf.mxu0
      %v2606 = vadd.f32 %v2517, %v2605
      %2607 = vmatmul.bf16.gmra.mxu0 %v2259
      %v2608 = vpop.f32.mrf.mxu0
      %v2609 = vadd.f32 %v2520, %v2608
      %v2610 = vpop.f32.mrf.mxu0
      %v2611 = vadd.f32 %v2522, %v2610
      %2612 = vmatmul.bf16.gmra.mxu0 %v2262
      %v2613 = vpop.f32.mrf.mxu0
      %v2614 = vadd.f32 %v2525, %v2613
      %v2615 = vpop.f32.mrf.mxu0
      %v2616 = vadd.f32 %v2527, %v2615
      %2617 = vmatmul.bf16.gmra.mxu0 %v2265
      %v2618 = vpop.f32.mrf.mxu0
      %v2619 = vadd.f32 %v2530, %v2618
      %v2620 = vpop.f32.mrf.mxu0
      %v2621 = vadd.f32 %v2532, %v2620
      %2622 = vmatmul.bf16.gmra.mxu0 %v2268
      %v2623 = vpop.f32.mrf.mxu0
      %v2624 = vadd.f32 %v2535, %v2623
      %v2625 = vpop.f32.mrf.mxu0
      %v2626 = vadd.f32 %v2537, %v2625
      %2627 = vmatmul.bf16.gmra.mxu0 %v2271
      %v2628 = vpop.f32.mrf.mxu0
      %v2629 = vadd.f32 %v2540, %v2628
      %v2630 = vpop.f32.mrf.mxu0
      %v2631 = vadd.f32 %v2542, %v2630
      %2632 = vmatmul.bf16.gmra.mxu0 %v2274
      %v2633 = vpop.f32.mrf.mxu0
      %v2634 = vadd.f32 %v2545, %v2633
      %v2635 = vpop.f32.mrf.mxu0
      %v2636 = vadd.f32 %v2547, %v2635
      %2637 = vmatmul.bf16.gmra.mxu0 %v2277
      %v2638 = vpop.f32.mrf.mxu0
      %v2639 = vadd.f32 %v2550, %v2638
      %v2640 = vpop.f32.mrf.mxu0
      %v2641 = vadd.f32 %v2552, %v2640
      %2642 = vmatmul.bf16.gmra.mxu0 %v2280
      %v2643 = vpop.f32.mrf.mxu0
      %v2644 = vadd.f32 %v2555, %v2643
      %v2645 = vpop.f32.mrf.mxu0
      %v2646 = vadd.f32 %v2557, %v2645
      %2647 = vmatmul.bf16.gmra.mxu0 %v2283
      %v2648 = vpop.f32.mrf.mxu0
      %v2649 = vadd.f32 %v2560, %v2648
      %v2650 = vpop.f32.mrf.mxu0
      %v2651 = vadd.f32 %v2562, %v2650
      %2652 = vmatmul.bf16.gmra.mxu0 %v2286
      %v2653 = vpop.f32.mrf.mxu0
      %v2654 = vadd.f32 %v2565, %v2653
      %v2655 = vpop.f32.mrf.mxu0
      %v2656 = vadd.f32 %v2567, %v2655
      %2657 = vdwg.mxu0
      %2658 = vmatpush.bf16.msra.mxu0 %v2455
      %2659 = vmatpush.bf16.msra.mxu0 %v2454
      %2660 = vmatpush.bf16.msra.mxu0 %v2453
      %2661 = vmatpush.bf16.msra.mxu0 %v2452
      %2662 = vmatpush.bf16.msra.mxu0 %v2451
      %2663 = vmatpush.bf16.msra.mxu0 %v2450
      %2664 = vmatpush.bf16.msra.mxu0 %v2449
      %2665 = vmatpush.bf16.msra.mxu0 %v2448
      %2666 = vmatmul.bf16.gmra.mxu0 %v2242
      %v2667 = vpop.f32.mrf.mxu0
      %v2668 = vadd.f32 %v2579, %v2667
      %v2669 = vpop.f32.mrf.mxu0
      %v2670 = vadd.f32 %v2581, %v2669
      %2671 = vmatmul.bf16.gmra.mxu0 %v2245
      %v2672 = vpop.f32.mrf.mxu0
      %v2673 = vadd.f32 %v2584, %v2672
      %v2674 = vpop.f32.mrf.mxu0
      %v2675 = vadd.f32 %v2586, %v2674
      %2676 = vmatmul.bf16.gmra.mxu0 %v2248
      %v2677 = vpop.f32.mrf.mxu0
      %v2678 = vadd.f32 %v2589, %v2677
      %v2679 = vpop.f32.mrf.mxu0
      %v2680 = vadd.f32 %v2591, %v2679
      %2681 = vmatmul.bf16.gmra.mxu0 %v2251
      %v2682 = vpop.f32.mrf.mxu0
      %v2683 = vadd.f32 %v2594, %v2682
      %v2684 = vpop.f32.mrf.mxu0
      %v2685 = vadd.f32 %v2596, %v2684
      %2686 = vmatmul.bf16.gmra.mxu0 %v2254
      %v2687 = vpop.f32.mrf.mxu0
      %v2688 = vadd.f32 %v2599, %v2687
      %v2689 = vpop.f32.mrf.mxu0
      %v2690 = vadd.f32 %v2601, %v2689
      %2691 = vmatmul.bf16.gmra.mxu0 %v2257
      %v2692 = vpop.f32.mrf.mxu0
      %v2693 = vadd.f32 %v2604, %v2692
      %v2694 = vpop.f32.mrf.mxu0
      %v2695 = vadd.f32 %v2606, %v2694
      %2696 = vmatmul.bf16.gmra.mxu0 %v2260
      %v2697 = vpop.f32.mrf.mxu0
      %v2698 = vadd.f32 %v2609, %v2697
      %v2699 = vpop.f32.mrf.mxu0
      %v2700 = vadd.f32 %v2611, %v2699
      %2701 = vmatmul.bf16.gmra.mxu0 %v2263
      %v2702 = vpop.f32.mrf.mxu0
      %v2703 = vadd.f32 %v2614, %v2702
      %v2704 = vpop.f32.mrf.mxu0
      %v2705 = vadd.f32 %v2616, %v2704
      %2706 = vmatmul.bf16.gmra.mxu0 %v2266
      %v2707 = vpop.f32.mrf.mxu0
      %v2708 = vadd.f32 %v2619, %v2707
      %v2709 = vpop.f32.mrf.mxu0
      %v2710 = vadd.f32 %v2621, %v2709
      %2711 = vmatmul.bf16.gmra.mxu0 %v2269
      %v2712 = vpop.f32.mrf.mxu0
      %v2713 = vadd.f32 %v2624, %v2712
      %v2714 = vpop.f32.mrf.mxu0
      %v2715 = vadd.f32 %v2626, %v2714
      %2716 = vmatmul.bf16.gmra.mxu0 %v2272
      %v2717 = vpop.f32.mrf.mxu0
      %v2718 = vadd.f32 %v2629, %v2717
      %v2719 = vpop.f32.mrf.mxu0
      %v2720 = vadd.f32 %v2631, %v2719
      %2721 = vmatmul.bf16.gmra.mxu0 %v2275
      %v2722 = vpop.f32.mrf.mxu0
      %v2723 = vadd.f32 %v2634, %v2722
      %v2724 = vpop.f32.mrf.mxu0
      %v2725 = vadd.f32 %v2636, %v2724
      %2726 = vmatmul.bf16.gmra.mxu0 %v2278
      %v2727 = vpop.f32.mrf.mxu0
      %v2728 = vadd.f32 %v2639, %v2727
      %v2729 = vpop.f32.mrf.mxu0
      %v2730 = vadd.f32 %v2641, %v2729
      %2731 = vmatmul.bf16.gmra.mxu0 %v2281
      %v2732 = vpop.f32.mrf.mxu0
      %v2733 = vadd.f32 %v2644, %v2732
      %v2734 = vpop.f32.mrf.mxu0
      %v2735 = vadd.f32 %v2646, %v2734
      %2736 = vmatmul.bf16.gmra.mxu0 %v2284
      %v2737 = vpop.f32.mrf.mxu0
      %v2738 = vadd.f32 %v2649, %v2737
      %v2739 = vpop.f32.mrf.mxu0
      %v2740 = vadd.f32 %v2651, %v2739
      %2741 = vmatmul.bf16.gmra.mxu0 %v2287
      %v2742 = vpop.f32.mrf.mxu0
      %v2743 = vadd.f32 %v2654, %v2742
      %v2744 = vpop.f32.mrf.mxu0
      %v2745 = vadd.f32 %v2656, %v2744
      %2746 = vdwg.mxu0
      %v2747 = vadd.f32 %v1935, %v2668
      %v2748 = vadd.f32 %v1936, %v2670
      %v2749 = vadd.f32 %v1937, %v2673
      %v2750 = vadd.f32 %v1938, %v2675
      %v2751 = vadd.f32 %v1939, %v2678
      %v2752 = vadd.f32 %v1940, %v2680
      %v2753 = vadd.f32 %v1941, %v2683
      %v2754 = vadd.f32 %v1942, %v2685
      %v2755 = vadd.f32 %v1943, %v2688
      %v2756 = vadd.f32 %v1944, %v2690
      %v2757 = vadd.f32 %v1945, %v2693
      %v2758 = vadd.f32 %v1946, %v2695
      %v2759 = vadd.f32 %v1947, %v2698
      %v2760 = vadd.f32 %v1948, %v2700
      %v2761 = vadd.f32 %v1949, %v2703
      %v2762 = vadd.f32 %v1950, %v2705
      %v2763 = vadd.f32 %v1951, %v2708
      %v2764 = vadd.f32 %v1952, %v2710
      %v2765 = vadd.f32 %v1953, %v2713
      %v2766 = vadd.f32 %v1954, %v2715
      %v2767 = vadd.f32 %v1955, %v2718
      %v2768 = vadd.f32 %v1956, %v2720
      %v2769 = vadd.f32 %v1957, %v2723
      %v2770 = vadd.f32 %v1958, %v2725
      %v2771 = vadd.f32 %v1959, %v2728
      %v2772 = vadd.f32 %v1960, %v2730
      %v2773 = vadd.f32 %v1961, %v2733
      %v2774 = vadd.f32 %v1962, %v2735
      %v2775 = vadd.f32 %v1963, %v2738
      %v2776 = vadd.f32 %v1964, %v2740
      %v2777 = vadd.f32 %v1965, %v2743
      %v2778 = vadd.f32 %v1966, %v2745
      %2779 = vst [vmem:[#allocation2] sm:$0xff] %v2747
      %2780 = vst [vmem:[#allocation2 + $0x8] sm:$0xff] %v2748
      %2781 = vst [vmem:[#allocation2 + $0x10] sm:$0xff] %v2749
      %2782 = vst [vmem:[#allocation2 + $0x18] sm:$0xff] %v2750
      %2783 = vst [vmem:[#allocation2 + $0x20] sm:$0xff] %v2751
      %2784 = vst [vmem:[#allocation2 + $0x28] sm:$0xff] %v2752
      %2785 = vst [vmem:[#allocation2 + $0x30] sm:$0xff] %v2753
      %2786 = vst [vmem:[#allocation2 + $0x38] sm:$0xff] %v2754
      %2787 = vst [vmem:[#allocation2 + $0x40] sm:$0xff] %v2755
      %2788 = vst [vmem:[#allocation2 + $0x48] sm:$0xff] %v2756
      %2789 = vst [vmem:[#allocation2 + $0x50] sm:$0xff] %v2757
      %2790 = vst [vmem:[#allocation2 + $0x58] sm:$0xff] %v2758
      %2791 = vst [vmem:[#allocation2 + $0x60] sm:$0xff] %v2759
      %2792 = vst [vmem:[#allocation2 + $0x68] sm:$0xff] %v2760
      %2793 = vst [vmem:[#allocation2 + $0x70] sm:$0xff] %v2761
      %2794 = vst [vmem:[#allocation2 + $0x78] sm:$0xff] %v2762
      %2795 = vst [vmem:[#allocation2 + $0x80] sm:$0xff] %v2763
      %2796 = vst [vmem:[#allocation2 + $0x88] sm:$0xff] %v2764
      %2797 = vst [vmem:[#allocation2 + $0x90] sm:$0xff] %v2765
      %2798 = vst [vmem:[#allocation2 + $0x98] sm:$0xff] %v2766
      %2799 = vst [vmem:[#allocation2 + $0xa0] sm:$0xff] %v2767
      %2800 = vst [vmem:[#allocation2 + $0xa8] sm:$0xff] %v2768
      %2801 = vst [vmem:[#allocation2 + $0xb0] sm:$0xff] %v2769
      %2802 = vst [vmem:[#allocation2 + $0xb8] sm:$0xff] %v2770
      %2803 = vst [vmem:[#allocation2 + $0xc0] sm:$0xff] %v2771
      %2804 = vst [vmem:[#allocation2 + $0xc8] sm:$0xff] %v2772
      %2805 = vst [vmem:[#allocation2 + $0xd0] sm:$0xff] %v2773
      %2806 = vst [vmem:[#allocation2 + $0xd8] sm:$0xff] %v2774
      %2807 = vst [vmem:[#allocation2 + $0xe0] sm:$0xff] %v2775
      %2808 = vst [vmem:[#allocation2 + $0xe8] sm:$0xff] %v2776
      %2809 = vst [vmem:[#allocation2 + $0xf0] sm:$0xff] %v2777
      %2810 = vst [vmem:[#allocation2 + $0xf8] sm:$0xff] %v2778
      %v2811 = vld [vmem:[#allocation2] sm:$0xff]
      %v2812 = vld [vmem:[#allocation2 + $0x8] sm:$0xff]
      %v2813 = vld [vmem:[#allocation2 + $0x10] sm:$0xff]
      %v2814 = vld [vmem:[#allocation2 + $0x18] sm:$0xff]
      %v2815 = vld [vmem:[#allocation2 + $0x20] sm:$0xff]
      %v2816 = vld [vmem:[#allocation2 + $0x28] sm:$0xff]
      %v2817 = vld [vmem:[#allocation2 + $0x30] sm:$0xff]
      %v2818 = vld [vmem:[#allocation2 + $0x38] sm:$0xff]
      %v2819 = vld [vmem:[#allocation2 + $0x40] sm:$0xff]
      %v2820 = vld [vmem:[#allocation2 + $0x48] sm:$0xff]
      %v2821 = vld [vmem:[#allocation2 + $0x50] sm:$0xff]
      %v2822 = vld [vmem:[#allocation2 + $0x58] sm:$0xff]
      %v2823 = vld [vmem:[#allocation2 + $0x60] sm:$0xff]
      %v2824 = vld [vmem:[#allocation2 + $0x68] sm:$0xff]
      %v2825 = vld [vmem:[#allocation2 + $0x70] sm:$0xff]
      %v2826 = vld [vmem:[#allocation2 + $0x78] sm:$0xff]
      %v2827 = vld [vmem:[#allocation2 + $0x80] sm:$0xff]
      %v2828 = vld [vmem:[#allocation2 + $0x88] sm:$0xff]
      %v2829 = vld [vmem:[#allocation2 + $0x90] sm:$0xff]
      %v2830 = vld [vmem:[#allocation2 + $0x98] sm:$0xff]
      %v2831 = vld [vmem:[#allocation2 + $0xa0] sm:$0xff]
      %v2832 = vld [vmem:[#allocation2 + $0xa8] sm:$0xff]
      %v2833 = vld [vmem:[#allocation2 + $0xb0] sm:$0xff]
      %v2834 = vld [vmem:[#allocation2 + $0xb8] sm:$0xff]
      %v2835 = vld [vmem:[#allocation2 + $0xc0] sm:$0xff]
      %v2836 = vld [vmem:[#allocation2 + $0xc8] sm:$0xff]
      %v2837 = vld [vmem:[#allocation2 + $0xd0] sm:$0xff]
      %v2838 = vld [vmem:[#allocation2 + $0xd8] sm:$0xff]
      %v2839 = vld [vmem:[#allocation2 + $0xe0] sm:$0xff]
      %v2840 = vld [vmem:[#allocation2 + $0xe8] sm:$0xff]
      %v2841 = vld [vmem:[#allocation2 + $0xf0] sm:$0xff]
      %v2842 = vld [vmem:[#allocation2 + $0xf8] sm:$0xff]
      %v2843 = vpack.c.bf16 %v2811, %v2811
      %v2844 = vpack.c.bf16 %v2812, %v2812
      %v2845 = vpack.c.bf16 %v2813, %v2813
      %v2846 = vpack.c.bf16 %v2814, %v2814
      %v2847 = vpack.c.bf16 %v2815, %v2815
      %v2848 = vpack.c.bf16 %v2816, %v2816
      %v2849 = vpack.c.bf16 %v2817, %v2817
      %v2850 = vpack.c.bf16 %v2818, %v2818
      %v2851 = vpack.c.bf16 %v2819, %v2819
      %v2852 = vpack.c.bf16 %v2820, %v2820
      %v2853 = vpack.c.bf16 %v2821, %v2821
      %v2854 = vpack.c.bf16 %v2822, %v2822
      %v2855 = vpack.c.bf16 %v2823, %v2823
      %v2856 = vpack.c.bf16 %v2824, %v2824
      %v2857 = vpack.c.bf16 %v2825, %v2825
      %v2858 = vpack.c.bf16 %v2826, %v2826
      %v2859 = vpack.c.bf16 %v2827, %v2827
      %v2860 = vpack.c.bf16 %v2828, %v2828
      %v2861 = vpack.c.bf16 %v2829, %v2829
      %v2862 = vpack.c.bf16 %v2830, %v2830
      %v2863 = vpack.c.bf16 %v2831, %v2831
      %v2864 = vpack.c.bf16 %v2832, %v2832
      %v2865 = vpack.c.bf16 %v2833, %v2833
      %v2866 = vpack.c.bf16 %v2834, %v2834
      %v2867 = vpack.c.bf16 %v2835, %v2835
      %v2868 = vpack.c.bf16 %v2836, %v2836
      %v2869 = vpack.c.bf16 %v2837, %v2837
      %v2870 = vpack.c.bf16 %v2838, %v2838
      %v2871 = vpack.c.bf16 %v2839, %v2839
      %v2872 = vpack.c.bf16 %v2840, %v2840
      %v2873 = vpack.c.bf16 %v2841, %v2841
      %v2874 = vpack.c.bf16 %v2842, %v2842
      %2875 = vst [vmem:[%s238] sm:$0xf] %v2843
      %2876 = vst [vmem:[%s238 + $0x4] sm:$0xf] %v2844
      %2877 = vst [vmem:[%s238 + $0x8] sm:$0xf] %v2845
      %2878 = vst [vmem:[%s238 + $0xc] sm:$0xf] %v2846
      %2879 = vst [vmem:[%s238 + $0x10] sm:$0xf] %v2847
      %2880 = vst [vmem:[%s238 + $0x14] sm:$0xf] %v2848
      %2881 = vst [vmem:[%s238 + $0x18] sm:$0xf] %v2849
      %2882 = vst [vmem:[%s238 + $0x1c] sm:$0xf] %v2850
      %2883 = vst [vmem:[%s238 + $0x20] sm:$0xf] %v2851
      %2884 = vst [vmem:[%s238 + $0x24] sm:$0xf] %v2852
      %2885 = vst [vmem:[%s238 + $0x28] sm:$0xf] %v2853
      %2886 = vst [vmem:[%s238 + $0x2c] sm:$0xf] %v2854
      %2887 = vst [vmem:[%s238 + $0x30] sm:$0xf] %v2855
      %2888 = vst [vmem:[%s238 + $0x34] sm:$0xf] %v2856
      %2889 = vst [vmem:[%s238 + $0x38] sm:$0xf] %v2857
      %2890 = vst [vmem:[%s238 + $0x3c] sm:$0xf] %v2858
      %2891 = vst [vmem:[%s238 + $0x40] sm:$0xf] %v2859
      %2892 = vst [vmem:[%s238 + $0x44] sm:$0xf] %v2860
      %2893 = vst [vmem:[%s238 + $0x48] sm:$0xf] %v2861
      %2894 = vst [vmem:[%s238 + $0x4c] sm:$0xf] %v2862
      %2895 = vst [vmem:[%s238 + $0x50] sm:$0xf] %v2863
      %2896 = vst [vmem:[%s238 + $0x54] sm:$0xf] %v2864
      %2897 = vst [vmem:[%s238 + $0x58] sm:$0xf] %v2865
      %2898 = vst [vmem:[%s238 + $0x5c] sm:$0xf] %v2866
      %2899 = vst [vmem:[%s238 + $0x60] sm:$0xf] %v2867
      %2900 = vst [vmem:[%s238 + $0x64] sm:$0xf] %v2868
      %2901 = vst [vmem:[%s238 + $0x68] sm:$0xf] %v2869
      %2902 = vst [vmem:[%s238 + $0x6c] sm:$0xf] %v2870
      %2903 = vst [vmem:[%s238 + $0x70] sm:$0xf] %v2871
      %2904 = vst [vmem:[%s238 + $0x74] sm:$0xf] %v2872
      %2905 = vst [vmem:[%s238 + $0x78] sm:$0xf] %v2873
      %2906 = vst [vmem:[%s238 + $0x7c] sm:$0xf] %v2874
      %v2907 = vld [vmem:[%s233 + $0x1c] sm:$0xf]
      %v2908 = vld [vmem:[%s233 + $0x28] sm:$0xf]
      %v2909 = vld [vmem:[%s233 + $0x34] sm:$0xf]
      %v2910 = vld [vmem:[%s233 + $0x40] sm:$0xf]
      %v2911 = vld [vmem:[%s233 + $0x4c] sm:$0xf]
      %v2912 = vld [vmem:[%s233 + $0x58] sm:$0xf]
      %v2913 = vld [vmem:[%s233 + $0x64] sm:$0xf]
      %v2914 = vld [vmem:[%s233 + $0x70] sm:$0xf]
      %v2915 = vld [vmem:[%s233 + $0x7c] sm:$0xf]
      %v2916 = vld [vmem:[%s233 + $0x88] sm:$0xf]
      %v2917 = vld [vmem:[%s233 + $0x94] sm:$0xf]
      %v2918 = vld [vmem:[%s233 + $0xa0] sm:$0xf]
      %v2919 = vld [vmem:[%s233 + $0xac] sm:$0xf]
      %v2920 = vld [vmem:[%s233 + $0xb8] sm:$0xf]
      %v2921 = vld [vmem:[%s233 + $0xc4] sm:$0xf]
      %v2922 = vld [vmem:[%s233 + $0xd0] sm:$0xf]
      %v2923 = vld [vmem:[%s233 + $0xdc] sm:$0xf]
      %v2924 = vld [vmem:[%s233 + $0xe8] sm:$0xf]
      %v2925 = vld [vmem:[%s233 + $0xf4] sm:$0xf]
      %v2926 = vld [vmem:[%s233 + $0x100] sm:$0xf]
      %v2927 = vld [vmem:[%s233 + $0x10c] sm:$0xf]
      %v2928 = vld [vmem:[%s233 + $0x118] sm:$0xf]
      %v2929 = vld [vmem:[%s233 + $0x124] sm:$0xf]
      %v2930 = vld [vmem:[%s233 + $0x130] sm:$0xf]
      %v2931 = vld [vmem:[%s233 + $0x13c] sm:$0xf]
      %v2932 = vld [vmem:[%s233 + $0x148] sm:$0xf]
      %v2933 = vld [vmem:[%s233 + $0x154] sm:$0xf]
      %v2934 = vld [vmem:[%s233 + $0x160] sm:$0xf]
      %v2935 = vld [vmem:[%s233 + $0x16c] sm:$0xf]
      %v2936 = vld [vmem:[%s233 + $0x178] sm:$0xf]
      %v2937 = vld [vmem:[%s233 + $0x184] sm:$0xf]
      %v2938 = vld [vmem:[%s233 + $0x190] sm:$0xf]
      %v2939 = vld [vmem:[%s2] sm:$0xf]
      %v2940 = vld [vmem:[%s2 + $0x4] sm:$0xf]
      %v2941 = vld [vmem:[%s2 + $0x8] sm:$0xf]
      %v2942 = vld [vmem:[%s2 + $0xc] sm:$0xf]
      %v2943 = vld [vmem:[%s2 + $0x10] sm:$0xf]
      %v2944 = vld [vmem:[%s2 + $0x14] sm:$0xf]
      %v2945 = vld [vmem:[%s2 + $0x18] sm:$0xf]
      %v2946 = vld [vmem:[%s2 + $0x1c] sm:$0xf]
      %v2947 = vld [vmem:[%s2 + $0x20] sm:$0xf]
      %v2948 = vld [vmem:[%s2 + $0x24] sm:$0xf]
      %v2949 = vld [vmem:[%s2 + $0x28] sm:$0xf]
      %v2950 = vld [vmem:[%s2 + $0x2c] sm:$0xf]
      %v2951 = vld [vmem:[%s2 + $0x30] sm:$0xf]
      %v2952 = vld [vmem:[%s2 + $0x34] sm:$0xf]
      %v2953 = vld [vmem:[%s2 + $0x38] sm:$0xf]
      %v2954 = vld [vmem:[%s2 + $0x3c] sm:$0xf]
      %v2987 = vunpack.c.l.b16 %v2907
      %v2988 = vunpack.c.l.b16 %v2908
      %v2989 = vunpack.c.l.b16 %v2909
      %v2990 = vunpack.c.l.b16 %v2910
      %v2991 = vunpack.c.l.b16 %v2911
      %v2992 = vunpack.c.l.b16 %v2912
      %v2993 = vunpack.c.l.b16 %v2913
      %v2994 = vunpack.c.l.b16 %v2914
      %v2995 = vunpack.c.l.b16 %v2915
      %v2996 = vunpack.c.l.b16 %v2916
      %v2997 = vunpack.c.l.b16 %v2917
      %v2998 = vunpack.c.l.b16 %v2918
      %v2999 = vunpack.c.l.b16 %v2919
      %v3000 = vunpack.c.l.b16 %v2920
      %v3001 = vunpack.c.l.b16 %v2921
      %v3002 = vunpack.c.l.b16 %v2922
      %v3003 = vunpack.c.l.b16 %v2923
      %v3004 = vunpack.c.l.b16 %v2924
      %v3005 = vunpack.c.l.b16 %v2925
      %v3006 = vunpack.c.l.b16 %v2926
      %v3007 = vunpack.c.l.b16 %v2927
      %v3008 = vunpack.c.l.b16 %v2928
      %v3009 = vunpack.c.l.b16 %v2929
      %v3010 = vunpack.c.l.b16 %v2930
      %v3011 = vunpack.c.l.b16 %v2931
      %v3012 = vunpack.c.l.b16 %v2932
      %v3013 = vunpack.c.l.b16 %v2933
      %v3014 = vunpack.c.l.b16 %v2934
      %v3015 = vunpack.c.l.b16 %v2935
      %v3016 = vunpack.c.l.b16 %v2936
      %v3017 = vunpack.c.l.b16 %v2937
      %v3018 = vunpack.c.l.b16 %v2938
      %v3019 = vpack.c.b16 %v2988, %v2987
      %v3020 = vpack.c.b16 %v2990, %v2989
      %v3021 = vpack.c.b16 %v2992, %v2991
      %v3022 = vpack.c.b16 %v2994, %v2993
      %v3023 = vpack.c.b16 %v2996, %v2995
      %v3024 = vpack.c.b16 %v2998, %v2997
      %v3025 = vpack.c.b16 %v3000, %v2999
      %v3026 = vpack.c.b16 %v3002, %v3001
      %v3027 = vpack.c.b16 %v3004, %v3003
      %v3028 = vpack.c.b16 %v3006, %v3005
      %v3029 = vpack.c.b16 %v3008, %v3007
      %v3030 = vpack.c.b16 %v3010, %v3009
      %v3031 = vpack.c.b16 %v3012, %v3011
      %v3032 = vpack.c.b16 %v3014, %v3013
      %v3033 = vpack.c.b16 %v3016, %v3015
      %v3034 = vpack.c.b16 %v3018, %v3017
      %v3067 = vunpack.c.l.b16 %v2939
      %v3068 = vunpack.c.l.b16 %v2940
      %v3069 = vunpack.c.l.b16 %v2941
      %v3070 = vunpack.c.l.b16 %v2942
      %v3071 = vunpack.c.l.b16 %v2943
      %v3072 = vunpack.c.l.b16 %v2944
      %v3073 = vunpack.c.l.b16 %v2945
      %v3074 = vunpack.c.l.b16 %v2946
      %v3075 = vunpack.c.l.b16 %v2947
      %v3076 = vunpack.c.l.b16 %v2948
      %v3077 = vunpack.c.l.b16 %v2949
      %v3078 = vunpack.c.l.b16 %v2950
      %v3079 = vunpack.c.l.b16 %v2951
      %v3080 = vunpack.c.l.b16 %v2952
      %v3081 = vunpack.c.l.b16 %v2953
      %v3082 = vunpack.c.l.b16 %v2954
      %v3083 = vpack.c.b16 %v3068, %v3067
      %v3084 = vpack.c.b16 %v3070, %v3069
      %v3085 = vpack.c.b16 %v3072, %v3071
      %v3086 = vpack.c.b16 %v3074, %v3073
      %v3087 = vpack.c.b16 %v3076, %v3075
      %v3088 = vpack.c.b16 %v3078, %v3077
      %v3089 = vpack.c.b16 %v3080, %v3079
      %v3090 = vpack.c.b16 %v3082, %v3081
      %3099 = vmatpush.bf16.msra.mxu0 %v3090
      %3100 = vmatpush.bf16.msra.mxu0 %v3089
      %3101 = vmatpush.bf16.msra.mxu0 %v3088
      %3102 = vmatpush.bf16.msra.mxu0 %v3087
      %3103 = vmatpush.bf16.msra.mxu0 %v3086
      %3104 = vmatpush.bf16.msra.mxu0 %v3085
      %3105 = vmatpush.bf16.msra.mxu0 %v3084
      %3106 = vmatpush.bf16.msra.mxu0 %v3083
      %3107 = vmatmul.bf16.gmra.mxu0 %v3019
      %v3108 = vpop.f32.mrf.mxu0
      %v3109 = vadd.f32 0.0, %v3108
      %v3110 = vpop.f32.mrf.mxu0
      %v3111 = vadd.f32 0.0, %v3110
      %3112 = vmatmul.bf16.gmra.mxu0 %v3020
      %v3113 = vpop.f32.mrf.mxu0
      %v3114 = vadd.f32 0.0, %v3113
      %v3115 = vpop.f32.mrf.mxu0
      %v3116 = vadd.f32 0.0, %v3115
      %3117 = vmatmul.bf16.gmra.mxu0 %v3021
      %v3118 = vpop.f32.mrf.mxu0
      %v3119 = vadd.f32 0.0, %v3118
      %v3120 = vpop.f32.mrf.mxu0
      %v3121 = vadd.f32 0.0, %v3120
      %3122 = vmatmul.bf16.gmra.mxu0 %v3022
      %v3123 = vpop.f32.mrf.mxu0
      %v3124 = vadd.f32 0.0, %v3123
      %v3125 = vpop.f32.mrf.mxu0
      %v3126 = vadd.f32 0.0, %v3125
      %3127 = vmatmul.bf16.gmra.mxu0 %v3023
      %v3128 = vpop.f32.mrf.mxu0
      %v3129 = vadd.f32 0.0, %v3128
      %v3130 = vpop.f32.mrf.mxu0
      %v3131 = vadd.f32 0.0, %v3130
      %3132 = vmatmul.bf16.gmra.mxu0 %v3024
      %v3133 = vpop.f32.mrf.mxu0
      %v3134 = vadd.f32 0.0, %v3133
      %v3135 = vpop.f32.mrf.mxu0
      %v3136 = vadd.f32 0.0, %v3135
      %3137 = vmatmul.bf16.gmra.mxu0 %v3025
      %v3138 = vpop.f32.mrf.mxu0
      %v3139 = vadd.f32 0.0, %v3138
      %v3140 = vpop.f32.mrf.mxu0
      %v3141 = vadd.f32 0.0, %v3140
      %3142 = vmatmul.bf16.gmra.mxu0 %v3026
      %v3143 = vpop.f32.mrf.mxu0
      %v3144 = vadd.f32 0.0, %v3143
      %v3145 = vpop.f32.mrf.mxu0
      %v3146 = vadd.f32 0.0, %v3145
      %3147 = vmatmul.bf16.gmra.mxu0 %v3027
      %v3148 = vpop.f32.mrf.mxu0
      %v3149 = vadd.f32 0.0, %v3148
      %v3150 = vpop.f32.mrf.mxu0
      %v3151 = vadd.f32 0.0, %v3150
      %3152 = vmatmul.bf16.gmra.mxu0 %v3028
      %v3153 = vpop.f32.mrf.mxu0
      %v3154 = vadd.f32 0.0, %v3153
      %v3155 = vpop.f32.mrf.mxu0
      %v3156 = vadd.f32 0.0, %v3155
      %3157 = vmatmul.bf16.gmra.mxu0 %v3029
      %v3158 = vpop.f32.mrf.mxu0
      %v3159 = vadd.f32 0.0, %v3158
      %v3160 = vpop.f32.mrf.mxu0
      %v3161 = vadd.f32 0.0, %v3160
      %3162 = vmatmul.bf16.gmra.mxu0 %v3030
      %v3163 = vpop.f32.mrf.mxu0
      %v3164 = vadd.f32 0.0, %v3163
      %v3165 = vpop.f32.mrf.mxu0
      %v3166 = vadd.f32 0.0, %v3165
      %3167 = vmatmul.bf16.gmra.mxu0 %v3031
      %v3168 = vpop.f32.mrf.mxu0
      %v3169 = vadd.f32 0.0, %v3168
      %v3170 = vpop.f32.mrf.mxu0
      %v3171 = vadd.f32 0.0, %v3170
      %3172 = vmatmul.bf16.gmra.mxu0 %v3032
      %v3173 = vpop.f32.mrf.mxu0
      %v3174 = vadd.f32 0.0, %v3173
      %v3175 = vpop.f32.mrf.mxu0
      %v3176 = vadd.f32 0.0, %v3175
      %3177 = vmatmul.bf16.gmra.mxu0 %v3033
      %v3178 = vpop.f32.mrf.mxu0
      %v3179 = vadd.f32 0.0, %v3178
      %v3180 = vpop.f32.mrf.mxu0
      %v3181 = vadd.f32 0.0, %v3180
      %3182 = vmatmul.bf16.gmra.mxu0 %v3034
      %v3183 = vpop.f32.mrf.mxu0
      %v3184 = vadd.f32 0.0, %v3183
      %v3185 = vpop.f32.mrf.mxu0
      %v3186 = vadd.f32 0.0, %v3185
      %3187 = vdwg.mxu0
      %v3188 = vpack.c.bf16 %v3109, %v3109
      %v3189 = vpack.c.bf16 %v3111, %v3111
      %v3190 = vpack.c.bf16 %v3114, %v3114
      %v3191 = vpack.c.bf16 %v3116, %v3116
      %v3192 = vpack.c.bf16 %v3119, %v3119
      %v3193 = vpack.c.bf16 %v3121, %v3121
      %v3194 = vpack.c.bf16 %v3124, %v3124
      %v3195 = vpack.c.bf16 %v3126, %v3126
      %v3196 = vpack.c.bf16 %v3129, %v3129
      %v3197 = vpack.c.bf16 %v3131, %v3131
      %v3198 = vpack.c.bf16 %v3134, %v3134
      %v3199 = vpack.c.bf16 %v3136, %v3136
      %v3200 = vpack.c.bf16 %v3139, %v3139
      %v3201 = vpack.c.bf16 %v3141, %v3141
      %v3202 = vpack.c.bf16 %v3144, %v3144
      %v3203 = vpack.c.bf16 %v3146, %v3146
      %v3204 = vpack.c.bf16 %v3149, %v3149
      %v3205 = vpack.c.bf16 %v3151, %v3151
      %v3206 = vpack.c.bf16 %v3154, %v3154
      %v3207 = vpack.c.bf16 %v3156, %v3156
      %v3208 = vpack.c.bf16 %v3159, %v3159
      %v3209 = vpack.c.bf16 %v3161, %v3161
      %v3210 = vpack.c.bf16 %v3164, %v3164
      %v3211 = vpack.c.bf16 %v3166, %v3166
      %v3212 = vpack.c.bf16 %v3169, %v3169
      %v3213 = vpack.c.bf16 %v3171, %v3171
      %v3214 = vpack.c.bf16 %v3174, %v3174
      %v3215 = vpack.c.bf16 %v3176, %v3176
      %v3216 = vpack.c.bf16 %v3179, %v3179
      %v3217 = vpack.c.bf16 %v3181, %v3181
      %v3218 = vpack.c.bf16 %v3184, %v3184
      %v3219 = vpack.c.bf16 %v3186, %v3186
      %3220 = vst [vmem:[%s243] sm:$0xf] %v3188
      %3221 = vst [vmem:[%s243 + $0x4] sm:$0xf] %v3189
      %3222 = vst [vmem:[%s243 + $0x8] sm:$0xf] %v3190
      %3223 = vst [vmem:[%s243 + $0xc] sm:$0xf] %v3191
      %3224 = vst [vmem:[%s243 + $0x10] sm:$0xf] %v3192
      %3225 = vst [vmem:[%s243 + $0x14] sm:$0xf] %v3193
      %3226 = vst [vmem:[%s243 + $0x18] sm:$0xf] %v3194
      %3227 = vst [vmem:[%s243 + $0x1c] sm:$0xf] %v3195
      %3228 = vst [vmem:[%s243 + $0x20] sm:$0xf] %v3196
      %3229 = vst [vmem:[%s243 + $0x24] sm:$0xf] %v3197
      %3230 = vst [vmem:[%s243 + $0x28] sm:$0xf] %v3198
      %3231 = vst [vmem:[%s243 + $0x2c] sm:$0xf] %v3199
      %3232 = vst [vmem:[%s243 + $0x30] sm:$0xf] %v3200
      %3233 = vst [vmem:[%s243 + $0x34] sm:$0xf] %v3201
      %3234 = vst [vmem:[%s243 + $0x38] sm:$0xf] %v3202
      %3235 = vst [vmem:[%s243 + $0x3c] sm:$0xf] %v3203
      %3236 = vst [vmem:[%s243 + $0x40] sm:$0xf] %v3204
      %3237 = vst [vmem:[%s243 + $0x44] sm:$0xf] %v3205
      %3238 = vst [vmem:[%s243 + $0x48] sm:$0xf] %v3206
      %3239 = vst [vmem:[%s243 + $0x4c] sm:$0xf] %v3207
      %3240 = vst [vmem:[%s243 + $0x50] sm:$0xf] %v3208
      %3241 = vst [vmem:[%s243 + $0x54] sm:$0xf] %v3209
      %3242 = vst [vmem:[%s243 + $0x58] sm:$0xf] %v3210
      %3243 = vst [vmem:[%s243 + $0x5c] sm:$0xf] %v3211
      %3244 = vst [vmem:[%s243 + $0x60] sm:$0xf] %v3212
      %3245 = vst [vmem:[%s243 + $0x64] sm:$0xf] %v3213
      %3246 = vst [vmem:[%s243 + $0x68] sm:$0xf] %v3214
      %3247 = vst [vmem:[%s243 + $0x6c] sm:$0xf] %v3215
      %3248 = vst [vmem:[%s243 + $0x70] sm:$0xf] %v3216
      %3249 = vst [vmem:[%s243 + $0x74] sm:$0xf] %v3217
      %3250 = vst [vmem:[%s243 + $0x78] sm:$0xf] %v3218
      %3251 = vst [vmem:[%s243 + $0x7c] sm:$0xf] %v3219
      %v3252 = vadd.f32 %v2811, %v2812
      %v3253 = vadd.f32 %v3252, %v2813
      %v3254 = vadd.f32 %v3253, %v2814
      %v3255 = vadd.f32 %v3254, %v2815
      %v3256 = vadd.f32 %v3255, %v2816
      %v3257 = vadd.f32 %v3256, %v2817
      %v3258 = vadd.f32 %v3257, %v2818
      %v3259 = vadd.f32 %v3258, %v2819
      %v3260 = vadd.f32 %v3259, %v2820
      %v3261 = vadd.f32 %v3260, %v2821
      %v3262 = vadd.f32 %v3261, %v2822
      %v3263 = vadd.f32 %v3262, %v2823
      %v3264 = vadd.f32 %v3263, %v2824
      %v3265 = vadd.f32 %v3264, %v2825
      %v3266 = vadd.f32 %v3265, %v2826
      %v3267 = vadd.f32 %v3266, %v2827
      %v3268 = vadd.f32 %v3267, %v2828
      %v3269 = vadd.f32 %v3268, %v2829
      %v3270 = vadd.f32 %v3269, %v2830
      %v3271 = vadd.f32 %v3270, %v2831
      %v3272 = vadd.f32 %v3271, %v2832
      %v3273 = vadd.f32 %v3272, %v2833
      %v3274 = vadd.f32 %v3273, %v2834
      %v3275 = vadd.f32 %v3274, %v2835
      %v3276 = vadd.f32 %v3275, %v2836
      %v3277 = vadd.f32 %v3276, %v2837
      %v3278 = vadd.f32 %v3277, %v2838
      %v3279 = vadd.f32 %v3278, %v2839
      %v3280 = vadd.f32 %v3279, %v2840
      %v3281 = vadd.f32 %v3280, %v2841
      %v3282 = vadd.f32 %v3281, %v2842
      %v3283 = vrot.slane %v3282, 4
      %v3284 = vadd.f32 %v3282, %v3283
      %v3285 = vrot.slane %v3284, 2
      %v3286 = vadd.f32 %v3284, %v3285
      %v3287 = vrot.slane %v3286, 1
      %v3288 = vadd.f32 %v3286, %v3287
      %v3289 = vmul.f32 %v2811, %v2811
      %v3290 = vmul.f32 %v2812, %v2812
      %v3291 = vmul.f32 %v2813, %v2813
      %v3292 = vmul.f32 %v2814, %v2814
      %v3293 = vmul.f32 %v2815, %v2815
      %v3294 = vmul.f32 %v2816, %v2816
      %v3295 = vmul.f32 %v2817, %v2817
      %v3296 = vmul.f32 %v2818, %v2818
      %v3297 = vmul.f32 %v2819, %v2819
      %v3298 = vmul.f32 %v2820, %v2820
      %v3299 = vmul.f32 %v2821, %v2821
      %v3300 = vmul.f32 %v2822, %v2822
      %v3301 = vmul.f32 %v2823, %v2823
      %v3302 = vmul.f32 %v2824, %v2824
      %v3303 = vmul.f32 %v2825, %v2825
      %v3304 = vmul.f32 %v2826, %v2826
      %v3305 = vmul.f32 %v2827, %v2827
      %v3306 = vmul.f32 %v2828, %v2828
      %v3307 = vmul.f32 %v2829, %v2829
      %v3308 = vmul.f32 %v2830, %v2830
      %v3309 = vmul.f32 %v2831, %v2831
      %v3310 = vmul.f32 %v2832, %v2832
      %v3311 = vmul.f32 %v2833, %v2833
      %v3312 = vmul.f32 %v2834, %v2834
      %v3313 = vmul.f32 %v2835, %v2835
      %v3314 = vmul.f32 %v2836, %v2836
      %v3315 = vmul.f32 %v2837, %v2837
      %v3316 = vmul.f32 %v2838, %v2838
      %v3317 = vmul.f32 %v2839, %v2839
      %v3318 = vmul.f32 %v2840, %v2840
      %v3319 = vmul.f32 %v2841, %v2841
      %v3320 = vmul.f32 %v2842, %v2842
      %v3321 = vadd.f32 %v3289, %v3290
      %v3322 = vadd.f32 %v3321, %v3291
      %v3323 = vadd.f32 %v3322, %v3292
      %v3324 = vadd.f32 %v3323, %v3293
      %v3325 = vadd.f32 %v3324, %v3294
      %v3326 = vadd.f32 %v3325, %v3295
      %v3327 = vadd.f32 %v3326, %v3296
      %v3328 = vadd.f32 %v3327, %v3297
      %v3329 = vadd.f32 %v3328, %v3298
      %v3330 = vadd.f32 %v3329, %v3299
      %v3331 = vadd.f32 %v3330, %v3300
      %v3332 = vadd.f32 %v3331, %v3301
      %v3333 = vadd.f32 %v3332, %v3302
      %v3334 = vadd.f32 %v3333, %v3303
      %v3335 = vadd.f32 %v3334, %v3304
      %v3336 = vadd.f32 %v3335, %v3305
      %v3337 = vadd.f32 %v3336, %v3306
      %v3338 = vadd.f32 %v3337, %v3307
      %v3339 = vadd.f32 %v3338, %v3308
      %v3340 = vadd.f32 %v3339, %v3309
      %v3341 = vadd.f32 %v3340, %v3310
      %v3342 = vadd.f32 %v3341, %v3311
      %v3343 = vadd.f32 %v3342, %v3312
      %v3344 = vadd.f32 %v3343, %v3313
      %v3345 = vadd.f32 %v3344, %v3314
      %v3346 = vadd.f32 %v3345, %v3315
      %v3347 = vadd.f32 %v3346, %v3316
      %v3348 = vadd.f32 %v3347, %v3317
      %v3349 = vadd.f32 %v3348, %v3318
      %v3350 = vadd.f32 %v3349, %v3319
      %v3351 = vadd.f32 %v3350, %v3320
      %v3352 = vrot.slane %v3351, 4
      %v3353 = vadd.f32 %v3351, %v3352
      %v3354 = vrot.slane %v3353, 2
      %v3355 = vadd.f32 %v3353, %v3354
      %v3356 = vrot.slane %v3355, 1
      %v3357 = vadd.f32 %v3355, %v3356
      %v3358 = vadd.f32 %v3109, %v3111
      %v3359 = vadd.f32 %v3358, %v3114
      %v3360 = vadd.f32 %v3359, %v3116
      %v3361 = vadd.f32 %v3360, %v3119
      %v3362 = vadd.f32 %v3361, %v3121
      %v3363 = vadd.f32 %v3362, %v3124
      %v3364 = vadd.f32 %v3363, %v3126
      %v3365 = vadd.f32 %v3364, %v3129
      %v3366 = vadd.f32 %v3365, %v3131
      %v3367 = vadd.f32 %v3366, %v3134
      %v3368 = vadd.f32 %v3367, %v3136
      %v3369 = vadd.f32 %v3368, %v3139
      %v3370 = vadd.f32 %v3369, %v3141
      %v3371 = vadd.f32 %v3370, %v3144
      %v3372 = vadd.f32 %v3371, %v3146
      %v3373 = vadd.f32 %v3372, %v3149
      %v3374 = vadd.f32 %v3373, %v3151
      %v3375 = vadd.f32 %v3374, %v3154
      %v3376 = vadd.f32 %v3375, %v3156
      %v3377 = vadd.f32 %v3376, %v3159
      %v3378 = vadd.f32 %v3377, %v3161
      %v3379 = vadd.f32 %v3378, %v3164
      %v3380 = vadd.f32 %v3379, %v3166
      %v3381 = vadd.f32 %v3380, %v3169
      %v3382 = vadd.f32 %v3381, %v3171
      %v3383 = vadd.f32 %v3382, %v3174
      %v3384 = vadd.f32 %v3383, %v3176
      %v3385 = vadd.f32 %v3384, %v3179
      %v3386 = vadd.f32 %v3385, %v3181
      %v3387 = vadd.f32 %v3386, %v3184
      %v3388 = vadd.f32 %v3387, %v3186
      %v3389 = vrot.slane %v3388, 4
      %v3390 = vadd.f32 %v3388, %v3389
      %v3391 = vrot.slane %v3390, 2
      %v3392 = vadd.f32 %v3390, %v3391
      %v3393 = vrot.slane %v3392, 1
      %v3394 = vadd.f32 %v3392, %v3393
      %v3395 = vmul.f32 %v3109, %v3109
      %v3396 = vmul.f32 %v3111, %v3111
      %v3397 = vmul.f32 %v3114, %v3114
      %v3398 = vmul.f32 %v3116, %v3116
      %v3399 = vmul.f32 %v3119, %v3119
      %v3400 = vmul.f32 %v3121, %v3121
      %v3401 = vmul.f32 %v3124, %v3124
      %v3402 = vmul.f32 %v3126, %v3126
      %v3403 = vmul.f32 %v3129, %v3129
      %v3404 = vmul.f32 %v3131, %v3131
      %v3405 = vmul.f32 %v3134, %v3134
      %v3406 = vmul.f32 %v3136, %v3136
      %v3407 = vmul.f32 %v3139, %v3139
      %v3408 = vmul.f32 %v3141, %v3141
      %v3409 = vmul.f32 %v3144, %v3144
      %v3410 = vmul.f32 %v3146, %v3146
      %v3411 = vmul.f32 %v3149, %v3149
      %v3412 = vmul.f32 %v3151, %v3151
      %v3413 = vmul.f32 %v3154, %v3154
      %v3414 = vmul.f32 %v3156, %v3156
      %v3415 = vmul.f32 %v3159, %v3159
      %v3416 = vmul.f32 %v3161, %v3161
      %v3417 = vmul.f32 %v3164, %v3164
      %v3418 = vmul.f32 %v3166, %v3166
      %v3419 = vmul.f32 %v3169, %v3169
      %v3420 = vmul.f32 %v3171, %v3171
      %v3421 = vmul.f32 %v3174, %v3174
      %v3422 = vmul.f32 %v3176, %v3176
      %v3423 = vmul.f32 %v3179, %v3179
      %v3424 = vmul.f32 %v3181, %v3181
      %v3425 = vmul.f32 %v3184, %v3184
      %v3426 = vmul.f32 %v3186, %v3186
      %v3427 = vadd.f32 %v3395, %v3396
      %v3428 = vadd.f32 %v3427, %v3397
      %v3429 = vadd.f32 %v3428, %v3398
      %v3430 = vadd.f32 %v3429, %v3399
      %v3431 = vadd.f32 %v3430, %v3400
      %v3432 = vadd.f32 %v3431, %v3401
      %v3433 = vadd.f32 %v3432, %v3402
      %v3434 = vadd.f32 %v3433, %v3403
      %v3435 = vadd.f32 %v3434, %v3404
      %v3436 = vadd.f32 %v3435, %v3405
      %v3437 = vadd.f32 %v3436, %v3406
      %v3438 = vadd.f32 %v3437, %v3407
      %v3439 = vadd.f32 %v3438, %v3408
      %v3440 = vadd.f32 %v3439, %v3409
      %v3441 = vadd.f32 %v3440, %v3410
      %v3442 = vadd.f32 %v3441, %v3411
      %v3443 = vadd.f32 %v3442, %v3412
      %v3444 = vadd.f32 %v3443, %v3413
      %v3445 = vadd.f32 %v3444, %v3414
      %v3446 = vadd.f32 %v3445, %v3415
      %v3447 = vadd.f32 %v3446, %v3416
      %v3448 = vadd.f32 %v3447, %v3417
      %v3449 = vadd.f32 %v3448, %v3418
      %v3450 = vadd.f32 %v3449, %v3419
      %v3451 = vadd.f32 %v3450, %v3420
      %v3452 = vadd.f32 %v3451, %v3421
      %v3453 = vadd.f32 %v3452, %v3422
      %v3454 = vadd.f32 %v3453, %v3423
      %v3455 = vadd.f32 %v3454, %v3424
      %v3456 = vadd.f32 %v3455, %v3425
      %v3457 = vadd.f32 %v3456, %v3426
      %v3458 = vrot.slane %v3457, 4
      %v3459 = vadd.f32 %v3457, %v3458
      %v3460 = vrot.slane %v3459, 2
      %v3461 = vadd.f32 %v3459, %v3460
      %v3462 = vrot.slane %v3461, 1
      %v3463 = vadd.f32 %v3461, %v3462
      %vm3464 = vcmask 1040384
      %v3465 = vsel %vm3464, %v3288, %v3357
      %vm3466 = vcmask 1041408
      %v3467 = vsel %vm3466, %v3465, %v3394
      %vm3468 = vcmask 1042432
      %v3469 = vsel %vm3468, %v3467, %v3463
      %3470 = vst [vmem:[%s247] sm:$0xf] %v3469
      %p3471 = scmp.lt.s32.totalorder %s17, 1
      %s3472 = scalar_select %p3471, %s17, 1
      %s3473 = smul.addr %s3472, 32
      %s3474 = smul.addr %s3473, 4
      %s3475 = scalar_lea.vmem %s3, %s3474
      %p3476 = scmp.lt.s32.totalorder %s17, 1
      %s3477 = scalar_select %p3476, %s17, 1
      %s3478 = smul.addr %s3477, 32
      %s3479 = smul.addr %s3478, 4
      %s3480 = scalar_lea.vmem %s4, %s3479
      %p3481 = scmp.lt.s32.totalorder %s17, 1
      %s3482 = scalar_select %p3481, %s17, 1
      %s3483 = smul.addr %s3482, 4
      %s3484 = scalar_lea.vmem %s5, %s3483
      // Predicated region
      $region33: #{forward.3} parent=31 // pred_check
        %p3485 = pneg %p103
      $region34: #{forward.3} parent=31 // pred_check_branch
        %3487 = sbr.rel (%p3485) target = $region36
      $region35: #{forward.3} parent=31 // pred_region
        _
      $region36: #{forward.3} parent=31 // pred_fallthru
        _
      // Predicated region
      $region37: #{forward.3} parent=31 // pred_check
        %p3488 = pneg %p129
      $region38: #{forward.3} parent=31 // pred_check_branch
        %3490 = sbr.rel (%p3488) target = $region40
      $region39: #{forward.3} parent=31 // pred_region
        _
      $region40: #{forward.3} parent=31 // pred_fallthru
        _
      // Predicated region
      $region41: #{forward.3} parent=31 // pred_check
        %p3491 = pneg %p155
      $region42: #{forward.3} parent=31 // pred_check_branch
        %3493 = sbr.rel (%p3491) target = $region44
      $region43: #{forward.3} parent=31 // pred_region
        _
      $region44: #{forward.3} parent=31 // pred_fallthru
        _
    $region32: #{forward.3} parent=5 // pred_fallthru
      _
    %p3494 = scmp.le.s32.totalorder 2, %s12
    // Predicated region
    $region45: #{forward.3} parent=5 // pred_check
      %p3495 = pneg %p3494
    $region46: #{forward.3} parent=5 // pred_check_branch
      %3497 = sbr.rel (%p3495) target = $region48
    $region47: #{forward.3} parent=5 // pred_region
      %s3498 = ssub.s32 %s12, 2
      // Predicated region
      $region49: #{forward.3} parent=47 // pred_check
        %p3499 = pneg %p109
      $region50: #{forward.3} parent=47 // pred_check_branch
        %3501 = sbr.rel (%p3499) target = $region52
      $region51: #{forward.3} parent=47 // pred_region
        %p3502 = scmp.lt.s32.totalorder %s18, 1
        %s3503 = scalar_select %p3502, %s18, 1
        %s3504 = smul.addr %s3503, 32
        %s3505 = smul.addr %s3504, 4
        %s3506 = scalar_lea.vmem %s3, %s3505
      $region52: #{forward.3} parent=47 // pred_fallthru
        _
      // Predicated region
      $region53: #{forward.3} parent=47 // pred_check
        %p3507 = pneg %p135
      $region54: #{forward.3} parent=47 // pred_check_branch
        %3509 = sbr.rel (%p3507) target = $region56
      $region55: #{forward.3} parent=47 // pred_region
        %p3510 = scmp.lt.s32.totalorder %s18, 1
        %s3511 = scalar_select %p3510, %s18, 1
        %s3512 = smul.addr %s3511, 32
        %s3513 = smul.addr %s3512, 4
        %s3514 = scalar_lea.vmem %s4, %s3513
      $region56: #{forward.3} parent=47 // pred_fallthru
        _
      // Predicated region
      $region57: #{forward.3} parent=47 // pred_check
        %p3515 = pneg %p161
      $region58: #{forward.3} parent=47 // pred_check_branch
        %3517 = sbr.rel (%p3515) target = $region60
      $region59: #{forward.3} parent=47 // pred_region
        %p3518 = scmp.lt.s32.totalorder %s18, 1
        %s3519 = scalar_select %p3518, %s18, 1
        %s3520 = smul.addr %s3519, 4
        %s3521 = scalar_lea.vmem %s5, %s3520
      $region60: #{forward.3} parent=47 // pred_fallthru
        _
    $region48: #{forward.3} parent=5 // pred_fallthru
      _
  $region6: #{forward.3} parent=0 // loop_footer
    %s16 = sadd.s32 1, %s12
  $region7: #{forward.3} parent=0 // loop_footer_branch
    %11 = sbr.rel target = $region3
  $region8: #{forward.3} parent=0 // loop_exit
    _

// kernel: forward.5
$region0: #{forward.5}
  #allocation0 [shape = 'u32[]', space=smem, size = 0x4, offset = 0x4, fixed_abs, tag = 'smem constant byte address 0x4 - core index']
  #allocation1 [shape = 'u32[72,128]{1,0:T(1,128)}', space=vmem, size = 0x9000, scoped, tag = 'internal scratch']
  %s0 = inlined_call_operand.vmem [shape: bf16[2,256,128], index: 0, kind: input, shape index: {}]
  %s1 = inlined_call_operand.vmem [shape: bf16[2,256,128], index: 1, kind: input, shape index: {}]
  %s2 = inlined_call_operand.vmem [shape: bf16[2,128,128], index: 2, kind: input, shape index: {}]
  %s3 = inlined_call_operand.vmem [shape: f32[1,128], index: 3, kind: input, shape index: {}]
  %s4 = inlined_call_operand.vmem [shape: f32[1,128], index: 4, kind: input, shape index: {}]
  %s5 = inlined_call_operand.vmem [shape: f32[1,128], index: 5, kind: input, shape index: {}]
  %s6 = inlined_call_operand.vmem [shape: f32[1,128], index: 6, kind: input, shape index: {}]
  %s7 = inlined_call_operand.vmem [shape: f32[1,128], index: 7, kind: input, shape index: {}]
  %s8 = inlined_call_operand.vmem [shape: f32[1,128], index: 8, kind: input, shape index: {}]
  %s9 = inlined_call_operand.vmem [shape: f32[2,256,128], index: 9, kind: output, shape index: {}]
  %s10 = sld [smem:[#allocation0]]
  $region69: #{forward.5} parent=0
    _
  %s12 = ssub.s32 1, %s10
  %s13 = scalar_select 0, %s12, %s10
  loop: start=0, step=1, limit=4
  $region2: #{forward.5} parent=0 // loop_pre_header
    _
  $region3: #{forward.5} parent=0 // loop_header
    %s15 = sphi 0, %s19
    %p16 = scmp.ge.s32.totalorder %s15, 4
    %s22 = sphi 0, %s34
    %s23 = sphi 0, %s30
    %s24 = sphi 0, %s22
    %s25 = sphi 0, %s23
    %s26 = sphi 0, %s24
    %s27 = sphi 0, %s25
    %s39 = sphi 0, %s41
    %s42 = sphi 0, %s39
    %s43 = sphi 0, %s42
    %s59 = sphi 0, %s43
    %s67 = sphi 0, %s69
    %s70 = sphi 0, %s67
    %s71 = sphi 0, %s70
    %s87 = sphi 0, %s71
    %s93 = sphi 0, %s95
    %s96 = sphi 0, %s93
    %s97 = sphi 0, %s96
    %s113 = sphi 0, %s97
    %s117 = sphi 0, %s117
    %s119 = sphi 0, %s117
    %s120 = sphi 0, %s119
    %s134 = sphi 0, %s120
    %s138 = sphi 0, %s138
    %s140 = sphi 0, %s138
    %s141 = sphi 0, %s140
    %s155 = sphi 0, %s141
    %s159 = sphi 0, %s159
    %s161 = sphi 0, %s159
    %s162 = sphi 0, %s161
    %s176 = sphi 0, %s162
    %s180 = sphi 0, %s180
    %s182 = sphi 0, %s180
    %s183 = sphi 0, %s182
    %s197 = sphi 0, %s183
    %s201 = sphi 0, %s201
    %s203 = sphi 0, %s201
    %s204 = sphi 0, %s203
    %s218 = sphi 0, %s204
    %s222 = sphi 0, %s222
    %s224 = sphi 0, %s222
    %s225 = sphi 0, %s224
    %s239 = sphi 0, %s225
    %s247 = sphi 0, %s249
    %s250 = sphi 0, %s247
    %s251 = sphi 0, %s250
    %s267 = sphi 0, %s251
  $region4: #{forward.5} parent=0 // loop_header_branch
    %18 = sbr.rel (%p16) target = $region8
  $region5: #{forward.5} parent=0 // loop_body
    %s20 = ssub.s32 %s15, 1
    %s21 = ssub.s32 %s15, 2
    %s28 = sadd.s32 1, %s23
    %p29 = scmp.ge.s32.totalorder %s28, 1
    %s30 = scalar_select %p29, 0, %s28
    %s31 = sadd.s32 1, %s22
    %s32 = scalar_select %p29, %s31, %s22
    %p33 = scmp.ge.s32.totalorder %s32, 2
    %s34 = scalar_select %p33, 0, %s32
    %s35 = ssub.s32 %s22, %s34
    %s36 = ssub.s32 %s23, %s30
    %s37 = sor.u32 %s35, %s36
    %p38 = scmp.eq.s32.totalorder %s37, 0
    %s40 = sadd.s32 %s39, 1
    %s41 = scalar_select %p38, %s39, %s40
    %p44 = pneg %p38
    %p45 = scmp.eq.s32.totalorder %s15, 1
    %p46 = por %p44, %p45
    %p47 = scmp.ne.s32.totalorder %s39, %s42
    %p48 = scmp.eq.s32.totalorder %s15, 0
    %p49 = por %p47, %p48
    %p50 = scmp.ne.s32.totalorder %s39, %s42
    %p51 = scmp.eq.s32.totalorder %s20, 1
    %p52 = por %p50, %p51
    %p53 = scmp.ne.s32.totalorder %s42, %s43
    %p54 = scmp.eq.s32.totalorder %s20, 0
    %p55 = por %p53, %p54
    %p56 = scmp.ne.s32.totalorder %s42, %s43
    %p57 = scmp.eq.s32.totalorder %s21, 1
    %p58 = por %p56, %p57
    %p60 = scmp.ne.s32.totalorder %s43, %s59
    %p61 = scmp.eq.s32.totalorder %s21, 0
    %p62 = por %p60, %p61
    %s63 = ssub.s32 %s22, %s34
    %s64 = ssub.s32 %s23, %s30
    %s65 = sor.u32 %s63, %s64
    %p66 = scmp.eq.s32.totalorder %s65, 0
    %s68 = sadd.s32 %s67, 1
    %s69 = scalar_select %p66, %s67, %s68
    %p72 = pneg %p66
    %p73 = scmp.eq.s32.totalorder %s15, 1
    %p74 = por %p72, %p73
    %p75 = scmp.ne.s32.totalorder %s67, %s70
    %p76 = scmp.eq.s32.totalorder %s15, 0
    %p77 = por %p75, %p76
    %p78 = scmp.ne.s32.totalorder %s67, %s70
    %p79 = scmp.eq.s32.totalorder %s20, 1
    %p80 = por %p78, %p79
    %p81 = scmp.ne.s32.totalorder %s70, %s71
    %p82 = scmp.eq.s32.totalorder %s20, 0
    %p83 = por %p81, %p82
    %p84 = scmp.ne.s32.totalorder %s70, %s71
    %p85 = scmp.eq.s32.totalorder %s21, 1
    %p86 = por %p84, %p85
    %p88 = scmp.ne.s32.totalorder %s71, %s87
    %p89 = scmp.eq.s32.totalorder %s21, 0
    %p90 = por %p88, %p89
    %s91 = ssub.s32 %s22, %s34
    %p92 = scmp.eq.s32.totalorder %s91, 0
    %s94 = sadd.s32 %s93, 1
    %s95 = scalar_select %p92, %s93, %s94
    %p98 = pneg %p92
    %p99 = scmp.eq.s32.totalorder %s15, 1
    %p100 = por %p98, %p99
    %p101 = scmp.ne.s32.totalorder %s93, %s96
    %p102 = scmp.eq.s32.totalorder %s15, 0
    %p103 = por %p101, %p102
    %p104 = scmp.ne.s32.totalorder %s93, %s96
    %p105 = scmp.eq.s32.totalorder %s20, 1
    %p106 = por %p104, %p105
    %p107 = scmp.ne.s32.totalorder %s96, %s97
    %p108 = scmp.eq.s32.totalorder %s20, 0
    %p109 = por %p107, %p108
    %p110 = scmp.ne.s32.totalorder %s96, %s97
    %p111 = scmp.eq.s32.totalorder %s21, 1
    %p112 = por %p110, %p111
    %p114 = scmp.ne.s32.totalorder %s97, %s113
    %p115 = scmp.eq.s32.totalorder %s21, 0
    %p116 = por %p114, %p115
    %s118 = sadd.s32 %s117, 1
    %p121 = scmp.eq.s32.totalorder %s15, 1
    %p122 = scmp.ne.s32.totalorder %s117, %s119
    %p123 = scmp.eq.s32.totalorder %s15, 0
    %p124 = por %p122, %p123
    %p125 = scmp.ne.s32.totalorder %s117, %s119
    %p126 = scmp.eq.s32.totalorder %s20, 1
    %p127 = por %p125, %p126
    %p128 = scmp.ne.s32.totalorder %s119, %s120
    %p129 = scmp.eq.s32.totalorder %s20, 0
    %p130 = por %p128, %p129
    %p131 = scmp.ne.s32.totalorder %s119, %s120
    %p132 = scmp.eq.s32.totalorder %s21, 1
    %p133 = por %p131, %p132
    %p135 = scmp.ne.s32.totalorder %s120, %s134
    %p136 = scmp.eq.s32.totalorder %s21, 0
    %p137 = por %p135, %p136
    %s139 = sadd.s32 %s138, 1
    %p142 = scmp.eq.s32.totalorder %s15, 1
    %p143 = scmp.ne.s32.totalorder %s138, %s140
    %p144 = scmp.eq.s32.totalorder %s15, 0
    %p145 = por %p143, %p144
    %p146 = scmp.ne.s32.totalorder %s138, %s140
    %p147 = scmp.eq.s32.totalorder %s20, 1
    %p148 = por %p146, %p147
    %p149 = scmp.ne.s32.totalorder %s140, %s141
    %p150 = scmp.eq.s32.totalorder %s20, 0
    %p151 = por %p149, %p150
    %p152 = scmp.ne.s32.totalorder %s140, %s141
    %p153 = scmp.eq.s32.totalorder %s21, 1
    %p154 = por %p152, %p153
    %p156 = scmp.ne.s32.totalorder %s141, %s155
    %p157 = scmp.eq.s32.totalorder %s21, 0
    %p158 = por %p156, %p157
    %s160 = sadd.s32 %s159, 1
    %p163 = scmp.eq.s32.totalorder %s15, 1
    %p164 = scmp.ne.s32.totalorder %s159, %s161
    %p165 = scmp.eq.s32.totalorder %s15, 0
    %p166 = por %p164, %p165
    %p167 = scmp.ne.s32.totalorder %s159, %s161
    %p168 = scmp.eq.s32.totalorder %s20, 1
    %p169 = por %p167, %p168
    %p170 = scmp.ne.s32.totalorder %s161, %s162
    %p171 = scmp.eq.s32.totalorder %s20, 0
    %p172 = por %p170, %p171
    %p173 = scmp.ne.s32.totalorder %s161, %s162
    %p174 = scmp.eq.s32.totalorder %s21, 1
    %p175 = por %p173, %p174
    %p177 = scmp.ne.s32.totalorder %s162, %s176
    %p178 = scmp.eq.s32.totalorder %s21, 0
    %p179 = por %p177, %p178
    %s181 = sadd.s32 %s180, 1
    %p184 = scmp.eq.s32.totalorder %s15, 1
    %p185 = scmp.ne.s32.totalorder %s180, %s182
    %p186 = scmp.eq.s32.totalorder %s15, 0
    %p187 = por %p185, %p186
    %p188 = scmp.ne.s32.totalorder %s180, %s182
    %p189 = scmp.eq.s32.totalorder %s20, 1
    %p190 = por %p188, %p189
    %p191 = scmp.ne.s32.totalorder %s182, %s183
    %p192 = scmp.eq.s32.totalorder %s20, 0
    %p193 = por %p191, %p192
    %p194 = scmp.ne.s32.totalorder %s182, %s183
    %p195 = scmp.eq.s32.totalorder %s21, 1
    %p196 = por %p194, %p195
    %p198 = scmp.ne.s32.totalorder %s183, %s197
    %p199 = scmp.eq.s32.totalorder %s21, 0
    %p200 = por %p198, %p199
    %s202 = sadd.s32 %s201, 1
    %p205 = scmp.eq.s32.totalorder %s15, 1
    %p206 = scmp.ne.s32.totalorder %s201, %s203
    %p207 = scmp.eq.s32.totalorder %s15, 0
    %p208 = por %p206, %p207
    %p209 = scmp.ne.s32.totalorder %s201, %s203
    %p210 = scmp.eq.s32.totalorder %s20, 1
    %p211 = por %p209, %p210
    %p212 = scmp.ne.s32.totalorder %s203, %s204
    %p213 = scmp.eq.s32.totalorder %s20, 0
    %p214 = por %p212, %p213
    %p215 = scmp.ne.s32.totalorder %s203, %s204
    %p216 = scmp.eq.s32.totalorder %s21, 1
    %p217 = por %p215, %p216
    %p219 = scmp.ne.s32.totalorder %s204, %s218
    %p220 = scmp.eq.s32.totalorder %s21, 0
    %p221 = por %p219, %p220
    %s223 = sadd.s32 %s222, 1
    %p226 = scmp.eq.s32.totalorder %s15, 1
    %p227 = scmp.ne.s32.totalorder %s222, %s224
    %p228 = scmp.eq.s32.totalorder %s15, 0
    %p229 = por %p227, %p228
    %p230 = scmp.ne.s32.totalorder %s222, %s224
    %p231 = scmp.eq.s32.totalorder %s20, 1
    %p232 = por %p230, %p231
    %p233 = scmp.ne.s32.totalorder %s224, %s225
    %p234 = scmp.eq.s32.totalorder %s20, 0
    %p235 = por %p233, %p234
    %p236 = scmp.ne.s32.totalorder %s224, %s225
    %p237 = scmp.eq.s32.totalorder %s21, 1
    %p238 = por %p236, %p237
    %p240 = scmp.ne.s32.totalorder %s225, %s239
    %p241 = scmp.eq.s32.totalorder %s21, 0
    %p242 = por %p240, %p241
    %s243 = ssub.s32 %s22, %s34
    %s244 = ssub.s32 %s23, %s30
    %s245 = sor.u32 %s243, %s244
    %p246 = scmp.eq.s32.totalorder %s245, 0
    %s248 = sadd.s32 %s247, 1
    %s249 = scalar_select %p246, %s247, %s248
    %p252 = pneg %p246
    %p253 = scmp.eq.s32.totalorder %s15, 1
    %p254 = por %p252, %p253
    %p255 = scmp.ne.s32.totalorder %s247, %s250
    %p256 = scmp.eq.s32.totalorder %s15, 0
    %p257 = por %p255, %p256
    %p258 = scmp.ne.s32.totalorder %s247, %s250
    %p259 = scmp.eq.s32.totalorder %s20, 1
    %p260 = por %p258, %p259
    %p261 = scmp.ne.s32.totalorder %s250, %s251
    %p262 = scmp.eq.s32.totalorder %s20, 0
    %p263 = por %p261, %p262
    %p264 = scmp.ne.s32.totalorder %s250, %s251
    %p265 = scmp.eq.s32.totalorder %s21, 1
    %p266 = por %p264, %p265
    %p268 = scmp.ne.s32.totalorder %s251, %s267
    %p269 = scmp.eq.s32.totalorder %s21, 0
    %p270 = por %p268, %p269
    %p271 = scmp.le.s32.totalorder 1, %s15
    %p272 = scmp.lt.s32.totalorder %s15, 3
    %p273 = pnand %p271, %p272
    %p274 = pneg %p273
    // Predicated region
    $region9: #{forward.5} parent=5 // pred_check
      _
    $region10: #{forward.5} parent=5 // pred_check_branch
      %276 = sbr.rel (%p273) target = $region12
    $region11: #{forward.5} parent=5 // pred_region
      %s277 = ssub.s32 %s15, 1
      // Predicated region
      $region13: #{forward.5} parent=11 // pred_check
        %p278 = pneg %p130
      $region14: #{forward.5} parent=11 // pred_check_branch
        %280 = sbr.rel (%p278) target = $region16
      $region15: #{forward.5} parent=11 // pred_region
        _
      $region16: #{forward.5} parent=11 // pred_fallthru
        _
      // Predicated region
      $region17: #{forward.5} parent=11 // pred_check
        %p281 = pneg %p151
      $region18: #{forward.5} parent=11 // pred_check_branch
        %283 = sbr.rel (%p281) target = $region20
      $region19: #{forward.5} parent=11 // pred_region
        _
      $region20: #{forward.5} parent=11 // pred_fallthru
        _
      // Predicated region
      $region21: #{forward.5} parent=11 // pred_check
        %p284 = pneg %p172
      $region22: #{forward.5} parent=11 // pred_check_branch
        %286 = sbr.rel (%p284) target = $region24
      $region23: #{forward.5} parent=11 // pred_region
        _
      $region24: #{forward.5} parent=11 // pred_fallthru
        _
      // Predicated region
      $region25: #{forward.5} parent=11 // pred_check
        %p287 = pneg %p193
      $region26: #{forward.5} parent=11 // pred_check_branch
        %289 = sbr.rel (%p287) target = $region28
      $region27: #{forward.5} parent=11 // pred_region
        _
      $region28: #{forward.5} parent=11 // pred_fallthru
        _
      // Predicated region
      $region29: #{forward.5} parent=11 // pred_check
        %p290 = pneg %p214
      $region30: #{forward.5} parent=11 // pred_check_branch
        %292 = sbr.rel (%p290) target = $region32
      $region31: #{forward.5} parent=11 // pred_region
        _
      $region32: #{forward.5} parent=11 // pred_fallthru
        _
      // Predicated region
      $region33: #{forward.5} parent=11 // pred_check
        %p293 = pneg %p235
      $region34: #{forward.5} parent=11 // pred_check_branch
        %295 = sbr.rel (%p293) target = $region36
      $region35: #{forward.5} parent=11 // pred_region
        _
      $region36: #{forward.5} parent=11 // pred_fallthru
        _
    $region12: #{forward.5} parent=5 // pred_fallthru
      _
    %p296 = scmp.lt.s32.totalorder %s15, 2
    // Predicated region
    $region37: #{forward.5} parent=5 // pred_check
      %p297 = pneg %p296
    $region38: #{forward.5} parent=5 // pred_check_branch
      %299 = sbr.rel (%p297) target = $region40
    $region39: #{forward.5} parent=5 // pred_region
      // Predicated region
      $region41: #{forward.5} parent=39 // pred_check
        %p300 = pneg %p49
      $region42: #{forward.5} parent=39 // pred_check_branch
        %302 = sbr.rel (%p300) target = $region44
      $region43: #{forward.5} parent=39 // pred_region
        %s303 = smul.u32 32, %s23
        %p304 = scmp.lt.s32.totalorder %s22, 1
        %s305 = scalar_select %p304, %s22, 1
        %p306 = scmp.lt.s32.totalorder %s303, 31
        %s307 = scalar_select %p306, %s303, 31
        %s308 = smul.addr %s305, 32
        %s309 = sadd.s32 %s307, %s308
        %s310 = smul.addr %s309, 4
        %s311 = scalar_lea.vmem %s0, %s310
        %s312 = smul.u32 32, %s23
      $region44: #{forward.5} parent=39 // pred_fallthru
        _
      // Predicated region
      $region45: #{forward.5} parent=39 // pred_check
        %p313 = pneg %p77
      $region46: #{forward.5} parent=39 // pred_check_branch
        %315 = sbr.rel (%p313) target = $region48
      $region47: #{forward.5} parent=39 // pred_region
        %s316 = smul.u32 32, %s23
        %p317 = scmp.lt.s32.totalorder %s22, 1
        %s318 = scalar_select %p317, %s22, 1
        %p319 = scmp.lt.s32.totalorder %s316, 31
        %s320 = scalar_select %p319, %s316, 31
        %s321 = smul.addr %s318, 32
        %s322 = sadd.s32 %s320, %s321
        %s323 = smul.addr %s322, 4
        %s324 = scalar_lea.vmem %s1, %s323
        %s325 = smul.u32 32, %s23
      $region48: #{forward.5} parent=39 // pred_fallthru
        _
      // Predicated region
      $region49: #{forward.5} parent=39 // pred_check
        %p326 = pneg %p103
      $region50: #{forward.5} parent=39 // pred_check_branch
        %328 = sbr.rel (%p326) target = $region52
      $region51: #{forward.5} parent=39 // pred_region
        %p329 = scmp.lt.s32.totalorder %s22, 1
        %s330 = scalar_select %p329, %s22, 1
        %s331 = smul.addr %s330, 16
        %s332 = smul.addr %s331, 4
        %s333 = scalar_lea.vmem %s2, %s332
      $region52: #{forward.5} parent=39 // pred_fallthru
        _
    $region40: #{forward.5} parent=5 // pred_fallthru
      _
    %p334 = scmp.le.s32.totalorder 1, %s15
    %p335 = scmp.lt.s32.totalorder %s15, 3
    %p336 = pnand %p334, %p335
    %p337 = pneg %p336
    // Predicated region
    $region53: #{forward.5} parent=5 // pred_check
      _
    $region54: #{forward.5} parent=5 // pred_check_branch
      %339 = sbr.rel (%p336) target = $region56
    $region55: #{forward.5} parent=5 // pred_region
      %s340 = ssub.s32 %s15, 1
      %s341 = smul.u32 32, %s25
      %p342 = scmp.lt.s32.totalorder %s24, 1
      %s343 = scalar_select %p342, %s24, 1
      %p344 = scmp.lt.s32.totalorder %s341, 31
      %s345 = scalar_select %p344, %s341, 31
      %s346 = smul.addr %s343, 32
      %s347 = sadd.s32 %s345, %s346
      %s348 = smul.addr %s347, 4
      %s349 = scalar_lea.vmem %s0, %s348
      %p350 = pneg %p55
      %p351 = pneg %p52
      %s352 = smul.u32 32, %s25
      %p353 = scmp.lt.s32.totalorder %s24, 1
      %s354 = scalar_select %p353, %s24, 1
      %p355 = scmp.lt.s32.totalorder %s352, 31
      %s356 = scalar_select %p355, %s352, 31
      %s357 = smul.addr %s354, 32
      %s358 = sadd.s32 %s356, %s357
      %s359 = smul.addr %s358, 4
      %s360 = scalar_lea.vmem %s1, %s359
      %p361 = pneg %p83
      %p362 = pneg %p80
      %p363 = scmp.lt.s32.totalorder %s24, 1
      %s364 = scalar_select %p363, %s24, 1
      %s365 = smul.addr %s364, 16
      %s366 = smul.addr %s365, 4
      %s367 = scalar_lea.vmem %s2, %s366
      %p368 = pneg %p109
      %p369 = pneg %p106
      %p370 = pneg %p130
      %p371 = pneg %p127
      %p372 = pneg %p151
      %p373 = pneg %p148
      %p374 = pneg %p172
      %p375 = pneg %p169
      %p376 = pneg %p193
      %p377 = pneg %p190
      %p378 = pneg %p214
      %p379 = pneg %p211
      %p380 = pneg %p235
      %p381 = pneg %p232
      %p382 = pneg %p263
      %p383 = pneg %p260
      %s384 = smul.u32 32, %s25
      %p385 = scmp.lt.s32.totalorder %s24, 1
      %s386 = scalar_select %p385, %s24, 1
      %p387 = scmp.lt.s32.totalorder %s384, 31
      %s388 = scalar_select %p387, %s384, 31
      %s389 = smul.addr %s386, 32
      %s390 = sadd.s32 %s388, %s389
      %s391 = smul.addr %s390, 8
      %s392 = scalar_lea.vmem %s9, %s391
      %s393 = smul.u32 32, %s25
      %p394 = scmp.lt.s32.totalorder %s24, 1
      %s395 = scalar_select %p394, %s24, 1
      %p396 = scmp.lt.s32.totalorder %s393, 31
      %s397 = scalar_select %p396, %s393, 31
      %s398 = smul.addr %s395, 32
      %s399 = sadd.s32 %s397, %s398
      %s400 = smul.addr %s399, 4
      %s401 = scalar_lea.vmem %s0, %s400
      %s402 = smul.u32 32, %s25
      %s403 = smul.u32 32, %s25
      %p404 = scmp.lt.s32.totalorder %s24, 1
      %s405 = scalar_select %p404, %s24, 1
      %p406 = scmp.lt.s32.totalorder %s403, 31
      %s407 = scalar_select %p406, %s403, 31
      %s408 = smul.addr %s405, 32
      %s409 = sadd.s32 %s407, %s408
      %s410 = smul.addr %s409, 4
      %s411 = scalar_lea.vmem %s1, %s410
      %s412 = smul.u32 32, %s25
      %p413 = scmp.lt.s32.totalorder %s24, 1
      %s414 = scalar_select %p413, %s24, 1
      %s415 = smul.addr %s414, 16
      %s416 = smul.addr %s415, 4
      %s417 = scalar_lea.vmem %s2, %s416
      %s418 = smul.u32 32, %s25
      %p419 = scmp.lt.s32.totalorder %s24, 1
      %s420 = scalar_select %p419, %s24, 1
      %p421 = scmp.lt.s32.totalorder %s418, 31
      %s422 = scalar_select %p421, %s418, 31
      %s423 = smul.addr %s420, 32
      %s424 = sadd.s32 %s422, %s423
      %s425 = smul.addr %s424, 8
      %s426 = scalar_lea.vmem %s9, %s425
      %s427 = smul.u32 32, %s25
      %v428 = vld [vmem:[%s401] sm:$0xf]
      %v429 = vld [vmem:[%s401 + $0x4] sm:$0xf]
      %v430 = vld [vmem:[%s401 + $0x8] sm:$0xf]
      %v431 = vld [vmem:[%s401 + $0xc] sm:$0xf]
      %v432 = vld [vmem:[%s401 + $0x10] sm:$0xf]
      %v433 = vld [vmem:[%s401 + $0x14] sm:$0xf]
      %v434 = vld [vmem:[%s401 + $0x18] sm:$0xf]
      %v435 = vld [vmem:[%s401 + $0x1c] sm:$0xf]
      %v436 = vld [vmem:[%s401 + $0x20] sm:$0xf]
      %v437 = vld [vmem:[%s401 + $0x24] sm:$0xf]
      %v438 = vld [vmem:[%s401 + $0x28] sm:$0xf]
      %v439 = vld [vmem:[%s401 + $0x2c] sm:$0xf]
      %v440 = vld [vmem:[%s401 + $0x30] sm:$0xf]
      %v441 = vld [vmem:[%s401 + $0x34] sm:$0xf]
      %v442 = vld [vmem:[%s401 + $0x38] sm:$0xf]
      %v443 = vld [vmem:[%s401 + $0x3c] sm:$0xf]
      %v444 = vld [vmem:[%s401 + $0x40] sm:$0xf]
      %v445 = vld [vmem:[%s401 + $0x44] sm:$0xf]
      %v446 = vld [vmem:[%s401 + $0x48] sm:$0xf]
      %v447 = vld [vmem:[%s401 + $0x4c] sm:$0xf]
      %v448 = vld [vmem:[%s401 + $0x50] sm:$0xf]
      %v449 = vld [vmem:[%s401 + $0x54] sm:$0xf]
      %v450 = vld [vmem:[%s401 + $0x58] sm:$0xf]
      %v451 = vld [vmem:[%s401 + $0x5c] sm:$0xf]
      %v452 = vld [vmem:[%s401 + $0x60] sm:$0xf]
      %v453 = vld [vmem:[%s401 + $0x64] sm:$0xf]
      %v454 = vld [vmem:[%s401 + $0x68] sm:$0xf]
      %v455 = vld [vmem:[%s401 + $0x6c] sm:$0xf]
      %v456 = vld [vmem:[%s401 + $0x70] sm:$0xf]
      %v457 = vld [vmem:[%s401 + $0x74] sm:$0xf]
      %v458 = vld [vmem:[%s401 + $0x78] sm:$0xf]
      %v459 = vld [vmem:[%s401 + $0x7c] sm:$0xf]
      %v460 = vld [vmem:[%s3] sm:$0x1]
      %v461 = vunpack.c.l.bf16 %v428
      %v462 = vunpack.c.l.bf16 %v429
      %v463 = vunpack.c.l.bf16 %v430
      %v464 = vunpack.c.l.bf16 %v431
      %v465 = vunpack.c.l.bf16 %v432
      %v466 = vunpack.c.l.bf16 %v433
      %v467 = vunpack.c.l.bf16 %v434
      %v468 = vunpack.c.l.bf16 %v435
      %v469 = vunpack.c.l.bf16 %v436
      %v470 = vunpack.c.l.bf16 %v437
      %v471 = vunpack.c.l.bf16 %v438
      %v472 = vunpack.c.l.bf16 %v439
      %v473 = vunpack.c.l.bf16 %v440
      %v474 = vunpack.c.l.bf16 %v441
      %v475 = vunpack.c.l.bf16 %v442
      %v476 = vunpack.c.l.bf16 %v443
      %v477 = vunpack.c.l.bf16 %v444
      %v478 = vunpack.c.l.bf16 %v445
      %v479 = vunpack.c.l.bf16 %v446
      %v480 = vunpack.c.l.bf16 %v447
      %v481 = vunpack.c.l.bf16 %v448
      %v482 = vunpack.c.l.bf16 %v449
      %v483 = vunpack.c.l.bf16 %v450
      %v484 = vunpack.c.l.bf16 %v451
      %v485 = vunpack.c.l.bf16 %v452
      %v486 = vunpack.c.l.bf16 %v453
      %v487 = vunpack.c.l.bf16 %v454
      %v488 = vunpack.c.l.bf16 %v455
      %v489 = vunpack.c.l.bf16 %v456
      %v490 = vunpack.c.l.bf16 %v457
      %v491 = vunpack.c.l.bf16 %v458
      %v492 = vunpack.c.l.bf16 %v459
      %v494 = vperm.slane %v460, 0
      %v496 = vmul.f32 %v461, %v494
      %v497 = vmul.f32 %v462, %v494
      %v498 = vmul.f32 %v463, %v494
      %v499 = vmul.f32 %v464, %v494
      %v500 = vmul.f32 %v465, %v494
      %v501 = vmul.f32 %v466, %v494
      %v502 = vmul.f32 %v467, %v494
      %v503 = vmul.f32 %v468, %v494
      %v504 = vmul.f32 %v469, %v494
      %v505 = vmul.f32 %v470, %v494
      %v506 = vmul.f32 %v471, %v494
      %v507 = vmul.f32 %v472, %v494
      %v508 = vmul.f32 %v473, %v494
      %v509 = vmul.f32 %v474, %v494
      %v510 = vmul.f32 %v475, %v494
      %v511 = vmul.f32 %v476, %v494
      %v512 = vmul.f32 %v477, %v494
      %v513 = vmul.f32 %v478, %v494
      %v514 = vmul.f32 %v479, %v494
      %v515 = vmul.f32 %v480, %v494
      %v516 = vmul.f32 %v481, %v494
      %v517 = vmul.f32 %v482, %v494
      %v518 = vmul.f32 %v483, %v494
      %v519 = vmul.f32 %v484, %v494
      %v520 = vmul.f32 %v485, %v494
      %v521 = vmul.f32 %v486, %v494
      %v522 = vmul.f32 %v487, %v494
      %v523 = vmul.f32 %v488, %v494
      %v524 = vmul.f32 %v489, %v494
      %v525 = vmul.f32 %v490, %v494
      %v526 = vmul.f32 %v491, %v494
      %v527 = vmul.f32 %v492, %v494
      %v528 = vld [vmem:[%s4] sm:$0x1]
      %v530 = vperm.slane %v528, 0
      %v532 = vadd.f32 %v496, %v530
      %v533 = vadd.f32 %v497, %v530
      %v534 = vadd.f32 %v498, %v530
      %v535 = vadd.f32 %v499, %v530
      %v536 = vadd.f32 %v500, %v530
      %v537 = vadd.f32 %v501, %v530
      %v538 = vadd.f32 %v502, %v530
      %v539 = vadd.f32 %v503, %v530
      %v540 = vadd.f32 %v504, %v530
      %v541 = vadd.f32 %v505, %v530
      %v542 = vadd.f32 %v506, %v530
      %v543 = vadd.f32 %v507, %v530
      %v544 = vadd.f32 %v508, %v530
      %v545 = vadd.f32 %v509, %v530
      %v546 = vadd.f32 %v510, %v530
      %v547 = vadd.f32 %v511, %v530
      %v548 = vadd.f32 %v512, %v530
      %v549 = vadd.f32 %v513, %v530
      %v550 = vadd.f32 %v514, %v530
      %v551 = vadd.f32 %v515, %v530
      %v552 = vadd.f32 %v516, %v530
      %v553 = vadd.f32 %v517, %v530
      %v554 = vadd.f32 %v518, %v530
      %v555 = vadd.f32 %v519, %v530
      %v556 = vadd.f32 %v520, %v530
      %v557 = vadd.f32 %v521, %v530
      %v558 = vadd.f32 %v522, %v530
      %v559 = vadd.f32 %v523, %v530
      %v560 = vadd.f32 %v524, %v530
      %v561 = vadd.f32 %v525, %v530
      %v562 = vadd.f32 %v526, %v530
      %v563 = vadd.f32 %v527, %v530
      %v564 = vmax.f32 %v532, 0.0
      %v565 = vmax.f32 %v533, 0.0
      %v566 = vmax.f32 %v534, 0.0
      %v567 = vmax.f32 %v535, 0.0
      %v568 = vmax.f32 %v536, 0.0
      %v569 = vmax.f32 %v537, 0.0
      %v570 = vmax.f32 %v538, 0.0
      %v571 = vmax.f32 %v539, 0.0
      %v572 = vmax.f32 %v540, 0.0
      %v573 = vmax.f32 %v541, 0.0
      %v574 = vmax.f32 %v542, 0.0
      %v575 = vmax.f32 %v543, 0.0
      %v576 = vmax.f32 %v544, 0.0
      %v577 = vmax.f32 %v545, 0.0
      %v578 = vmax.f32 %v546, 0.0
      %v579 = vmax.f32 %v547, 0.0
      %v580 = vmax.f32 %v548, 0.0
      %v581 = vmax.f32 %v549, 0.0
      %v582 = vmax.f32 %v550, 0.0
      %v583 = vmax.f32 %v551, 0.0
      %v584 = vmax.f32 %v552, 0.0
      %v585 = vmax.f32 %v553, 0.0
      %v586 = vmax.f32 %v554, 0.0
      %v587 = vmax.f32 %v555, 0.0
      %v588 = vmax.f32 %v556, 0.0
      %v589 = vmax.f32 %v557, 0.0
      %v590 = vmax.f32 %v558, 0.0
      %v591 = vmax.f32 %v559, 0.0
      %v592 = vmax.f32 %v560, 0.0
      %v593 = vmax.f32 %v561, 0.0
      %v594 = vmax.f32 %v562, 0.0
      %v595 = vmax.f32 %v563, 0.0
      %v596 = vpack.c.bf16 %v565, %v564
      %v597 = vpack.c.bf16 %v567, %v566
      %v598 = vpack.c.bf16 %v569, %v568
      %v599 = vpack.c.bf16 %v571, %v570
      %v600 = vpack.c.bf16 %v573, %v572
      %v601 = vpack.c.bf16 %v575, %v574
      %v602 = vpack.c.bf16 %v577, %v576
      %v603 = vpack.c.bf16 %v579, %v578
      %v604 = vpack.c.bf16 %v581, %v580
      %v605 = vpack.c.bf16 %v583, %v582
      %v606 = vpack.c.bf16 %v585, %v584
      %v607 = vpack.c.bf16 %v587, %v586
      %v608 = vpack.c.bf16 %v589, %v588
      %v609 = vpack.c.bf16 %v591, %v590
      %v610 = vpack.c.bf16 %v593, %v592
      %v611 = vpack.c.bf16 %v595, %v594
      %v612 = vld [vmem:[%s417] sm:$0xf]
      %v613 = vld [vmem:[%s417 + $0x4] sm:$0xf]
      %v614 = vld [vmem:[%s417 + $0x8] sm:$0xf]
      %v615 = vld [vmem:[%s417 + $0xc] sm:$0xf]
      %v616 = vld [vmem:[%s417 + $0x10] sm:$0xf]
      %v617 = vld [vmem:[%s417 + $0x14] sm:$0xf]
      %v618 = vld [vmem:[%s417 + $0x18] sm:$0xf]
      %v619 = vld [vmem:[%s417 + $0x1c] sm:$0xf]
      %v620 = vld [vmem:[%s417 + $0x20] sm:$0xf]
      %v621 = vld [vmem:[%s417 + $0x24] sm:$0xf]
      %v622 = vld [vmem:[%s417 + $0x28] sm:$0xf]
      %v623 = vld [vmem:[%s417 + $0x2c] sm:$0xf]
      %v624 = vld [vmem:[%s417 + $0x30] sm:$0xf]
      %v625 = vld [vmem:[%s417 + $0x34] sm:$0xf]
      %v626 = vld [vmem:[%s417 + $0x38] sm:$0xf]
      %v627 = vld [vmem:[%s417 + $0x3c] sm:$0xf]
      %v644 = vunpack.c.l.b16 %v612
      %v645 = vunpack.c.l.b16 %v613
      %v646 = vunpack.c.l.b16 %v614
      %v647 = vunpack.c.l.b16 %v615
      %v648 = vunpack.c.l.b16 %v616
      %v649 = vunpack.c.l.b16 %v617
      %v650 = vunpack.c.l.b16 %v618
      %v651 = vunpack.c.l.b16 %v619
      %v652 = vunpack.c.l.b16 %v620
      %v653 = vunpack.c.l.b16 %v621
      %v654 = vunpack.c.l.b16 %v622
      %v655 = vunpack.c.l.b16 %v623
      %v656 = vunpack.c.l.b16 %v624
      %v657 = vunpack.c.l.b16 %v625
      %v658 = vunpack.c.l.b16 %v626
      %v659 = vunpack.c.l.b16 %v627
      %v660 = vpack.c.b16 %v645, %v644
      %v661 = vpack.c.b16 %v647, %v646
      %v662 = vpack.c.b16 %v649, %v648
      %v663 = vpack.c.b16 %v651, %v650
      %v664 = vpack.c.b16 %v653, %v652
      %v665 = vpack.c.b16 %v655, %v654
      %v666 = vpack.c.b16 %v657, %v656
      %v667 = vpack.c.b16 %v659, %v658
      %676 = vmatpush.bf16.msra.mxu0 %v667
      %677 = vmatpush.bf16.msra.mxu0 %v666
      %678 = vmatpush.bf16.msra.mxu0 %v665
      %679 = vmatpush.bf16.msra.mxu0 %v664
      %680 = vmatpush.bf16.msra.mxu0 %v663
      %681 = vmatpush.bf16.msra.mxu0 %v662
      %682 = vmatpush.bf16.msra.mxu0 %v661
      %683 = vmatpush.bf16.msra.mxu0 %v660
      %684 = vmatmul.bf16.gmra.mxu0 %v596
      %v685 = vpop.f32.mrf.mxu0
      %v686 = vadd.f32 0.0, %v685
      %v687 = vpop.f32.mrf.mxu0
      %v688 = vadd.f32 0.0, %v687
      %689 = vmatmul.bf16.gmra.mxu0 %v597
      %v690 = vpop.f32.mrf.mxu0
      %v691 = vadd.f32 0.0, %v690
      %v692 = vpop.f32.mrf.mxu0
      %v693 = vadd.f32 0.0, %v692
      %694 = vmatmul.bf16.gmra.mxu0 %v598
      %v695 = vpop.f32.mrf.mxu0
      %v696 = vadd.f32 0.0, %v695
      %v697 = vpop.f32.mrf.mxu0
      %v698 = vadd.f32 0.0, %v697
      %699 = vmatmul.bf16.gmra.mxu0 %v599
      %v700 = vpop.f32.mrf.mxu0
      %v701 = vadd.f32 0.0, %v700
      %v702 = vpop.f32.mrf.mxu0
      %v703 = vadd.f32 0.0, %v702
      %704 = vmatmul.bf16.gmra.mxu0 %v600
      %v705 = vpop.f32.mrf.mxu0
      %v706 = vadd.f32 0.0, %v705
      %v707 = vpop.f32.mrf.mxu0
      %v708 = vadd.f32 0.0, %v707
      %709 = vmatmul.bf16.gmra.mxu0 %v601
      %v710 = vpop.f32.mrf.mxu0
      %v711 = vadd.f32 0.0, %v710
      %v712 = vpop.f32.mrf.mxu0
      %v713 = vadd.f32 0.0, %v712
      %714 = vmatmul.bf16.gmra.mxu0 %v602
      %v715 = vpop.f32.mrf.mxu0
      %v716 = vadd.f32 0.0, %v715
      %v717 = vpop.f32.mrf.mxu0
      %v718 = vadd.f32 0.0, %v717
      %719 = vmatmul.bf16.gmra.mxu0 %v603
      %v720 = vpop.f32.mrf.mxu0
      %v721 = vadd.f32 0.0, %v720
      %v722 = vpop.f32.mrf.mxu0
      %v723 = vadd.f32 0.0, %v722
      %724 = vmatmul.bf16.gmra.mxu0 %v604
      %v725 = vpop.f32.mrf.mxu0
      %v726 = vadd.f32 0.0, %v725
      %v727 = vpop.f32.mrf.mxu0
      %v728 = vadd.f32 0.0, %v727
      %729 = vmatmul.bf16.gmra.mxu0 %v605
      %v730 = vpop.f32.mrf.mxu0
      %v731 = vadd.f32 0.0, %v730
      %v732 = vpop.f32.mrf.mxu0
      %v733 = vadd.f32 0.0, %v732
      %734 = vmatmul.bf16.gmra.mxu0 %v606
      %v735 = vpop.f32.mrf.mxu0
      %v736 = vadd.f32 0.0, %v735
      %v737 = vpop.f32.mrf.mxu0
      %v738 = vadd.f32 0.0, %v737
      %739 = vmatmul.bf16.gmra.mxu0 %v607
      %v740 = vpop.f32.mrf.mxu0
      %v741 = vadd.f32 0.0, %v740
      %v742 = vpop.f32.mrf.mxu0
      %v743 = vadd.f32 0.0, %v742
      %744 = vmatmul.bf16.gmra.mxu0 %v608
      %v745 = vpop.f32.mrf.mxu0
      %v746 = vadd.f32 0.0, %v745
      %v747 = vpop.f32.mrf.mxu0
      %v748 = vadd.f32 0.0, %v747
      %749 = vmatmul.bf16.gmra.mxu0 %v609
      %v750 = vpop.f32.mrf.mxu0
      %v751 = vadd.f32 0.0, %v750
      %v752 = vpop.f32.mrf.mxu0
      %v753 = vadd.f32 0.0, %v752
      %754 = vmatmul.bf16.gmra.mxu0 %v610
      %v755 = vpop.f32.mrf.mxu0
      %v756 = vadd.f32 0.0, %v755
      %v757 = vpop.f32.mrf.mxu0
      %v758 = vadd.f32 0.0, %v757
      %759 = vmatmul.bf16.gmra.mxu0 %v611
      %v760 = vpop.f32.mrf.mxu0
      %v761 = vadd.f32 0.0, %v760
      %v762 = vpop.f32.mrf.mxu0
      %v763 = vadd.f32 0.0, %v762
      %764 = vdwg.mxu0
      %v765 = vld [vmem:[%s5] sm:$0x1]
      %v767 = vperm.slane %v765, 0
      %v769 = vmul.f32 %v686, %v767
      %v770 = vmul.f32 %v688, %v767
      %v771 = vmul.f32 %v691, %v767
      %v772 = vmul.f32 %v693, %v767
      %v773 = vmul.f32 %v696, %v767
      %v774 = vmul.f32 %v698, %v767
      %v775 = vmul.f32 %v701, %v767
      %v776 = vmul.f32 %v703, %v767
      %v777 = vmul.f32 %v706, %v767
      %v778 = vmul.f32 %v708, %v767
      %v779 = vmul.f32 %v711, %v767
      %v780 = vmul.f32 %v713, %v767
      %v781 = vmul.f32 %v716, %v767
      %v782 = vmul.f32 %v718, %v767
      %v783 = vmul.f32 %v721, %v767
      %v784 = vmul.f32 %v723, %v767
      %v785 = vmul.f32 %v726, %v767
      %v786 = vmul.f32 %v728, %v767
      %v787 = vmul.f32 %v731, %v767
      %v788 = vmul.f32 %v733, %v767
      %v789 = vmul.f32 %v736, %v767
      %v790 = vmul.f32 %v738, %v767
      %v791 = vmul.f32 %v741, %v767
      %v792 = vmul.f32 %v743, %v767
      %v793 = vmul.f32 %v746, %v767
      %v794 = vmul.f32 %v748, %v767
      %v795 = vmul.f32 %v751, %v767
      %v796 = vmul.f32 %v753, %v767
      %v797 = vmul.f32 %v756, %v767
      %v798 = vmul.f32 %v758, %v767
      %v799 = vmul.f32 %v761, %v767
      %v800 = vmul.f32 %v763, %v767
      %v801 = vld [vmem:[%s6] sm:$0x1]
      %v803 = vperm.slane %v801, 0
      %v805 = vadd.f32 %v769, %v803
      %v806 = vadd.f32 %v770, %v803
      %v807 = vadd.f32 %v771, %v803
      %v808 = vadd.f32 %v772, %v803
      %v809 = vadd.f32 %v773, %v803
      %v810 = vadd.f32 %v774, %v803
      %v811 = vadd.f32 %v775, %v803
      %v812 = vadd.f32 %v776, %v803
      %v813 = vadd.f32 %v777, %v803
      %v814 = vadd.f32 %v778, %v803
      %v815 = vadd.f32 %v779, %v803
      %v816 = vadd.f32 %v780, %v803
      %v817 = vadd.f32 %v781, %v803
      %v818 = vadd.f32 %v782, %v803
      %v819 = vadd.f32 %v783, %v803
      %v820 = vadd.f32 %v784, %v803
      %v821 = vadd.f32 %v785, %v803
      %v822 = vadd.f32 %v786, %v803
      %v823 = vadd.f32 %v787, %v803
      %v824 = vadd.f32 %v788, %v803
      %v825 = vadd.f32 %v789, %v803
      %v826 = vadd.f32 %v790, %v803
      %v827 = vadd.f32 %v791, %v803
      %v828 = vadd.f32 %v792, %v803
      %v829 = vadd.f32 %v793, %v803
      %v830 = vadd.f32 %v794, %v803
      %v831 = vadd.f32 %v795, %v803
      %v832 = vadd.f32 %v796, %v803
      %v833 = vadd.f32 %v797, %v803
      %v834 = vadd.f32 %v798, %v803
      %v835 = vadd.f32 %v799, %v803
      %v836 = vadd.f32 %v800, %v803
      %v837 = vmax.f32 %v805, 0.0
      %v838 = vmax.f32 %v806, 0.0
      %v839 = vmax.f32 %v807, 0.0
      %v840 = vmax.f32 %v808, 0.0
      %v841 = vmax.f32 %v809, 0.0
      %v842 = vmax.f32 %v810, 0.0
      %v843 = vmax.f32 %v811, 0.0
      %v844 = vmax.f32 %v812, 0.0
      %v845 = vmax.f32 %v813, 0.0
      %v846 = vmax.f32 %v814, 0.0
      %v847 = vmax.f32 %v815, 0.0
      %v848 = vmax.f32 %v816, 0.0
      %v849 = vmax.f32 %v817, 0.0
      %v850 = vmax.f32 %v818, 0.0
      %v851 = vmax.f32 %v819, 0.0
      %v852 = vmax.f32 %v820, 0.0
      %v853 = vmax.f32 %v821, 0.0
      %v854 = vmax.f32 %v822, 0.0
      %v855 = vmax.f32 %v823, 0.0
      %v856 = vmax.f32 %v824, 0.0
      %v857 = vmax.f32 %v825, 0.0
      %v858 = vmax.f32 %v826, 0.0
      %v859 = vmax.f32 %v827, 0.0
      %v860 = vmax.f32 %v828, 0.0
      %v861 = vmax.f32 %v829, 0.0
      %v862 = vmax.f32 %v830, 0.0
      %v863 = vmax.f32 %v831, 0.0
      %v864 = vmax.f32 %v832, 0.0
      %v865 = vmax.f32 %v833, 0.0
      %v866 = vmax.f32 %v834, 0.0
      %v867 = vmax.f32 %v835, 0.0
      %v868 = vmax.f32 %v836, 0.0
      %v869 = vld [vmem:[%s411] sm:$0xf]
      %v870 = vld [vmem:[%s411 + $0x4] sm:$0xf]
      %v871 = vld [vmem:[%s411 + $0x8] sm:$0xf]
      %v872 = vld [vmem:[%s411 + $0xc] sm:$0xf]
      %v873 = vld [vmem:[%s411 + $0x10] sm:$0xf]
      %v874 = vld [vmem:[%s411 + $0x14] sm:$0xf]
      %v875 = vld [vmem:[%s411 + $0x18] sm:$0xf]
      %v876 = vld [vmem:[%s411 + $0x1c] sm:$0xf]
      %v877 = vld [vmem:[%s411 + $0x20] sm:$0xf]
      %v878 = vld [vmem:[%s411 + $0x24] sm:$0xf]
      %v879 = vld [vmem:[%s411 + $0x28] sm:$0xf]
      %v880 = vld [vmem:[%s411 + $0x2c] sm:$0xf]
      %v881 = vld [vmem:[%s411 + $0x30] sm:$0xf]
      %v882 = vld [vmem:[%s411 + $0x34] sm:$0xf]
      %v883 = vld [vmem:[%s411 + $0x38] sm:$0xf]
      %v884 = vld [vmem:[%s411 + $0x3c] sm:$0xf]
      %v885 = vld [vmem:[%s411 + $0x40] sm:$0xf]
      %v886 = vld [vmem:[%s411 + $0x44] sm:$0xf]
      %v887 = vld [vmem:[%s411 + $0x48] sm:$0xf]
      %v888 = vld [vmem:[%s411 + $0x4c] sm:$0xf]
      %v889 = vld [vmem:[%s411 + $0x50] sm:$0xf]
      %v890 = vld [vmem:[%s411 + $0x54] sm:$0xf]
      %v891 = vld [vmem:[%s411 + $0x58] sm:$0xf]
      %v892 = vld [vmem:[%s411 + $0x5c] sm:$0xf]
      %v893 = vld [vmem:[%s411 + $0x60] sm:$0xf]
      %v894 = vld [vmem:[%s411 + $0x64] sm:$0xf]
      %v895 = vld [vmem:[%s411 + $0x68] sm:$0xf]
      %v896 = vld [vmem:[%s411 + $0x6c] sm:$0xf]
      %v897 = vld [vmem:[%s411 + $0x70] sm:$0xf]
      %v898 = vld [vmem:[%s411 + $0x74] sm:$0xf]
      %v899 = vld [vmem:[%s411 + $0x78] sm:$0xf]
      %v900 = vld [vmem:[%s411 + $0x7c] sm:$0xf]
      %v901 = vld [vmem:[%s7] sm:$0x1]
      %v902 = vunpack.c.l.bf16 %v869
      %v903 = vunpack.c.l.bf16 %v870
      %v904 = vunpack.c.l.bf16 %v871
      %v905 = vunpack.c.l.bf16 %v872
      %v906 = vunpack.c.l.bf16 %v873
      %v907 = vunpack.c.l.bf16 %v874
      %v908 = vunpack.c.l.bf16 %v875
      %v909 = vunpack.c.l.bf16 %v876
      %v910 = vunpack.c.l.bf16 %v877
      %v911 = vunpack.c.l.bf16 %v878
      %v912 = vunpack.c.l.bf16 %v879
      %v913 = vunpack.c.l.bf16 %v880
      %v914 = vunpack.c.l.bf16 %v881
      %v915 = vunpack.c.l.bf16 %v882
      %v916 = vunpack.c.l.bf16 %v883
      %v917 = vunpack.c.l.bf16 %v884
      %v918 = vunpack.c.l.bf16 %v885
      %v919 = vunpack.c.l.bf16 %v886
      %v920 = vunpack.c.l.bf16 %v887
      %v921 = vunpack.c.l.bf16 %v888
      %v922 = vunpack.c.l.bf16 %v889
      %v923 = vunpack.c.l.bf16 %v890
      %v924 = vunpack.c.l.bf16 %v891
      %v925 = vunpack.c.l.bf16 %v892
      %v926 = vunpack.c.l.bf16 %v893
      %v927 = vunpack.c.l.bf16 %v894
      %v928 = vunpack.c.l.bf16 %v895
      %v929 = vunpack.c.l.bf16 %v896
      %v930 = vunpack.c.l.bf16 %v897
      %v931 = vunpack.c.l.bf16 %v898
      %v932 = vunpack.c.l.bf16 %v899
      %v933 = vunpack.c.l.bf16 %v900
      %v935 = vperm.slane %v901, 0
      %v937 = vmul.f32 %v902, %v935
      %v938 = vmul.f32 %v903, %v935
      %v939 = vmul.f32 %v904, %v935
      %v940 = vmul.f32 %v905, %v935
      %v941 = vmul.f32 %v906, %v935
      %v942 = vmul.f32 %v907, %v935
      %v943 = vmul.f32 %v908, %v935
      %v944 = vmul.f32 %v909, %v935
      %v945 = vmul.f32 %v910, %v935
      %v946 = vmul.f32 %v911, %v935
      %v947 = vmul.f32 %v912, %v935
      %v948 = vmul.f32 %v913, %v935
      %v949 = vmul.f32 %v914, %v935
      %v950 = vmul.f32 %v915, %v935
      %v951 = vmul.f32 %v916, %v935
      %v952 = vmul.f32 %v917, %v935
      %v953 = vmul.f32 %v918, %v935
      %v954 = vmul.f32 %v919, %v935
      %v955 = vmul.f32 %v920, %v935
      %v956 = vmul.f32 %v921, %v935
      %v957 = vmul.f32 %v922, %v935
      %v958 = vmul.f32 %v923, %v935
      %v959 = vmul.f32 %v924, %v935
      %v960 = vmul.f32 %v925, %v935
      %v961 = vmul.f32 %v926, %v935
      %v962 = vmul.f32 %v927, %v935
      %v963 = vmul.f32 %v928, %v935
      %v964 = vmul.f32 %v929, %v935
      %v965 = vmul.f32 %v930, %v935
      %v966 = vmul.f32 %v931, %v935
      %v967 = vmul.f32 %v932, %v935
      %v968 = vmul.f32 %v933, %v935
      %v969 = vld [vmem:[%s8] sm:$0x1]
      %v971 = vperm.slane %v969, 0
      %v973 = vadd.f32 %v937, %v971
      %v974 = vadd.f32 %v938, %v971
      %v975 = vadd.f32 %v939, %v971
      %v976 = vadd.f32 %v940, %v971
      %v977 = vadd.f32 %v941, %v971
      %v978 = vadd.f32 %v942, %v971
      %v979 = vadd.f32 %v943, %v971
      %v980 = vadd.f32 %v944, %v971
      %v981 = vadd.f32 %v945, %v971
      %v982 = vadd.f32 %v946, %v971
      %v983 = vadd.f32 %v947, %v971
      %v984 = vadd.f32 %v948, %v971
      %v985 = vadd.f32 %v949, %v971
      %v986 = vadd.f32 %v950, %v971
      %v987 = vadd.f32 %v951, %v971
      %v988 = vadd.f32 %v952, %v971
      %v989 = vadd.f32 %v953, %v971
      %v990 = vadd.f32 %v954, %v971
      %v991 = vadd.f32 %v955, %v971
      %v992 = vadd.f32 %v956, %v971
      %v993 = vadd.f32 %v957, %v971
      %v994 = vadd.f32 %v958, %v971
      %v995 = vadd.f32 %v959, %v971
      %v996 = vadd.f32 %v960, %v971
      %v997 = vadd.f32 %v961, %v971
      %v998 = vadd.f32 %v962, %v971
      %v999 = vadd.f32 %v963, %v971
      %v1000 = vadd.f32 %v964, %v971
      %v1001 = vadd.f32 %v965, %v971
      %v1002 = vadd.f32 %v966, %v971
      %v1003 = vadd.f32 %v967, %v971
      %v1004 = vadd.f32 %v968, %v971
      %v1005 = vadd.f32 %v837, %v973
      %v1006 = vadd.f32 %v838, %v974
      %v1007 = vadd.f32 %v839, %v975
      %v1008 = vadd.f32 %v840, %v976
      %v1009 = vadd.f32 %v841, %v977
      %v1010 = vadd.f32 %v842, %v978
      %v1011 = vadd.f32 %v843, %v979
      %v1012 = vadd.f32 %v844, %v980
      %v1013 = vadd.f32 %v845, %v981
      %v1014 = vadd.f32 %v846, %v982
      %v1015 = vadd.f32 %v847, %v983
      %v1016 = vadd.f32 %v848, %v984
      %v1017 = vadd.f32 %v849, %v985
      %v1018 = vadd.f32 %v850, %v986
      %v1019 = vadd.f32 %v851, %v987
      %v1020 = vadd.f32 %v852, %v988
      %v1021 = vadd.f32 %v853, %v989
      %v1022 = vadd.f32 %v854, %v990
      %v1023 = vadd.f32 %v855, %v991
      %v1024 = vadd.f32 %v856, %v992
      %v1025 = vadd.f32 %v857, %v993
      %v1026 = vadd.f32 %v858, %v994
      %v1027 = vadd.f32 %v859, %v995
      %v1028 = vadd.f32 %v860, %v996
      %v1029 = vadd.f32 %v861, %v997
      %v1030 = vadd.f32 %v862, %v998
      %v1031 = vadd.f32 %v863, %v999
      %v1032 = vadd.f32 %v864, %v1000
      %v1033 = vadd.f32 %v865, %v1001
      %v1034 = vadd.f32 %v866, %v1002
      %v1035 = vadd.f32 %v867, %v1003
      %v1036 = vadd.f32 %v868, %v1004
      %v1037 = vmax.f32 %v1005, 0.0
      %v1038 = vmax.f32 %v1006, 0.0
      %v1039 = vmax.f32 %v1007, 0.0
      %v1040 = vmax.f32 %v1008, 0.0
      %v1041 = vmax.f32 %v1009, 0.0
      %v1042 = vmax.f32 %v1010, 0.0
      %v1043 = vmax.f32 %v1011, 0.0
      %v1044 = vmax.f32 %v1012, 0.0
      %v1045 = vmax.f32 %v1013, 0.0
      %v1046 = vmax.f32 %v1014, 0.0
      %v1047 = vmax.f32 %v1015, 0.0
      %v1048 = vmax.f32 %v1016, 0.0
      %v1049 = vmax.f32 %v1017, 0.0
      %v1050 = vmax.f32 %v1018, 0.0
      %v1051 = vmax.f32 %v1019, 0.0
      %v1052 = vmax.f32 %v1020, 0.0
      %v1053 = vmax.f32 %v1021, 0.0
      %v1054 = vmax.f32 %v1022, 0.0
      %v1055 = vmax.f32 %v1023, 0.0
      %v1056 = vmax.f32 %v1024, 0.0
      %v1057 = vmax.f32 %v1025, 0.0
      %v1058 = vmax.f32 %v1026, 0.0
      %v1059 = vmax.f32 %v1027, 0.0
      %v1060 = vmax.f32 %v1028, 0.0
      %v1061 = vmax.f32 %v1029, 0.0
      %v1062 = vmax.f32 %v1030, 0.0
      %v1063 = vmax.f32 %v1031, 0.0
      %v1064 = vmax.f32 %v1032, 0.0
      %v1065 = vmax.f32 %v1033, 0.0
      %v1066 = vmax.f32 %v1034, 0.0
      %v1067 = vmax.f32 %v1035, 0.0
      %v1068 = vmax.f32 %v1036, 0.0
      %1069 = vst [vmem:[%s426] sm:$0xff] %v1037
      %1070 = vst [vmem:[%s426 + $0x8] sm:$0xff] %v1038
      %1071 = vst [vmem:[%s426 + $0x10] sm:$0xff] %v1039
      %1072 = vst [vmem:[%s426 + $0x18] sm:$0xff] %v1040
      %1073 = vst [vmem:[%s426 + $0x20] sm:$0xff] %v1041
      %1074 = vst [vmem:[%s426 + $0x28] sm:$0xff] %v1042
      %1075 = vst [vmem:[%s426 + $0x30] sm:$0xff] %v1043
      %1076 = vst [vmem:[%s426 + $0x38] sm:$0xff] %v1044
      %1077 = vst [vmem:[%s426 + $0x40] sm:$0xff] %v1045
      %1078 = vst [vmem:[%s426 + $0x48] sm:$0xff] %v1046
      %1079 = vst [vmem:[%s426 + $0x50] sm:$0xff] %v1047
      %1080 = vst [vmem:[%s426 + $0x58] sm:$0xff] %v1048
      %1081 = vst [vmem:[%s426 + $0x60] sm:$0xff] %v1049
      %1082 = vst [vmem:[%s426 + $0x68] sm:$0xff] %v1050
      %1083 = vst [vmem:[%s426 + $0x70] sm:$0xff] %v1051
      %1084 = vst [vmem:[%s426 + $0x78] sm:$0xff] %v1052
      %1085 = vst [vmem:[%s426 + $0x80] sm:$0xff] %v1053
      %1086 = vst [vmem:[%s426 + $0x88] sm:$0xff] %v1054
      %1087 = vst [vmem:[%s426 + $0x90] sm:$0xff] %v1055
      %1088 = vst [vmem:[%s426 + $0x98] sm:$0xff] %v1056
      %1089 = vst [vmem:[%s426 + $0xa0] sm:$0xff] %v1057
      %1090 = vst [vmem:[%s426 + $0xa8] sm:$0xff] %v1058
      %1091 = vst [vmem:[%s426 + $0xb0] sm:$0xff] %v1059
      %1092 = vst [vmem:[%s426 + $0xb8] sm:$0xff] %v1060
      %1093 = vst [vmem:[%s426 + $0xc0] sm:$0xff] %v1061
      %1094 = vst [vmem:[%s426 + $0xc8] sm:$0xff] %v1062
      %1095 = vst [vmem:[%s426 + $0xd0] sm:$0xff] %v1063
      %1096 = vst [vmem:[%s426 + $0xd8] sm:$0xff] %v1064
      %1097 = vst [vmem:[%s426 + $0xe0] sm:$0xff] %v1065
      %1098 = vst [vmem:[%s426 + $0xe8] sm:$0xff] %v1066
      %1099 = vst [vmem:[%s426 + $0xf0] sm:$0xff] %v1067
      %1100 = vst [vmem:[%s426 + $0xf8] sm:$0xff] %v1068
      %s1101 = smul.u32 32, %s25
      %p1102 = scmp.lt.s32.totalorder %s24, 1
      %s1103 = scalar_select %p1102, %s24, 1
      %p1104 = scmp.lt.s32.totalorder %s1101, 31
      %s1105 = scalar_select %p1104, %s1101, 31
      %s1106 = smul.addr %s1103, 32
      %s1107 = sadd.s32 %s1105, %s1106
      %s1108 = smul.addr %s1107, 8
      %s1109 = scalar_lea.vmem %s9, %s1108
      // Predicated region
      $region57: #{forward.5} parent=55 // pred_check
        %p1110 = pneg %p260
      $region58: #{forward.5} parent=55 // pred_check_branch
        %1112 = sbr.rel (%p1110) target = $region60
      $region59: #{forward.5} parent=55 // pred_region
        %s1113 = smul.u32 32, %s25
      $region60: #{forward.5} parent=55 // pred_fallthru
        _
    $region56: #{forward.5} parent=5 // pred_fallthru
      _
    %p1114 = scmp.le.s32.totalorder 2, %s15
    // Predicated region
    $region61: #{forward.5} parent=5 // pred_check
      %p1115 = pneg %p1114
    $region62: #{forward.5} parent=5 // pred_check_branch
      %1117 = sbr.rel (%p1115) target = $region64
    $region63: #{forward.5} parent=5 // pred_region
      %s1118 = ssub.s32 %s15, 2
      // Predicated region
      $region65: #{forward.5} parent=63 // pred_check
        %p1119 = pneg %p266
      $region66: #{forward.5} parent=63 // pred_check_branch
        %1121 = sbr.rel (%p1119) target = $region68
      $region67: #{forward.5} parent=63 // pred_region
        %s1122 = smul.u32 32, %s27
        %p1123 = scmp.lt.s32.totalorder %s26, 1
        %s1124 = scalar_select %p1123, %s26, 1
        %p1125 = scmp.lt.s32.totalorder %s1122, 31
        %s1126 = scalar_select %p1125, %s1122, 31
        %s1127 = smul.addr %s1124, 32
        %s1128 = sadd.s32 %s1126, %s1127
        %s1129 = smul.addr %s1128, 8
        %s1130 = scalar_lea.vmem %s9, %s1129
      $region68: #{forward.5} parent=63 // pred_fallthru
        _
    $region64: #{forward.5} parent=5 // pred_fallthru
      _
  $region6: #{forward.5} parent=0 // loop_footer
    %s19 = sadd.s32 1, %s15
  $region7: #{forward.5} parent=0 // loop_footer_branch
    %14 = sbr.rel target = $region3
  $region8: #{forward.5} parent=0 // loop_exit
    _

</llo_original>
